<compile_context>
chip_gen: v7x
topology: tpu7x:2x2x1
jax: 0.10.0
libtpu: 0.0.40
codegen_flags: <defaults>
</compile_context>

<pallas_src>
import math
from functools import partial

import jax
import jax.numpy as jnp
from jax.experimental import pallas as pl
from jax.experimental.pallas import tpu as pltpu


def _pe_kernel(params_ref, out_ref, *, h, w, tile_h):
    """Writes one (2F, tile_h*w) tile of the flat (2F, h*w) CHW encoding."""
    f = params_ref.shape[0]
    block_cols = tile_h * w

    # Tile-local flattened spatial index, laid out along lanes.
    local = jax.lax.broadcasted_iota(jnp.int32, (1, block_cols), 1)
    lf = local.astype(jnp.float32)

    # Tiles start on a row boundary, so r_local = local // w, c = local % w.
    # Float floor-div on the LOCAL index is exact for tile_h*w < 2^21
    # (guarded in the wrapper); +0.5 keeps the quotient off integer edges.
    rf = jnp.floor((lf + 0.5) * (1.0 / w))
    cf = lf - rf * float(w)
    r0 = (pl.program_id(0) * tile_h).astype(jnp.float32)

    # x_embed = (c + 0.5)/w ; y_embed = (r + 0.5)/h ; coords = 2*embed - 1,
    # with the affine folded into the iota constants (no full-tile 2*x-1).
    xe = cf * (2.0 / w) + (1.0 / w - 1.0)                  # (1, S)
    ye = (rf + r0) * (2.0 / h) + (1.0 / h - 1.0)           # (1, S)

    p = params_ref[...]                                    # (F, 2)
    gx = p[:, 0:1]                                         # 2*pi * G[0, k]  (F, 1)
    gy = p[:, 1:2]                                         # 2*pi * G[1, k]  (F, 1)

    # Projection argument built once for F channels (review item 1).
    arg = gx * xe + gy * ye                                # (F, S)

    out_ref[pl.ds(0, f), :] = jnp.sin(arg).astype(out_ref.dtype)
    out_ref[pl.ds(f, f), :] = jnp.cos(arg).astype(out_ref.dtype)


def _pick_tile_h(h, w, c2, itemsize):
    """Rows per grid step: row-aligned, lane-dense, ~1-4 MiB tiles,
    >=2 steps when possible and an even step count (v7x core balance)."""
    one_mib = 1 << 20
    row_bytes = c2 * w * itemsize
    if h * row_bytes <= one_mib:
        return h                        # single block (block == full dim is legal)

    candidates = [t for t in range(1, h + 1)
                  if h % t == 0 and (t == h or (t * w) % 128 == 0)]

    def score(t):
        steps = h // t
        tile_bytes = t * row_bytes
        return (
            tile_bytes >= one_mib,           # don't shrink below ~1 MiB (step overhead)
            steps == 1 or steps % 2 == 0,    # even step count for v7x two-core balance
            tile_bytes <= 4 * one_mib,       # keep 2x-buffered tiles VMEM-friendly
            steps > 1,                       # let writeback of step i-1 hide behind i
            -steps,                          # otherwise fewest steps
        )

    return max(candidates, key=score)


@partial(jax.jit, static_argnums=(0, 2))
def position_embedding_random(size, gaussian_matrix, out_dtype=jnp.float32):
    """Returns the positional encoding of shape (2*num_pos_feats, h, w)."""
    h, w = size
    f = gaussian_matrix.shape[1]
    c2 = 2 * f
    total = h * w

    tile_h = _pick_tile_h(h, w, c2, jnp.dtype(out_dtype).itemsize)
    block_cols = tile_h * w
    # Exactness bound for the in-kernel float floor-div (correctness concern 1).
    assert block_cols < (1 << 21), (
        "tile too wide for exact float floor-div; shrink the tile")
    grid = (h // tile_h,)

    # Tiny O(F) parameter prep: 2*pi folded into the Gaussian rows.
    g = gaussian_matrix.astype(jnp.float32)
    two_pi = 2.0 * math.pi
    params = jnp.stack([g[0] * two_pi, g[1] * two_pi], axis=1)      # (F, 2)

    pe_flat = pl.pallas_call(
        partial(_pe_kernel, h=h, w=w, tile_h=tile_h),
        out_shape=jax.ShapeDtypeStruct((c2, total), out_dtype),
        grid=grid,
        in_specs=[pl.BlockSpec((f, 2), lambda i: (0, 0))],
        out_specs=pl.BlockSpec((c2, block_cols), lambda i: (0, i)),
        compiler_params=pltpu.CompilerParams(
            dimension_semantics=("parallel",)),
    )(params)

    # (2F, h*w) -> (2F, h, w): contiguous row-major reshape, no data movement.
    return pe_flat.reshape(c2, h, w)


# TODO(synk): forward_with_coords (point-prompt encoding) is a tiny O(points)
# pointwise op with no grid structure; left to plain XLA rather than faked here.


def _reference(size, gaussian_matrix):
    """Pure-JAX replica of the PyTorch forward, for verification."""
    h, w = size
    ones = jnp.ones((h, w), jnp.float32)
    y_embed = (jnp.cumsum(ones, axis=0) - 0.5) / h
    x_embed = (jnp.cumsum(ones, axis=1) - 0.5) / w
    coords = jnp.stack([x_embed, y_embed], axis=-1)
    coords = 2.0 * coords - 1.0
    coords = coords @ gaussian_matrix
    coords = 2.0 * jnp.pi * coords
    pe = jnp.concatenate([jnp.sin(coords), jnp.cos(coords)], axis=-1)
    return jnp.transpose(pe, (2, 0, 1))


if __name__ == "__main__":
    # __init__: positional_encoding_gaussian_matrix = scale * randn((2, num_pos_feats))
    num_pos_feats = 64
    scale = 1.0  # scale is None / <= 0 -> 1.0
    key = jax.random.PRNGKey(0)
    gaussian_matrix = scale * jax.random.normal(
        key, (2, num_pos_feats), dtype=jnp.float32)

    # Small shape (single-block path).
    size = (16, 16)
    out = jax.block_until_ready(position_embedding_random(size, gaussian_matrix))
    ref = _reference(size, gaussian_matrix)
    assert out.shape == (2 * num_pos_feats, size[0], size[1]), out.shape
    assert out.dtype == jnp.float32
    assert float(jnp.max(jnp.abs(out - ref))) < 5e-5, float(jnp.max(jnp.abs(out - ref)))

    # SAM's real grid size (2-step, even, "parallel" path).
    size2 = (64, 64)
    out2 = jax.block_until_ready(position_embedding_random(size2, gaussian_matrix))
    ref2 = _reference(size2, gaussian_matrix)
    assert out2.shape == (2 * num_pos_feats, size2[0], size2[1]), out2.shape
    assert float(jnp.max(jnp.abs(out2 - ref2))) < 5e-5, float(jnp.max(jnp.abs(out2 - ref2)))

    # bf16 output option (review item 3): halves HBM writeback when accepted.
    out_bf16 = jax.block_until_ready(
        position_embedding_random(size2, gaussian_matrix, jnp.bfloat16))
    assert out_bf16.dtype == jnp.bfloat16
    assert float(jnp.max(jnp.abs(out_bf16.astype(jnp.float32) - ref2))) < 1e-2

    print("KERNEL_OK")
</pallas_src>

<mosaic_0001>
module attributes {stable_mosaic.version = 11 : i64} {
  func.func @_pe_kernel(%arg0: i32, %arg1: memref<64x2xf32, #tpu.memory_space<vmem>>, %arg2: memref<128x256xf32, #tpu.memory_space<vmem>>) attributes {dimension_semantics = [#tpu.dimension_semantics<parallel>], iteration_bounds = array<i64: 1>, scalar_prefetch = 0 : i64, scratch_operands = 0 : i64, tpu.core_type = #tpu.core_type<tc>, window_params = [{pipeline_mode = #tpu.pipeline_mode<synchronous>, transform_indices = @transform_0, window_bounds = array<i64: 64, 2>}, {transform_indices = @transform_1, window_bounds = array<i64: 128, 256>}]} {
    %0 = tpu.iota {dimensions = array<i32: 1>} : vector<1x256xi32>
    %1 = arith.sitofp %0 : vector<1x256xi32> to vector<1x256xf32>
    %cst = arith.constant 5.000000e-01 : f32
    %2 = vector.broadcast %cst : f32 to vector<1x256xf32>
    %3 = arith.addf %1, %2 : vector<1x256xf32>
    %cst_0 = arith.constant 6.250000e-02 : f32
    %4 = vector.broadcast %cst_0 : f32 to vector<1x256xf32>
    %5 = arith.mulf %3, %4 : vector<1x256xf32>
    %6 = math.floor %5 : vector<1x256xf32>
    %cst_1 = arith.constant 1.600000e+01 : f32
    %7 = vector.broadcast %cst_1 : f32 to vector<1x256xf32>
    %8 = arith.mulf %6, %7 : vector<1x256xf32>
    %9 = arith.subf %1, %8 : vector<1x256xf32>
    %c16_i32 = arith.constant 16 : i32
    %10 = arith.muli %arg0, %c16_i32 : i32
    %11 = arith.sitofp %10 : i32 to f32
    %cst_2 = arith.constant 1.250000e-01 : f32
    %12 = vector.broadcast %cst_2 : f32 to vector<1x256xf32>
    %13 = arith.mulf %9, %12 : vector<1x256xf32>
    %cst_3 = arith.constant -9.375000e-01 : f32
    %14 = vector.broadcast %cst_3 : f32 to vector<1x256xf32>
    %15 = arith.addf %13, %14 : vector<1x256xf32>
    %16 = vector.broadcast %11 : f32 to vector<1x256xf32>
    %17 = arith.addf %6, %16 : vector<1x256xf32>
    %cst_4 = arith.constant 1.250000e-01 : f32
    %18 = vector.broadcast %cst_4 : f32 to vector<1x256xf32>
    %19 = arith.mulf %17, %18 : vector<1x256xf32>
    %cst_5 = arith.constant -9.375000e-01 : f32
    %20 = vector.broadcast %cst_5 : f32 to vector<1x256xf32>
    %21 = arith.addf %19, %20 : vector<1x256xf32>
    %c0 = arith.constant 0 : index
    %c0_6 = arith.constant 0 : index
    %22 = vector.load %arg1[%c0, %c0_6] : memref<64x2xf32, #tpu.memory_space<vmem>>, vector<64x2xf32>
    %23 = vector.extract_strided_slice %22 {offsets = [0, 0], sizes = [64, 1], strides = [1, 1]} : vector<64x2xf32> to vector<64x1xf32>
    %24 = vector.extract_strided_slice %22 {offsets = [0, 1], sizes = [64, 1], strides = [1, 1]} : vector<64x2xf32> to vector<64x1xf32>
    %25 = vector.broadcast %23 : vector<64x1xf32> to vector<64x256xf32>
    %26 = vector.broadcast %15 : vector<1x256xf32> to vector<64x256xf32>
    %27 = arith.mulf %25, %26 : vector<64x256xf32>
    %28 = vector.broadcast %24 : vector<64x1xf32> to vector<64x256xf32>
    %29 = vector.broadcast %21 : vector<1x256xf32> to vector<64x256xf32>
    %30 = arith.mulf %28, %29 : vector<64x256xf32>
    %31 = arith.addf %27, %30 : vector<64x256xf32>
    %32 = math.sin %31 : vector<64x256xf32>
    %c0_7 = arith.constant 0 : index
    %c0_8 = arith.constant 0 : index
    %33 = vector.load %arg2[%c0_7, %c0_8] : memref<128x256xf32, #tpu.memory_space<vmem>>, vector<64x256xf32>
    tpu.vector_store %arg2[%c0_7, %c0_8], %32 {strides = array<i32>} : memref<128x256xf32, #tpu.memory_space<vmem>>, vector<64x256xf32>,
    %34 = math.cos %31 : vector<64x256xf32>
    %c64 = arith.constant 64 : index
    %c0_9 = arith.constant 0 : index
    %35 = vector.load %arg2[%c64, %c0_9] : memref<128x256xf32, #tpu.memory_space<vmem>>, vector<64x256xf32>
    tpu.vector_store %arg2[%c64, %c0_9], %34 {strides = array<i32>} : memref<128x256xf32, #tpu.memory_space<vmem>>, vector<64x256xf32>,
    return
  }
  func.func @transform_0(%arg0: i32) -> (i32, i32) {
    %c0_i32 = arith.constant 0 : i32
    %c0_i32_0 = arith.constant 0 : i32
    %c0_i32_1 = arith.constant 0 : i32
    return %c0_i32, %c0_i32_0 : i32, i32
  }
  func.func @transform_1(%arg0: i32) -> (i32, i32) {
    %c0_i32 = arith.constant 0 : i32
    %c0_i32_0 = arith.constant 0 : i32
    return %c0_i32, %arg0 : i32, i32
  }
}

</mosaic_0001>

<llo_original>
// kernel: position_embedding_random.1
$region0: #{position_embedding_random.1}
  #allocation0 [shape = 'u32[]', space=smem, size = 0x4, offset = 0x4, fixed_abs, tag = 'smem constant byte address 0x4 - core index']
  #allocation1 [shape = 'u32[144,128]{1,0:T(1,128)}', space=vmem, size = 0x12000, scoped, tag = 'internal scratch']
  %s0 = inlined_call_operand.vmem [shape: f32[64,2], index: 0, kind: input, shape index: {}]
  %s1 = inlined_call_operand.vmem [shape: f32[128,256], index: 1, kind: output, shape index: {}]
  %s2 = sld [smem:[#allocation0]]
  $region14: #{position_embedding_random.1} parent=0
    _
  %s4 = ssub.s32 1, %s2
  %s5 = scalar_select 0, %s4, %s2
  // Predicated region
  $region2: #{position_embedding_random.1} parent=0 // pred_check
    _
  $region3: #{position_embedding_random.1} parent=0 // pred_check_branch
    %7 = sbr.rel (0) target = $region5
  $region4: #{position_embedding_random.1} parent=0 // pred_region
    _
  $region5: #{position_embedding_random.1} parent=0 // pred_fallthru
    _
  %v8 = vlaneseq
  %v9 = vand.u32 %v8, 127
  %v10 = vadd.s32 %v9, 128
  %v11 = vcvt.s32.f32 %v9
  %v12 = vcvt.s32.f32 %v10
  %v13 = vadd.f32 %v11, 0.5
  %v14 = vadd.f32 %v12, 0.5
  %v15 = vmul.f32 %v13, 0.0625
  %v16 = vmul.f32 %v14, 0.0625
  %v17 = vfloor.f32 %v15
  %v18 = vfloor.f32 %v16
  %v19 = vmul.f32 %v17, 16.0
  %v20 = vmul.f32 %v18, 16.0
  %v21 = vsub.f32 %v11, %v19
  %v22 = vsub.f32 %v12, %v20
  %s23 = smul.u32 0, 16
  %s24 = scvt.s32.f32 %s23
  %v25 = vmul.f32 %v21, 0.125
  %v26 = vmul.f32 %v22, 0.125
  %v27 = vadd.f32 %v25, -0.9375
  %v28 = vadd.f32 %v26, -0.9375
  %v29 = vstv %s24
  %v30 = vadd.f32 %v17, %v29
  %v31 = vadd.f32 %v18, %v29
  %v32 = vmul.f32 %v30, 0.125
  %v33 = vmul.f32 %v31, 0.125
  %v34 = vadd.f32 %v32, -0.9375
  %v35 = vadd.f32 %v33, -0.9375
  %v36 = vld [vmem:[%s0] sm:$0xff]
  %v37 = vld [vmem:[%s0 + $0x8] sm:$0xff]
  %v38 = vld [vmem:[%s0 + $0x10] sm:$0xff]
  %v39 = vld [vmem:[%s0 + $0x18] sm:$0xff]
  %v40 = vld [vmem:[%s0 + $0x20] sm:$0xff]
  %v41 = vld [vmem:[%s0 + $0x28] sm:$0xff]
  %v42 = vld [vmem:[%s0 + $0x30] sm:$0xff]
  %v43 = vld [vmem:[%s0 + $0x38] sm:$0xff]
  %45 = vset.pattern.permute.xlu0 0
  %46 = vperm.xlu0 %45, %v36
  %v47 = vpop.permute.xlu0 %46
  %50 = vset.pattern.permute.xlu0 0
  %51 = vperm.xlu0 %50, %v37
  %v52 = vpop.permute.xlu0 %51
  %55 = vset.pattern.permute.xlu0 0
  %56 = vperm.xlu0 %55, %v38
  %v57 = vpop.permute.xlu0 %56
  %60 = vset.pattern.permute.xlu0 0
  %61 = vperm.xlu0 %60, %v39
  %v62 = vpop.permute.xlu0 %61
  %65 = vset.pattern.permute.xlu0 0
  %66 = vperm.xlu0 %65, %v40
  %v67 = vpop.permute.xlu0 %66
  %70 = vset.pattern.permute.xlu0 0
  %71 = vperm.xlu0 %70, %v41
  %v72 = vpop.permute.xlu0 %71
  %75 = vset.pattern.permute.xlu0 0
  %76 = vperm.xlu0 %75, %v42
  %v77 = vpop.permute.xlu0 %76
  %80 = vset.pattern.permute.xlu0 0
  %81 = vperm.xlu0 %80, %v43
  %v82 = vpop.permute.xlu0 %81
  %v84 = vmul.f32 %v47, %v27
  %v85 = vmul.f32 %v47, %v28
  %v86 = vmul.f32 %v52, %v27
  %v87 = vmul.f32 %v52, %v28
  %v88 = vmul.f32 %v57, %v27
  %v89 = vmul.f32 %v57, %v28
  %v90 = vmul.f32 %v62, %v27
  %v91 = vmul.f32 %v62, %v28
  %v92 = vmul.f32 %v67, %v27
  %v93 = vmul.f32 %v67, %v28
  %v94 = vmul.f32 %v72, %v27
  %v95 = vmul.f32 %v72, %v28
  %v96 = vmul.f32 %v77, %v27
  %v97 = vmul.f32 %v77, %v28
  %v98 = vmul.f32 %v82, %v27
  %v99 = vmul.f32 %v82, %v28
  %100 = vset.pattern.permute.xlu0 1
  %101 = vperm.xlu0 %100, %v36
  %v102 = vpop.permute.xlu0 %101
  %104 = vset.pattern.permute.xlu0 1
  %105 = vperm.xlu0 %104, %v37
  %v106 = vpop.permute.xlu0 %105
  %108 = vset.pattern.permute.xlu0 1
  %109 = vperm.xlu0 %108, %v38
  %v110 = vpop.permute.xlu0 %109
  %112 = vset.pattern.permute.xlu0 1
  %113 = vperm.xlu0 %112, %v39
  %v114 = vpop.permute.xlu0 %113
  %116 = vset.pattern.permute.xlu0 1
  %117 = vperm.xlu0 %116, %v40
  %v118 = vpop.permute.xlu0 %117
  %120 = vset.pattern.permute.xlu0 1
  %121 = vperm.xlu0 %120, %v41
  %v122 = vpop.permute.xlu0 %121
  %124 = vset.pattern.permute.xlu0 1
  %125 = vperm.xlu0 %124, %v42
  %v126 = vpop.permute.xlu0 %125
  %128 = vset.pattern.permute.xlu0 1
  %129 = vperm.xlu0 %128, %v43
  %v130 = vpop.permute.xlu0 %129
  %v132 = vmul.f32 %v102, %v34
  %v133 = vmul.f32 %v102, %v35
  %v134 = vmul.f32 %v106, %v34
  %v135 = vmul.f32 %v106, %v35
  %v136 = vmul.f32 %v110, %v34
  %v137 = vmul.f32 %v110, %v35
  %v138 = vmul.f32 %v114, %v34
  %v139 = vmul.f32 %v114, %v35
  %v140 = vmul.f32 %v118, %v34
  %v141 = vmul.f32 %v118, %v35
  %v142 = vmul.f32 %v122, %v34
  %v143 = vmul.f32 %v122, %v35
  %v144 = vmul.f32 %v126, %v34
  %v145 = vmul.f32 %v126, %v35
  %v146 = vmul.f32 %v130, %v34
  %v147 = vmul.f32 %v130, %v35
  %v148 = vadd.f32 %v84, %v132
  %v149 = vadd.f32 %v85, %v133
  %v150 = vadd.f32 %v86, %v134
  %v151 = vadd.f32 %v87, %v135
  %v152 = vadd.f32 %v88, %v136
  %v153 = vadd.f32 %v89, %v137
  %v154 = vadd.f32 %v90, %v138
  %v155 = vadd.f32 %v91, %v139
  %v156 = vadd.f32 %v92, %v140
  %v157 = vadd.f32 %v93, %v141
  %v158 = vadd.f32 %v94, %v142
  %v159 = vadd.f32 %v95, %v143
  %v160 = vadd.f32 %v96, %v144
  %v161 = vadd.f32 %v97, %v145
  %v162 = vadd.f32 %v98, %v146
  %v163 = vadd.f32 %v99, %v147
  %v164 = vand.u32 2147483647, %v148
  %vm165 = vcmp.le.f32.partialorder %v164, 0.7853982
  %vm166 = vcmp.lt.s32.totalorder %v148, 0
  %v167 = vand.u32 %v148, 2139095040
  %v168 = vshrl.u32 %v167, 23
  %v169 = vsub.s32 %v168, 127
  %v170 = vand.u32 2147483647, %v148
  %v171 = vand.u32 %v170, 8388607
  %v172 = vor.u32 %v171, 8388608
  %v173 = vsub.s32 0, %v172
  %v174 = vadd.s32 %v169, 1
  %vm175 = vcmp.gt.s32.totalorder %v174, 0
  %v176 = vsel %vm175, %v174, 0
  %v177 = vshrl.u32 %v176, 5
  %v178 = vand.u32 %v176, 31
  %v179 = vsub.s32 32, %v178
  %v180 = vshrl.u32 683565275, %v179
  %v181 = vshll.u32 683565275, %v178
  %v182 = vshrl.u32 2475754826, %v179
  %v183 = vor.u32 %v181, %v182
  %v184 = vshll.u32 2475754826, %v178
  %v185 = vshrl.u32 2131351028, %v179
  %v186 = vor.u32 %v184, %v185
  %v187 = vshll.u32 2131351028, %v178
  %v188 = vshrl.u32 2102212464, %v179
  %v189 = vor.u32 %v187, %v188
  %v190 = vshll.u32 2102212464, %v178
  %v191 = vshrl.u32 920167782, %v179
  %v192 = vor.u32 %v190, %v191
  %v193 = vshll.u32 920167782, %v178
  %v194 = vshrl.u32 1326507024, %v179
  %v195 = vor.u32 %v193, %v194
  %vm196 = vcmp.lt.s32.totalorder %v177, 1
  %vm197 = vcmp.lt.s32.totalorder %v177, 2
  %vm198 = vcmp.lt.s32.totalorder %v177, 3
  %vm199 = vcmp.lt.s32.totalorder %v177, 4
  %v200 = vsel %vm196, %v180, %v183
  %v201 = vsel %vm199, %v189, 2102212464
  %v202 = vsel %vm198, %v186, %v201
  %v203 = vsel %vm197, %v200, %v202
  %v204 = vsel %vm196, %v183, %v186
  %v205 = vsel %vm199, %v192, 920167782
  %v206 = vsel %vm198, %v189, %v205
  %v207 = vsel %vm197, %v204, %v206
  %v208 = vsel %vm196, %v186, %v189
  %v209 = vsel %vm199, %v195, 1326507024
  %v210 = vsel %vm198, %v192, %v209
  %v211 = vsel %vm197, %v208, %v210
  %v212 = vshll.u32 %v172, 8
  %v213 = vmul.u32.u64.compose %v212, %v211
  %v214 = vextract.low.u32 %v213
  %v215 = vextract.high.u32 %v213
  %v216 = vmul.u32.u64.compose %v212, %v207
  %v217 = vextract.low.u32 %v216
  %v218 = vextract.high.u32 %v216
  %v219 = vmul.u32 %v212, %v203
  %v220 = vadd.s32 %v215, %v217
  %vm221 = vc.u32 %v215, %v217
  %v222 = vadd.s32 %v218, 1
  %v223 = vsel %vm221, %v222, %v218
  %v224 = vadd.s32 %v219, %v223
  %v225 = vadd.s32 %v224, 536870912
  %v226 = vshrl.u32 %v225, 30
  %v227 = vshll.u32 %v226, 30
  %v228 = vsub.s32 %v224, %v227
  %vm229 = vcmp.lt.s32.totalorder %v228, 0
  %v230 = vsub.s32 0, %v228
  %v231 = vsel %vm229, %v230, %v228
  %v232 = vclz %v231
  %v233 = vsub.s32 %v232, 2
  %vm234 = vcmp.gt.s32.totalorder 0, %v233
  %v235 = vsel %vm234, 0, %v233
  %v236 = vsub.s32 32, %v235
  %v237 = vshll.u32 %v228, %v235
  %v238 = vshrl.u32 %v220, %v236
  %v239 = vor.u32 %v237, %v238
  %v240 = vsub.s32 4294967266, %v235
  %v241 = vadd.s32 %v240, 127
  %v242 = vshll.u32 %v241, 23
  %v243 = vor.u32 4788187, %v242
  %v244 = vand.u32 2147483647, %v243
  %v246 = vcvt.s32.f32 %v239
  %v247 = vmul.f32 %v246, %v244
  %v248 = vxor.u32 %v247, 2147483648
  %v249 = vsel %vm166, %v248, %v247
  %v250 = vsub.s32 4, %v226
  %v251 = vsel %vm166, %v250, %v226
  %v252 = vsel %vm165, %v148, %v249
  %v253 = vsel %vm165, 0, %v251
  %v254 = vcosq.f32.pop %v252
  %v255 = vsinq.f32.pop %v252
  %vm256 = vweird.f32 %v148
  %v257 = vadd.s32 %v253, 3
  %v258 = vand.u32 %v257, 3
  %vm259 = vcmp.lt.s32.totalorder %v258, 2
  %vm260 = vcmp.eq.s32.totalorder %v258, 0
  %v261 = vxor.u32 %v255, 2147483648
  %v262 = vsel %vm260, %v254, %v261
  %vm263 = vcmp.eq.s32.totalorder %v258, 2
  %v264 = vxor.u32 %v254, 2147483648
  %v265 = vsel %vm263, %v264, %v255
  %v266 = vsel %vm259, %v262, %v265
  %v267 = vsel %vm256, nan, %v266
  %v268 = vand.u32 2147483647, %v149
  %vm269 = vcmp.le.f32.partialorder %v268, 0.7853982
  %vm270 = vcmp.lt.s32.totalorder %v149, 0
  %v271 = vand.u32 %v149, 2139095040
  %v272 = vshrl.u32 %v271, 23
  %v273 = vsub.s32 %v272, 127
  %v274 = vand.u32 2147483647, %v149
  %v275 = vand.u32 %v274, 8388607
  %v276 = vor.u32 %v275, 8388608
  %v277 = vsub.s32 0, %v276
  %v278 = vadd.s32 %v273, 1
  %vm279 = vcmp.gt.s32.totalorder %v278, 0
  %v280 = vsel %vm279, %v278, 0
  %v281 = vshrl.u32 %v280, 5
  %v282 = vand.u32 %v280, 31
  %v283 = vsub.s32 32, %v282
  %v284 = vshrl.u32 683565275, %v283
  %v285 = vshll.u32 683565275, %v282
  %v286 = vshrl.u32 2475754826, %v283
  %v287 = vor.u32 %v285, %v286
  %v288 = vshll.u32 2475754826, %v282
  %v289 = vshrl.u32 2131351028, %v283
  %v290 = vor.u32 %v288, %v289
  %v291 = vshll.u32 2131351028, %v282
  %v292 = vshrl.u32 2102212464, %v283
  %v293 = vor.u32 %v291, %v292
  %v294 = vshll.u32 2102212464, %v282
  %v295 = vshrl.u32 920167782, %v283
  %v296 = vor.u32 %v294, %v295
  %v297 = vshll.u32 920167782, %v282
  %v298 = vshrl.u32 1326507024, %v283
  %v299 = vor.u32 %v297, %v298
  %vm300 = vcmp.lt.s32.totalorder %v281, 1
  %vm301 = vcmp.lt.s32.totalorder %v281, 2
  %vm302 = vcmp.lt.s32.totalorder %v281, 3
  %vm303 = vcmp.lt.s32.totalorder %v281, 4
  %v304 = vsel %vm300, %v284, %v287
  %v305 = vsel %vm303, %v293, 2102212464
  %v306 = vsel %vm302, %v290, %v305
  %v307 = vsel %vm301, %v304, %v306
  %v308 = vsel %vm300, %v287, %v290
  %v309 = vsel %vm303, %v296, 920167782
  %v310 = vsel %vm302, %v293, %v309
  %v311 = vsel %vm301, %v308, %v310
  %v312 = vsel %vm300, %v290, %v293
  %v313 = vsel %vm303, %v299, 1326507024
  %v314 = vsel %vm302, %v296, %v313
  %v315 = vsel %vm301, %v312, %v314
  %v316 = vshll.u32 %v276, 8
  %v317 = vmul.u32.u64.compose %v316, %v315
  %v318 = vextract.low.u32 %v317
  %v319 = vextract.high.u32 %v317
  %v320 = vmul.u32.u64.compose %v316, %v311
  %v321 = vextract.low.u32 %v320
  %v322 = vextract.high.u32 %v320
  %v323 = vmul.u32 %v316, %v307
  %v324 = vadd.s32 %v319, %v321
  %vm325 = vc.u32 %v319, %v321
  %v326 = vadd.s32 %v322, 1
  %v327 = vsel %vm325, %v326, %v322
  %v328 = vadd.s32 %v323, %v327
  %v329 = vadd.s32 %v328, 536870912
  %v330 = vshrl.u32 %v329, 30
  %v331 = vshll.u32 %v330, 30
  %v332 = vsub.s32 %v328, %v331
  %vm333 = vcmp.lt.s32.totalorder %v332, 0
  %v334 = vsub.s32 0, %v332
  %v335 = vsel %vm333, %v334, %v332
  %v336 = vclz %v335
  %v337 = vsub.s32 %v336, 2
  %vm338 = vcmp.gt.s32.totalorder 0, %v337
  %v339 = vsel %vm338, 0, %v337
  %v340 = vsub.s32 32, %v339
  %v341 = vshll.u32 %v332, %v339
  %v342 = vshrl.u32 %v324, %v340
  %v343 = vor.u32 %v341, %v342
  %v344 = vsub.s32 4294967266, %v339
  %v345 = vadd.s32 %v344, 127
  %v346 = vshll.u32 %v345, 23
  %v347 = vor.u32 4788187, %v346
  %v348 = vand.u32 2147483647, %v347
  %v350 = vcvt.s32.f32 %v343
  %v351 = vmul.f32 %v350, %v348
  %v352 = vxor.u32 %v351, 2147483648
  %v353 = vsel %vm270, %v352, %v351
  %v354 = vsub.s32 4, %v330
  %v355 = vsel %vm270, %v354, %v330
  %v356 = vsel %vm269, %v149, %v353
  %v357 = vsel %vm269, 0, %v355
  %v358 = vcosq.f32.pop %v356
  %v359 = vsinq.f32.pop %v356
  %vm360 = vweird.f32 %v149
  %v361 = vadd.s32 %v357, 3
  %v362 = vand.u32 %v361, 3
  %vm363 = vcmp.lt.s32.totalorder %v362, 2
  %vm364 = vcmp.eq.s32.totalorder %v362, 0
  %v365 = vxor.u32 %v359, 2147483648
  %v366 = vsel %vm364, %v358, %v365
  %vm367 = vcmp.eq.s32.totalorder %v362, 2
  %v368 = vxor.u32 %v358, 2147483648
  %v369 = vsel %vm367, %v368, %v359
  %v370 = vsel %vm363, %v366, %v369
  %v371 = vsel %vm360, nan, %v370
  %v372 = vand.u32 2147483647, %v150
  %vm373 = vcmp.le.f32.partialorder %v372, 0.7853982
  %vm374 = vcmp.lt.s32.totalorder %v150, 0
  %v375 = vand.u32 %v150, 2139095040
  %v376 = vshrl.u32 %v375, 23
  %v377 = vsub.s32 %v376, 127
  %v378 = vand.u32 2147483647, %v150
  %v379 = vand.u32 %v378, 8388607
  %v380 = vor.u32 %v379, 8388608
  %v381 = vsub.s32 0, %v380
  %v382 = vadd.s32 %v377, 1
  %vm383 = vcmp.gt.s32.totalorder %v382, 0
  %v384 = vsel %vm383, %v382, 0
  %v385 = vshrl.u32 %v384, 5
  %v386 = vand.u32 %v384, 31
  %v387 = vsub.s32 32, %v386
  %v388 = vshrl.u32 683565275, %v387
  %v389 = vshll.u32 683565275, %v386
  %v390 = vshrl.u32 2475754826, %v387
  %v391 = vor.u32 %v389, %v390
  %v392 = vshll.u32 2475754826, %v386
  %v393 = vshrl.u32 2131351028, %v387
  %v394 = vor.u32 %v392, %v393
  %v395 = vshll.u32 2131351028, %v386
  %v396 = vshrl.u32 2102212464, %v387
  %v397 = vor.u32 %v395, %v396
  %v398 = vshll.u32 2102212464, %v386
  %v399 = vshrl.u32 920167782, %v387
  %v400 = vor.u32 %v398, %v399
  %v401 = vshll.u32 920167782, %v386
  %v402 = vshrl.u32 1326507024, %v387
  %v403 = vor.u32 %v401, %v402
  %vm404 = vcmp.lt.s32.totalorder %v385, 1
  %vm405 = vcmp.lt.s32.totalorder %v385, 2
  %vm406 = vcmp.lt.s32.totalorder %v385, 3
  %vm407 = vcmp.lt.s32.totalorder %v385, 4
  %v408 = vsel %vm404, %v388, %v391
  %v409 = vsel %vm407, %v397, 2102212464
  %v410 = vsel %vm406, %v394, %v409
  %v411 = vsel %vm405, %v408, %v410
  %v412 = vsel %vm404, %v391, %v394
  %v413 = vsel %vm407, %v400, 920167782
  %v414 = vsel %vm406, %v397, %v413
  %v415 = vsel %vm405, %v412, %v414
  %v416 = vsel %vm404, %v394, %v397
  %v417 = vsel %vm407, %v403, 1326507024
  %v418 = vsel %vm406, %v400, %v417
  %v419 = vsel %vm405, %v416, %v418
  %v420 = vshll.u32 %v380, 8
  %v421 = vmul.u32.u64.compose %v420, %v419
  %v422 = vextract.low.u32 %v421
  %v423 = vextract.high.u32 %v421
  %v424 = vmul.u32.u64.compose %v420, %v415
  %v425 = vextract.low.u32 %v424
  %v426 = vextract.high.u32 %v424
  %v427 = vmul.u32 %v420, %v411
  %v428 = vadd.s32 %v423, %v425
  %vm429 = vc.u32 %v423, %v425
  %v430 = vadd.s32 %v426, 1
  %v431 = vsel %vm429, %v430, %v426
  %v432 = vadd.s32 %v427, %v431
  %v433 = vadd.s32 %v432, 536870912
  %v434 = vshrl.u32 %v433, 30
  %v435 = vshll.u32 %v434, 30
  %v436 = vsub.s32 %v432, %v435
  %vm437 = vcmp.lt.s32.totalorder %v436, 0
  %v438 = vsub.s32 0, %v436
  %v439 = vsel %vm437, %v438, %v436
  %v440 = vclz %v439
  %v441 = vsub.s32 %v440, 2
  %vm442 = vcmp.gt.s32.totalorder 0, %v441
  %v443 = vsel %vm442, 0, %v441
  %v444 = vsub.s32 32, %v443
  %v445 = vshll.u32 %v436, %v443
  %v446 = vshrl.u32 %v428, %v444
  %v447 = vor.u32 %v445, %v446
  %v448 = vsub.s32 4294967266, %v443
  %v449 = vadd.s32 %v448, 127
  %v450 = vshll.u32 %v449, 23
  %v451 = vor.u32 4788187, %v450
  %v452 = vand.u32 2147483647, %v451
  %v454 = vcvt.s32.f32 %v447
  %v455 = vmul.f32 %v454, %v452
  %v456 = vxor.u32 %v455, 2147483648
  %v457 = vsel %vm374, %v456, %v455
  %v458 = vsub.s32 4, %v434
  %v459 = vsel %vm374, %v458, %v434
  %v460 = vsel %vm373, %v150, %v457
  %v461 = vsel %vm373, 0, %v459
  %v462 = vcosq.f32.pop %v460
  %v463 = vsinq.f32.pop %v460
  %vm464 = vweird.f32 %v150
  %v465 = vadd.s32 %v461, 3
  %v466 = vand.u32 %v465, 3
  %vm467 = vcmp.lt.s32.totalorder %v466, 2
  %vm468 = vcmp.eq.s32.totalorder %v466, 0
  %v469 = vxor.u32 %v463, 2147483648
  %v470 = vsel %vm468, %v462, %v469
  %vm471 = vcmp.eq.s32.totalorder %v466, 2
  %v472 = vxor.u32 %v462, 2147483648
  %v473 = vsel %vm471, %v472, %v463
  %v474 = vsel %vm467, %v470, %v473
  %v475 = vsel %vm464, nan, %v474
  %v476 = vand.u32 2147483647, %v151
  %vm477 = vcmp.le.f32.partialorder %v476, 0.7853982
  %vm478 = vcmp.lt.s32.totalorder %v151, 0
  %v479 = vand.u32 %v151, 2139095040
  %v480 = vshrl.u32 %v479, 23
  %v481 = vsub.s32 %v480, 127
  %v482 = vand.u32 2147483647, %v151
  %v483 = vand.u32 %v482, 8388607
  %v484 = vor.u32 %v483, 8388608
  %v485 = vsub.s32 0, %v484
  %v486 = vadd.s32 %v481, 1
  %vm487 = vcmp.gt.s32.totalorder %v486, 0
  %v488 = vsel %vm487, %v486, 0
  %v489 = vshrl.u32 %v488, 5
  %v490 = vand.u32 %v488, 31
  %v491 = vsub.s32 32, %v490
  %v492 = vshrl.u32 683565275, %v491
  %v493 = vshll.u32 683565275, %v490
  %v494 = vshrl.u32 2475754826, %v491
  %v495 = vor.u32 %v493, %v494
  %v496 = vshll.u32 2475754826, %v490
  %v497 = vshrl.u32 2131351028, %v491
  %v498 = vor.u32 %v496, %v497
  %v499 = vshll.u32 2131351028, %v490
  %v500 = vshrl.u32 2102212464, %v491
  %v501 = vor.u32 %v499, %v500
  %v502 = vshll.u32 2102212464, %v490
  %v503 = vshrl.u32 920167782, %v491
  %v504 = vor.u32 %v502, %v503
  %v505 = vshll.u32 920167782, %v490
  %v506 = vshrl.u32 1326507024, %v491
  %v507 = vor.u32 %v505, %v506
  %vm508 = vcmp.lt.s32.totalorder %v489, 1
  %vm509 = vcmp.lt.s32.totalorder %v489, 2
  %vm510 = vcmp.lt.s32.totalorder %v489, 3
  %vm511 = vcmp.lt.s32.totalorder %v489, 4
  %v512 = vsel %vm508, %v492, %v495
  %v513 = vsel %vm511, %v501, 2102212464
  %v514 = vsel %vm510, %v498, %v513
  %v515 = vsel %vm509, %v512, %v514
  %v516 = vsel %vm508, %v495, %v498
  %v517 = vsel %vm511, %v504, 920167782
  %v518 = vsel %vm510, %v501, %v517
  %v519 = vsel %vm509, %v516, %v518
  %v520 = vsel %vm508, %v498, %v501
  %v521 = vsel %vm511, %v507, 1326507024
  %v522 = vsel %vm510, %v504, %v521
  %v523 = vsel %vm509, %v520, %v522
  %v524 = vshll.u32 %v484, 8
  %v525 = vmul.u32.u64.compose %v524, %v523
  %v526 = vextract.low.u32 %v525
  %v527 = vextract.high.u32 %v525
  %v528 = vmul.u32.u64.compose %v524, %v519
  %v529 = vextract.low.u32 %v528
  %v530 = vextract.high.u32 %v528
  %v531 = vmul.u32 %v524, %v515
  %v532 = vadd.s32 %v527, %v529
  %vm533 = vc.u32 %v527, %v529
  %v534 = vadd.s32 %v530, 1
  %v535 = vsel %vm533, %v534, %v530
  %v536 = vadd.s32 %v531, %v535
  %v537 = vadd.s32 %v536, 536870912
  %v538 = vshrl.u32 %v537, 30
  %v539 = vshll.u32 %v538, 30
  %v540 = vsub.s32 %v536, %v539
  %vm541 = vcmp.lt.s32.totalorder %v540, 0
  %v542 = vsub.s32 0, %v540
  %v543 = vsel %vm541, %v542, %v540
  %v544 = vclz %v543
  %v545 = vsub.s32 %v544, 2
  %vm546 = vcmp.gt.s32.totalorder 0, %v545
  %v547 = vsel %vm546, 0, %v545
  %v548 = vsub.s32 32, %v547
  %v549 = vshll.u32 %v540, %v547
  %v550 = vshrl.u32 %v532, %v548
  %v551 = vor.u32 %v549, %v550
  %v552 = vsub.s32 4294967266, %v547
  %v553 = vadd.s32 %v552, 127
  %v554 = vshll.u32 %v553, 23
  %v555 = vor.u32 4788187, %v554
  %v556 = vand.u32 2147483647, %v555
  %v558 = vcvt.s32.f32 %v551
  %v559 = vmul.f32 %v558, %v556
  %v560 = vxor.u32 %v559, 2147483648
  %v561 = vsel %vm478, %v560, %v559
  %v562 = vsub.s32 4, %v538
  %v563 = vsel %vm478, %v562, %v538
  %v564 = vsel %vm477, %v151, %v561
  %v565 = vsel %vm477, 0, %v563
  %v566 = vcosq.f32.pop %v564
  %v567 = vsinq.f32.pop %v564
  %vm568 = vweird.f32 %v151
  %v569 = vadd.s32 %v565, 3
  %v570 = vand.u32 %v569, 3
  %vm571 = vcmp.lt.s32.totalorder %v570, 2
  %vm572 = vcmp.eq.s32.totalorder %v570, 0
  %v573 = vxor.u32 %v567, 2147483648
  %v574 = vsel %vm572, %v566, %v573
  %vm575 = vcmp.eq.s32.totalorder %v570, 2
  %v576 = vxor.u32 %v566, 2147483648
  %v577 = vsel %vm575, %v576, %v567
  %v578 = vsel %vm571, %v574, %v577
  %v579 = vsel %vm568, nan, %v578
  %v580 = vand.u32 2147483647, %v152
  %vm581 = vcmp.le.f32.partialorder %v580, 0.7853982
  %vm582 = vcmp.lt.s32.totalorder %v152, 0
  %v583 = vand.u32 %v152, 2139095040
  %v584 = vshrl.u32 %v583, 23
  %v585 = vsub.s32 %v584, 127
  %v586 = vand.u32 2147483647, %v152
  %v587 = vand.u32 %v586, 8388607
  %v588 = vor.u32 %v587, 8388608
  %v589 = vsub.s32 0, %v588
  %v590 = vadd.s32 %v585, 1
  %vm591 = vcmp.gt.s32.totalorder %v590, 0
  %v592 = vsel %vm591, %v590, 0
  %v593 = vshrl.u32 %v592, 5
  %v594 = vand.u32 %v592, 31
  %v595 = vsub.s32 32, %v594
  %v596 = vshrl.u32 683565275, %v595
  %v597 = vshll.u32 683565275, %v594
  %v598 = vshrl.u32 2475754826, %v595
  %v599 = vor.u32 %v597, %v598
  %v600 = vshll.u32 2475754826, %v594
  %v601 = vshrl.u32 2131351028, %v595
  %v602 = vor.u32 %v600, %v601
  %v603 = vshll.u32 2131351028, %v594
  %v604 = vshrl.u32 2102212464, %v595
  %v605 = vor.u32 %v603, %v604
  %v606 = vshll.u32 2102212464, %v594
  %v607 = vshrl.u32 920167782, %v595
  %v608 = vor.u32 %v606, %v607
  %v609 = vshll.u32 920167782, %v594
  %v610 = vshrl.u32 1326507024, %v595
  %v611 = vor.u32 %v609, %v610
  %vm612 = vcmp.lt.s32.totalorder %v593, 1
  %vm613 = vcmp.lt.s32.totalorder %v593, 2
  %vm614 = vcmp.lt.s32.totalorder %v593, 3
  %vm615 = vcmp.lt.s32.totalorder %v593, 4
  %v616 = vsel %vm612, %v596, %v599
  %v617 = vsel %vm615, %v605, 2102212464
  %v618 = vsel %vm614, %v602, %v617
  %v619 = vsel %vm613, %v616, %v618
  %v620 = vsel %vm612, %v599, %v602
  %v621 = vsel %vm615, %v608, 920167782
  %v622 = vsel %vm614, %v605, %v621
  %v623 = vsel %vm613, %v620, %v622
  %v624 = vsel %vm612, %v602, %v605
  %v625 = vsel %vm615, %v611, 1326507024
  %v626 = vsel %vm614, %v608, %v625
  %v627 = vsel %vm613, %v624, %v626
  %v628 = vshll.u32 %v588, 8
  %v629 = vmul.u32.u64.compose %v628, %v627
  %v630 = vextract.low.u32 %v629
  %v631 = vextract.high.u32 %v629
  %v632 = vmul.u32.u64.compose %v628, %v623
  %v633 = vextract.low.u32 %v632
  %v634 = vextract.high.u32 %v632
  %v635 = vmul.u32 %v628, %v619
  %v636 = vadd.s32 %v631, %v633
  %vm637 = vc.u32 %v631, %v633
  %v638 = vadd.s32 %v634, 1
  %v639 = vsel %vm637, %v638, %v634
  %v640 = vadd.s32 %v635, %v639
  %v641 = vadd.s32 %v640, 536870912
  %v642 = vshrl.u32 %v641, 30
  %v643 = vshll.u32 %v642, 30
  %v644 = vsub.s32 %v640, %v643
  %vm645 = vcmp.lt.s32.totalorder %v644, 0
  %v646 = vsub.s32 0, %v644
  %v647 = vsel %vm645, %v646, %v644
  %v648 = vclz %v647
  %v649 = vsub.s32 %v648, 2
  %vm650 = vcmp.gt.s32.totalorder 0, %v649
  %v651 = vsel %vm650, 0, %v649
  %v652 = vsub.s32 32, %v651
  %v653 = vshll.u32 %v644, %v651
  %v654 = vshrl.u32 %v636, %v652
  %v655 = vor.u32 %v653, %v654
  %v656 = vsub.s32 4294967266, %v651
  %v657 = vadd.s32 %v656, 127
  %v658 = vshll.u32 %v657, 23
  %v659 = vor.u32 4788187, %v658
  %v660 = vand.u32 2147483647, %v659
  %v662 = vcvt.s32.f32 %v655
  %v663 = vmul.f32 %v662, %v660
  %v664 = vxor.u32 %v663, 2147483648
  %v665 = vsel %vm582, %v664, %v663
  %v666 = vsub.s32 4, %v642
  %v667 = vsel %vm582, %v666, %v642
  %v668 = vsel %vm581, %v152, %v665
  %v669 = vsel %vm581, 0, %v667
  %v670 = vcosq.f32.pop %v668
  %v671 = vsinq.f32.pop %v668
  %vm672 = vweird.f32 %v152
  %v673 = vadd.s32 %v669, 3
  %v674 = vand.u32 %v673, 3
  %vm675 = vcmp.lt.s32.totalorder %v674, 2
  %vm676 = vcmp.eq.s32.totalorder %v674, 0
  %v677 = vxor.u32 %v671, 2147483648
  %v678 = vsel %vm676, %v670, %v677
  %vm679 = vcmp.eq.s32.totalorder %v674, 2
  %v680 = vxor.u32 %v670, 2147483648
  %v681 = vsel %vm679, %v680, %v671
  %v682 = vsel %vm675, %v678, %v681
  %v683 = vsel %vm672, nan, %v682
  %v684 = vand.u32 2147483647, %v153
  %vm685 = vcmp.le.f32.partialorder %v684, 0.7853982
  %vm686 = vcmp.lt.s32.totalorder %v153, 0
  %v687 = vand.u32 %v153, 2139095040
  %v688 = vshrl.u32 %v687, 23
  %v689 = vsub.s32 %v688, 127
  %v690 = vand.u32 2147483647, %v153
  %v691 = vand.u32 %v690, 8388607
  %v692 = vor.u32 %v691, 8388608
  %v693 = vsub.s32 0, %v692
  %v694 = vadd.s32 %v689, 1
  %vm695 = vcmp.gt.s32.totalorder %v694, 0
  %v696 = vsel %vm695, %v694, 0
  %v697 = vshrl.u32 %v696, 5
  %v698 = vand.u32 %v696, 31
  %v699 = vsub.s32 32, %v698
  %v700 = vshrl.u32 683565275, %v699
  %v701 = vshll.u32 683565275, %v698
  %v702 = vshrl.u32 2475754826, %v699
  %v703 = vor.u32 %v701, %v702
  %v704 = vshll.u32 2475754826, %v698
  %v705 = vshrl.u32 2131351028, %v699
  %v706 = vor.u32 %v704, %v705
  %v707 = vshll.u32 2131351028, %v698
  %v708 = vshrl.u32 2102212464, %v699
  %v709 = vor.u32 %v707, %v708
  %v710 = vshll.u32 2102212464, %v698
  %v711 = vshrl.u32 920167782, %v699
  %v712 = vor.u32 %v710, %v711
  %v713 = vshll.u32 920167782, %v698
  %v714 = vshrl.u32 1326507024, %v699
  %v715 = vor.u32 %v713, %v714
  %vm716 = vcmp.lt.s32.totalorder %v697, 1
  %vm717 = vcmp.lt.s32.totalorder %v697, 2
  %vm718 = vcmp.lt.s32.totalorder %v697, 3
  %vm719 = vcmp.lt.s32.totalorder %v697, 4
  %v720 = vsel %vm716, %v700, %v703
  %v721 = vsel %vm719, %v709, 2102212464
  %v722 = vsel %vm718, %v706, %v721
  %v723 = vsel %vm717, %v720, %v722
  %v724 = vsel %vm716, %v703, %v706
  %v725 = vsel %vm719, %v712, 920167782
  %v726 = vsel %vm718, %v709, %v725
  %v727 = vsel %vm717, %v724, %v726
  %v728 = vsel %vm716, %v706, %v709
  %v729 = vsel %vm719, %v715, 1326507024
  %v730 = vsel %vm718, %v712, %v729
  %v731 = vsel %vm717, %v728, %v730
  %v732 = vshll.u32 %v692, 8
  %v733 = vmul.u32.u64.compose %v732, %v731
  %v734 = vextract.low.u32 %v733
  %v735 = vextract.high.u32 %v733
  %v736 = vmul.u32.u64.compose %v732, %v727
  %v737 = vextract.low.u32 %v736
  %v738 = vextract.high.u32 %v736
  %v739 = vmul.u32 %v732, %v723
  %v740 = vadd.s32 %v735, %v737
  %vm741 = vc.u32 %v735, %v737
  %v742 = vadd.s32 %v738, 1
  %v743 = vsel %vm741, %v742, %v738
  %v744 = vadd.s32 %v739, %v743
  %v745 = vadd.s32 %v744, 536870912
  %v746 = vshrl.u32 %v745, 30
  %v747 = vshll.u32 %v746, 30
  %v748 = vsub.s32 %v744, %v747
  %vm749 = vcmp.lt.s32.totalorder %v748, 0
  %v750 = vsub.s32 0, %v748
  %v751 = vsel %vm749, %v750, %v748
  %v752 = vclz %v751
  %v753 = vsub.s32 %v752, 2
  %vm754 = vcmp.gt.s32.totalorder 0, %v753
  %v755 = vsel %vm754, 0, %v753
  %v756 = vsub.s32 32, %v755
  %v757 = vshll.u32 %v748, %v755
  %v758 = vshrl.u32 %v740, %v756
  %v759 = vor.u32 %v757, %v758
  %v760 = vsub.s32 4294967266, %v755
  %v761 = vadd.s32 %v760, 127
  %v762 = vshll.u32 %v761, 23
  %v763 = vor.u32 4788187, %v762
  %v764 = vand.u32 2147483647, %v763
  %v766 = vcvt.s32.f32 %v759
  %v767 = vmul.f32 %v766, %v764
  %v768 = vxor.u32 %v767, 2147483648
  %v769 = vsel %vm686, %v768, %v767
  %v770 = vsub.s32 4, %v746
  %v771 = vsel %vm686, %v770, %v746
  %v772 = vsel %vm685, %v153, %v769
  %v773 = vsel %vm685, 0, %v771
  %v774 = vcosq.f32.pop %v772
  %v775 = vsinq.f32.pop %v772
  %vm776 = vweird.f32 %v153
  %v777 = vadd.s32 %v773, 3
  %v778 = vand.u32 %v777, 3
  %vm779 = vcmp.lt.s32.totalorder %v778, 2
  %vm780 = vcmp.eq.s32.totalorder %v778, 0
  %v781 = vxor.u32 %v775, 2147483648
  %v782 = vsel %vm780, %v774, %v781
  %vm783 = vcmp.eq.s32.totalorder %v778, 2
  %v784 = vxor.u32 %v774, 2147483648
  %v785 = vsel %vm783, %v784, %v775
  %v786 = vsel %vm779, %v782, %v785
  %v787 = vsel %vm776, nan, %v786
  %v788 = vand.u32 2147483647, %v154
  %vm789 = vcmp.le.f32.partialorder %v788, 0.7853982
  %vm790 = vcmp.lt.s32.totalorder %v154, 0
  %v791 = vand.u32 %v154, 2139095040
  %v792 = vshrl.u32 %v791, 23
  %v793 = vsub.s32 %v792, 127
  %v794 = vand.u32 2147483647, %v154
  %v795 = vand.u32 %v794, 8388607
  %v796 = vor.u32 %v795, 8388608
  %v797 = vsub.s32 0, %v796
  %v798 = vadd.s32 %v793, 1
  %vm799 = vcmp.gt.s32.totalorder %v798, 0
  %v800 = vsel %vm799, %v798, 0
  %v801 = vshrl.u32 %v800, 5
  %v802 = vand.u32 %v800, 31
  %v803 = vsub.s32 32, %v802
  %v804 = vshrl.u32 683565275, %v803
  %v805 = vshll.u32 683565275, %v802
  %v806 = vshrl.u32 2475754826, %v803
  %v807 = vor.u32 %v805, %v806
  %v808 = vshll.u32 2475754826, %v802
  %v809 = vshrl.u32 2131351028, %v803
  %v810 = vor.u32 %v808, %v809
  %v811 = vshll.u32 2131351028, %v802
  %v812 = vshrl.u32 2102212464, %v803
  %v813 = vor.u32 %v811, %v812
  %v814 = vshll.u32 2102212464, %v802
  %v815 = vshrl.u32 920167782, %v803
  %v816 = vor.u32 %v814, %v815
  %v817 = vshll.u32 920167782, %v802
  %v818 = vshrl.u32 1326507024, %v803
  %v819 = vor.u32 %v817, %v818
  %vm820 = vcmp.lt.s32.totalorder %v801, 1
  %vm821 = vcmp.lt.s32.totalorder %v801, 2
  %vm822 = vcmp.lt.s32.totalorder %v801, 3
  %vm823 = vcmp.lt.s32.totalorder %v801, 4
  %v824 = vsel %vm820, %v804, %v807
  %v825 = vsel %vm823, %v813, 2102212464
  %v826 = vsel %vm822, %v810, %v825
  %v827 = vsel %vm821, %v824, %v826
  %v828 = vsel %vm820, %v807, %v810
  %v829 = vsel %vm823, %v816, 920167782
  %v830 = vsel %vm822, %v813, %v829
  %v831 = vsel %vm821, %v828, %v830
  %v832 = vsel %vm820, %v810, %v813
  %v833 = vsel %vm823, %v819, 1326507024
  %v834 = vsel %vm822, %v816, %v833
  %v835 = vsel %vm821, %v832, %v834
  %v836 = vshll.u32 %v796, 8
  %v837 = vmul.u32.u64.compose %v836, %v835
  %v838 = vextract.low.u32 %v837
  %v839 = vextract.high.u32 %v837
  %v840 = vmul.u32.u64.compose %v836, %v831
  %v841 = vextract.low.u32 %v840
  %v842 = vextract.high.u32 %v840
  %v843 = vmul.u32 %v836, %v827
  %v844 = vadd.s32 %v839, %v841
  %vm845 = vc.u32 %v839, %v841
  %v846 = vadd.s32 %v842, 1
  %v847 = vsel %vm845, %v846, %v842
  %v848 = vadd.s32 %v843, %v847
  %v849 = vadd.s32 %v848, 536870912
  %v850 = vshrl.u32 %v849, 30
  %v851 = vshll.u32 %v850, 30
  %v852 = vsub.s32 %v848, %v851
  %vm853 = vcmp.lt.s32.totalorder %v852, 0
  %v854 = vsub.s32 0, %v852
  %v855 = vsel %vm853, %v854, %v852
  %v856 = vclz %v855
  %v857 = vsub.s32 %v856, 2
  %vm858 = vcmp.gt.s32.totalorder 0, %v857
  %v859 = vsel %vm858, 0, %v857
  %v860 = vsub.s32 32, %v859
  %v861 = vshll.u32 %v852, %v859
  %v862 = vshrl.u32 %v844, %v860
  %v863 = vor.u32 %v861, %v862
  %v864 = vsub.s32 4294967266, %v859
  %v865 = vadd.s32 %v864, 127
  %v866 = vshll.u32 %v865, 23
  %v867 = vor.u32 4788187, %v866
  %v868 = vand.u32 2147483647, %v867
  %v870 = vcvt.s32.f32 %v863
  %v871 = vmul.f32 %v870, %v868
  %v872 = vxor.u32 %v871, 2147483648
  %v873 = vsel %vm790, %v872, %v871
  %v874 = vsub.s32 4, %v850
  %v875 = vsel %vm790, %v874, %v850
  %v876 = vsel %vm789, %v154, %v873
  %v877 = vsel %vm789, 0, %v875
  %v878 = vcosq.f32.pop %v876
  %v879 = vsinq.f32.pop %v876
  %vm880 = vweird.f32 %v154
  %v881 = vadd.s32 %v877, 3
  %v882 = vand.u32 %v881, 3
  %vm883 = vcmp.lt.s32.totalorder %v882, 2
  %vm884 = vcmp.eq.s32.totalorder %v882, 0
  %v885 = vxor.u32 %v879, 2147483648
  %v886 = vsel %vm884, %v878, %v885
  %vm887 = vcmp.eq.s32.totalorder %v882, 2
  %v888 = vxor.u32 %v878, 2147483648
  %v889 = vsel %vm887, %v888, %v879
  %v890 = vsel %vm883, %v886, %v889
  %v891 = vsel %vm880, nan, %v890
  %v892 = vand.u32 2147483647, %v155
  %vm893 = vcmp.le.f32.partialorder %v892, 0.7853982
  %vm894 = vcmp.lt.s32.totalorder %v155, 0
  %v895 = vand.u32 %v155, 2139095040
  %v896 = vshrl.u32 %v895, 23
  %v897 = vsub.s32 %v896, 127
  %v898 = vand.u32 2147483647, %v155
  %v899 = vand.u32 %v898, 8388607
  %v900 = vor.u32 %v899, 8388608
  %v901 = vsub.s32 0, %v900
  %v902 = vadd.s32 %v897, 1
  %vm903 = vcmp.gt.s32.totalorder %v902, 0
  %v904 = vsel %vm903, %v902, 0
  %v905 = vshrl.u32 %v904, 5
  %v906 = vand.u32 %v904, 31
  %v907 = vsub.s32 32, %v906
  %v908 = vshrl.u32 683565275, %v907
  %v909 = vshll.u32 683565275, %v906
  %v910 = vshrl.u32 2475754826, %v907
  %v911 = vor.u32 %v909, %v910
  %v912 = vshll.u32 2475754826, %v906
  %v913 = vshrl.u32 2131351028, %v907
  %v914 = vor.u32 %v912, %v913
  %v915 = vshll.u32 2131351028, %v906
  %v916 = vshrl.u32 2102212464, %v907
  %v917 = vor.u32 %v915, %v916
  %v918 = vshll.u32 2102212464, %v906
  %v919 = vshrl.u32 920167782, %v907
  %v920 = vor.u32 %v918, %v919
  %v921 = vshll.u32 920167782, %v906
  %v922 = vshrl.u32 1326507024, %v907
  %v923 = vor.u32 %v921, %v922
  %vm924 = vcmp.lt.s32.totalorder %v905, 1
  %vm925 = vcmp.lt.s32.totalorder %v905, 2
  %vm926 = vcmp.lt.s32.totalorder %v905, 3
  %vm927 = vcmp.lt.s32.totalorder %v905, 4
  %v928 = vsel %vm924, %v908, %v911
  %v929 = vsel %vm927, %v917, 2102212464
  %v930 = vsel %vm926, %v914, %v929
  %v931 = vsel %vm925, %v928, %v930
  %v932 = vsel %vm924, %v911, %v914
  %v933 = vsel %vm927, %v920, 920167782
  %v934 = vsel %vm926, %v917, %v933
  %v935 = vsel %vm925, %v932, %v934
  %v936 = vsel %vm924, %v914, %v917
  %v937 = vsel %vm927, %v923, 1326507024
  %v938 = vsel %vm926, %v920, %v937
  %v939 = vsel %vm925, %v936, %v938
  %v940 = vshll.u32 %v900, 8
  %v941 = vmul.u32.u64.compose %v940, %v939
  %v942 = vextract.low.u32 %v941
  %v943 = vextract.high.u32 %v941
  %v944 = vmul.u32.u64.compose %v940, %v935
  %v945 = vextract.low.u32 %v944
  %v946 = vextract.high.u32 %v944
  %v947 = vmul.u32 %v940, %v931
  %v948 = vadd.s32 %v943, %v945
  %vm949 = vc.u32 %v943, %v945
  %v950 = vadd.s32 %v946, 1
  %v951 = vsel %vm949, %v950, %v946
  %v952 = vadd.s32 %v947, %v951
  %v953 = vadd.s32 %v952, 536870912
  %v954 = vshrl.u32 %v953, 30
  %v955 = vshll.u32 %v954, 30
  %v956 = vsub.s32 %v952, %v955
  %vm957 = vcmp.lt.s32.totalorder %v956, 0
  %v958 = vsub.s32 0, %v956
  %v959 = vsel %vm957, %v958, %v956
  %v960 = vclz %v959
  %v961 = vsub.s32 %v960, 2
  %vm962 = vcmp.gt.s32.totalorder 0, %v961
  %v963 = vsel %vm962, 0, %v961
  %v964 = vsub.s32 32, %v963
  %v965 = vshll.u32 %v956, %v963
  %v966 = vshrl.u32 %v948, %v964
  %v967 = vor.u32 %v965, %v966
  %v968 = vsub.s32 4294967266, %v963
  %v969 = vadd.s32 %v968, 127
  %v970 = vshll.u32 %v969, 23
  %v971 = vor.u32 4788187, %v970
  %v972 = vand.u32 2147483647, %v971
  %v974 = vcvt.s32.f32 %v967
  %v975 = vmul.f32 %v974, %v972
  %v976 = vxor.u32 %v975, 2147483648
  %v977 = vsel %vm894, %v976, %v975
  %v978 = vsub.s32 4, %v954
  %v979 = vsel %vm894, %v978, %v954
  %v980 = vsel %vm893, %v155, %v977
  %v981 = vsel %vm893, 0, %v979
  %v982 = vcosq.f32.pop %v980
  %v983 = vsinq.f32.pop %v980
  %vm984 = vweird.f32 %v155
  %v985 = vadd.s32 %v981, 3
  %v986 = vand.u32 %v985, 3
  %vm987 = vcmp.lt.s32.totalorder %v986, 2
  %vm988 = vcmp.eq.s32.totalorder %v986, 0
  %v989 = vxor.u32 %v983, 2147483648
  %v990 = vsel %vm988, %v982, %v989
  %vm991 = vcmp.eq.s32.totalorder %v986, 2
  %v992 = vxor.u32 %v982, 2147483648
  %v993 = vsel %vm991, %v992, %v983
  %v994 = vsel %vm987, %v990, %v993
  %v995 = vsel %vm984, nan, %v994
  %v996 = vand.u32 2147483647, %v156
  %vm997 = vcmp.le.f32.partialorder %v996, 0.7853982
  %vm998 = vcmp.lt.s32.totalorder %v156, 0
  %v999 = vand.u32 %v156, 2139095040
  %v1000 = vshrl.u32 %v999, 23
  %v1001 = vsub.s32 %v1000, 127
  %v1002 = vand.u32 2147483647, %v156
  %v1003 = vand.u32 %v1002, 8388607
  %v1004 = vor.u32 %v1003, 8388608
  %v1005 = vsub.s32 0, %v1004
  %v1006 = vadd.s32 %v1001, 1
  %vm1007 = vcmp.gt.s32.totalorder %v1006, 0
  %v1008 = vsel %vm1007, %v1006, 0
  %v1009 = vshrl.u32 %v1008, 5
  %v1010 = vand.u32 %v1008, 31
  %v1011 = vsub.s32 32, %v1010
  %v1012 = vshrl.u32 683565275, %v1011
  %v1013 = vshll.u32 683565275, %v1010
  %v1014 = vshrl.u32 2475754826, %v1011
  %v1015 = vor.u32 %v1013, %v1014
  %v1016 = vshll.u32 2475754826, %v1010
  %v1017 = vshrl.u32 2131351028, %v1011
  %v1018 = vor.u32 %v1016, %v1017
  %v1019 = vshll.u32 2131351028, %v1010
  %v1020 = vshrl.u32 2102212464, %v1011
  %v1021 = vor.u32 %v1019, %v1020
  %v1022 = vshll.u32 2102212464, %v1010
  %v1023 = vshrl.u32 920167782, %v1011
  %v1024 = vor.u32 %v1022, %v1023
  %v1025 = vshll.u32 920167782, %v1010
  %v1026 = vshrl.u32 1326507024, %v1011
  %v1027 = vor.u32 %v1025, %v1026
  %vm1028 = vcmp.lt.s32.totalorder %v1009, 1
  %vm1029 = vcmp.lt.s32.totalorder %v1009, 2
  %vm1030 = vcmp.lt.s32.totalorder %v1009, 3
  %vm1031 = vcmp.lt.s32.totalorder %v1009, 4
  %v1032 = vsel %vm1028, %v1012, %v1015
  %v1033 = vsel %vm1031, %v1021, 2102212464
  %v1034 = vsel %vm1030, %v1018, %v1033
  %v1035 = vsel %vm1029, %v1032, %v1034
  %v1036 = vsel %vm1028, %v1015, %v1018
  %v1037 = vsel %vm1031, %v1024, 920167782
  %v1038 = vsel %vm1030, %v1021, %v1037
  %v1039 = vsel %vm1029, %v1036, %v1038
  %v1040 = vsel %vm1028, %v1018, %v1021
  %v1041 = vsel %vm1031, %v1027, 1326507024
  %v1042 = vsel %vm1030, %v1024, %v1041
  %v1043 = vsel %vm1029, %v1040, %v1042
  %v1044 = vshll.u32 %v1004, 8
  %v1045 = vmul.u32.u64.compose %v1044, %v1043
  %v1046 = vextract.low.u32 %v1045
  %v1047 = vextract.high.u32 %v1045
  %v1048 = vmul.u32.u64.compose %v1044, %v1039
  %v1049 = vextract.low.u32 %v1048
  %v1050 = vextract.high.u32 %v1048
  %v1051 = vmul.u32 %v1044, %v1035
  %v1052 = vadd.s32 %v1047, %v1049
  %vm1053 = vc.u32 %v1047, %v1049
  %v1054 = vadd.s32 %v1050, 1
  %v1055 = vsel %vm1053, %v1054, %v1050
  %v1056 = vadd.s32 %v1051, %v1055
  %v1057 = vadd.s32 %v1056, 536870912
  %v1058 = vshrl.u32 %v1057, 30
  %v1059 = vshll.u32 %v1058, 30
  %v1060 = vsub.s32 %v1056, %v1059
  %vm1061 = vcmp.lt.s32.totalorder %v1060, 0
  %v1062 = vsub.s32 0, %v1060
  %v1063 = vsel %vm1061, %v1062, %v1060
  %v1064 = vclz %v1063
  %v1065 = vsub.s32 %v1064, 2
  %vm1066 = vcmp.gt.s32.totalorder 0, %v1065
  %v1067 = vsel %vm1066, 0, %v1065
  %v1068 = vsub.s32 32, %v1067
  %v1069 = vshll.u32 %v1060, %v1067
  %v1070 = vshrl.u32 %v1052, %v1068
  %v1071 = vor.u32 %v1069, %v1070
  %v1072 = vsub.s32 4294967266, %v1067
  %v1073 = vadd.s32 %v1072, 127
  %v1074 = vshll.u32 %v1073, 23
  %v1075 = vor.u32 4788187, %v1074
  %v1076 = vand.u32 2147483647, %v1075
  %v1078 = vcvt.s32.f32 %v1071
  %v1079 = vmul.f32 %v1078, %v1076
  %v1080 = vxor.u32 %v1079, 2147483648
  %v1081 = vsel %vm998, %v1080, %v1079
  %v1082 = vsub.s32 4, %v1058
  %v1083 = vsel %vm998, %v1082, %v1058
  %v1084 = vsel %vm997, %v156, %v1081
  %v1085 = vsel %vm997, 0, %v1083
  %v1086 = vcosq.f32.pop %v1084
  %v1087 = vsinq.f32.pop %v1084
  %vm1088 = vweird.f32 %v156
  %v1089 = vadd.s32 %v1085, 3
  %v1090 = vand.u32 %v1089, 3
  %vm1091 = vcmp.lt.s32.totalorder %v1090, 2
  %vm1092 = vcmp.eq.s32.totalorder %v1090, 0
  %v1093 = vxor.u32 %v1087, 2147483648
  %v1094 = vsel %vm1092, %v1086, %v1093
  %vm1095 = vcmp.eq.s32.totalorder %v1090, 2
  %v1096 = vxor.u32 %v1086, 2147483648
  %v1097 = vsel %vm1095, %v1096, %v1087
  %v1098 = vsel %vm1091, %v1094, %v1097
  %v1099 = vsel %vm1088, nan, %v1098
  %v1100 = vand.u32 2147483647, %v157
  %vm1101 = vcmp.le.f32.partialorder %v1100, 0.7853982
  %vm1102 = vcmp.lt.s32.totalorder %v157, 0
  %v1103 = vand.u32 %v157, 2139095040
  %v1104 = vshrl.u32 %v1103, 23
  %v1105 = vsub.s32 %v1104, 127
  %v1106 = vand.u32 2147483647, %v157
  %v1107 = vand.u32 %v1106, 8388607
  %v1108 = vor.u32 %v1107, 8388608
  %v1109 = vsub.s32 0, %v1108
  %v1110 = vadd.s32 %v1105, 1
  %vm1111 = vcmp.gt.s32.totalorder %v1110, 0
  %v1112 = vsel %vm1111, %v1110, 0
  %v1113 = vshrl.u32 %v1112, 5
  %v1114 = vand.u32 %v1112, 31
  %v1115 = vsub.s32 32, %v1114
  %v1116 = vshrl.u32 683565275, %v1115
  %v1117 = vshll.u32 683565275, %v1114
  %v1118 = vshrl.u32 2475754826, %v1115
  %v1119 = vor.u32 %v1117, %v1118
  %v1120 = vshll.u32 2475754826, %v1114
  %v1121 = vshrl.u32 2131351028, %v1115
  %v1122 = vor.u32 %v1120, %v1121
  %v1123 = vshll.u32 2131351028, %v1114
  %v1124 = vshrl.u32 2102212464, %v1115
  %v1125 = vor.u32 %v1123, %v1124
  %v1126 = vshll.u32 2102212464, %v1114
  %v1127 = vshrl.u32 920167782, %v1115
  %v1128 = vor.u32 %v1126, %v1127
  %v1129 = vshll.u32 920167782, %v1114
  %v1130 = vshrl.u32 1326507024, %v1115
  %v1131 = vor.u32 %v1129, %v1130
  %vm1132 = vcmp.lt.s32.totalorder %v1113, 1
  %vm1133 = vcmp.lt.s32.totalorder %v1113, 2
  %vm1134 = vcmp.lt.s32.totalorder %v1113, 3
  %vm1135 = vcmp.lt.s32.totalorder %v1113, 4
  %v1136 = vsel %vm1132, %v1116, %v1119
  %v1137 = vsel %vm1135, %v1125, 2102212464
  %v1138 = vsel %vm1134, %v1122, %v1137
  %v1139 = vsel %vm1133, %v1136, %v1138
  %v1140 = vsel %vm1132, %v1119, %v1122
  %v1141 = vsel %vm1135, %v1128, 920167782
  %v1142 = vsel %vm1134, %v1125, %v1141
  %v1143 = vsel %vm1133, %v1140, %v1142
  %v1144 = vsel %vm1132, %v1122, %v1125
  %v1145 = vsel %vm1135, %v1131, 1326507024
  %v1146 = vsel %vm1134, %v1128, %v1145
  %v1147 = vsel %vm1133, %v1144, %v1146
  %v1148 = vshll.u32 %v1108, 8
  %v1149 = vmul.u32.u64.compose %v1148, %v1147
  %v1150 = vextract.low.u32 %v1149
  %v1151 = vextract.high.u32 %v1149
  %v1152 = vmul.u32.u64.compose %v1148, %v1143
  %v1153 = vextract.low.u32 %v1152
  %v1154 = vextract.high.u32 %v1152
  %v1155 = vmul.u32 %v1148, %v1139
  %v1156 = vadd.s32 %v1151, %v1153
  %vm1157 = vc.u32 %v1151, %v1153
  %v1158 = vadd.s32 %v1154, 1
  %v1159 = vsel %vm1157, %v1158, %v1154
  %v1160 = vadd.s32 %v1155, %v1159
  %v1161 = vadd.s32 %v1160, 536870912
  %v1162 = vshrl.u32 %v1161, 30
  %v1163 = vshll.u32 %v1162, 30
  %v1164 = vsub.s32 %v1160, %v1163
  %vm1165 = vcmp.lt.s32.totalorder %v1164, 0
  %v1166 = vsub.s32 0, %v1164
  %v1167 = vsel %vm1165, %v1166, %v1164
  %v1168 = vclz %v1167
  %v1169 = vsub.s32 %v1168, 2
  %vm1170 = vcmp.gt.s32.totalorder 0, %v1169
  %v1171 = vsel %vm1170, 0, %v1169
  %v1172 = vsub.s32 32, %v1171
  %v1173 = vshll.u32 %v1164, %v1171
  %v1174 = vshrl.u32 %v1156, %v1172
  %v1175 = vor.u32 %v1173, %v1174
  %v1176 = vsub.s32 4294967266, %v1171
  %v1177 = vadd.s32 %v1176, 127
  %v1178 = vshll.u32 %v1177, 23
  %v1179 = vor.u32 4788187, %v1178
  %v1180 = vand.u32 2147483647, %v1179
  %v1182 = vcvt.s32.f32 %v1175
  %v1183 = vmul.f32 %v1182, %v1180
  %v1184 = vxor.u32 %v1183, 2147483648
  %v1185 = vsel %vm1102, %v1184, %v1183
  %v1186 = vsub.s32 4, %v1162
  %v1187 = vsel %vm1102, %v1186, %v1162
  %v1188 = vsel %vm1101, %v157, %v1185
  %v1189 = vsel %vm1101, 0, %v1187
  %v1190 = vcosq.f32.pop %v1188
  %v1191 = vsinq.f32.pop %v1188
  %vm1192 = vweird.f32 %v157
  %v1193 = vadd.s32 %v1189, 3
  %v1194 = vand.u32 %v1193, 3
  %vm1195 = vcmp.lt.s32.totalorder %v1194, 2
  %vm1196 = vcmp.eq.s32.totalorder %v1194, 0
  %v1197 = vxor.u32 %v1191, 2147483648
  %v1198 = vsel %vm1196, %v1190, %v1197
  %vm1199 = vcmp.eq.s32.totalorder %v1194, 2
  %v1200 = vxor.u32 %v1190, 2147483648
  %v1201 = vsel %vm1199, %v1200, %v1191
  %v1202 = vsel %vm1195, %v1198, %v1201
  %v1203 = vsel %vm1192, nan, %v1202
  %v1204 = vand.u32 2147483647, %v158
  %vm1205 = vcmp.le.f32.partialorder %v1204, 0.7853982
  %vm1206 = vcmp.lt.s32.totalorder %v158, 0
  %v1207 = vand.u32 %v158, 2139095040
  %v1208 = vshrl.u32 %v1207, 23
  %v1209 = vsub.s32 %v1208, 127
  %v1210 = vand.u32 2147483647, %v158
  %v1211 = vand.u32 %v1210, 8388607
  %v1212 = vor.u32 %v1211, 8388608
  %v1213 = vsub.s32 0, %v1212
  %v1214 = vadd.s32 %v1209, 1
  %vm1215 = vcmp.gt.s32.totalorder %v1214, 0
  %v1216 = vsel %vm1215, %v1214, 0
  %v1217 = vshrl.u32 %v1216, 5
  %v1218 = vand.u32 %v1216, 31
  %v1219 = vsub.s32 32, %v1218
  %v1220 = vshrl.u32 683565275, %v1219
  %v1221 = vshll.u32 683565275, %v1218
  %v1222 = vshrl.u32 2475754826, %v1219
  %v1223 = vor.u32 %v1221, %v1222
  %v1224 = vshll.u32 2475754826, %v1218
  %v1225 = vshrl.u32 2131351028, %v1219
  %v1226 = vor.u32 %v1224, %v1225
  %v1227 = vshll.u32 2131351028, %v1218
  %v1228 = vshrl.u32 2102212464, %v1219
  %v1229 = vor.u32 %v1227, %v1228
  %v1230 = vshll.u32 2102212464, %v1218
  %v1231 = vshrl.u32 920167782, %v1219
  %v1232 = vor.u32 %v1230, %v1231
  %v1233 = vshll.u32 920167782, %v1218
  %v1234 = vshrl.u32 1326507024, %v1219
  %v1235 = vor.u32 %v1233, %v1234
  %vm1236 = vcmp.lt.s32.totalorder %v1217, 1
  %vm1237 = vcmp.lt.s32.totalorder %v1217, 2
  %vm1238 = vcmp.lt.s32.totalorder %v1217, 3
  %vm1239 = vcmp.lt.s32.totalorder %v1217, 4
  %v1240 = vsel %vm1236, %v1220, %v1223
  %v1241 = vsel %vm1239, %v1229, 2102212464
  %v1242 = vsel %vm1238, %v1226, %v1241
  %v1243 = vsel %vm1237, %v1240, %v1242
  %v1244 = vsel %vm1236, %v1223, %v1226
  %v1245 = vsel %vm1239, %v1232, 920167782
  %v1246 = vsel %vm1238, %v1229, %v1245
  %v1247 = vsel %vm1237, %v1244, %v1246
  %v1248 = vsel %vm1236, %v1226, %v1229
  %v1249 = vsel %vm1239, %v1235, 1326507024
  %v1250 = vsel %vm1238, %v1232, %v1249
  %v1251 = vsel %vm1237, %v1248, %v1250
  %v1252 = vshll.u32 %v1212, 8
  %v1253 = vmul.u32.u64.compose %v1252, %v1251
  %v1254 = vextract.low.u32 %v1253
  %v1255 = vextract.high.u32 %v1253
  %v1256 = vmul.u32.u64.compose %v1252, %v1247
  %v1257 = vextract.low.u32 %v1256
  %v1258 = vextract.high.u32 %v1256
  %v1259 = vmul.u32 %v1252, %v1243
  %v1260 = vadd.s32 %v1255, %v1257
  %vm1261 = vc.u32 %v1255, %v1257
  %v1262 = vadd.s32 %v1258, 1
  %v1263 = vsel %vm1261, %v1262, %v1258
  %v1264 = vadd.s32 %v1259, %v1263
  %v1265 = vadd.s32 %v1264, 536870912
  %v1266 = vshrl.u32 %v1265, 30
  %v1267 = vshll.u32 %v1266, 30
  %v1268 = vsub.s32 %v1264, %v1267
  %vm1269 = vcmp.lt.s32.totalorder %v1268, 0
  %v1270 = vsub.s32 0, %v1268
  %v1271 = vsel %vm1269, %v1270, %v1268
  %v1272 = vclz %v1271
  %v1273 = vsub.s32 %v1272, 2
  %vm1274 = vcmp.gt.s32.totalorder 0, %v1273
  %v1275 = vsel %vm1274, 0, %v1273
  %v1276 = vsub.s32 32, %v1275
  %v1277 = vshll.u32 %v1268, %v1275
  %v1278 = vshrl.u32 %v1260, %v1276
  %v1279 = vor.u32 %v1277, %v1278
  %v1280 = vsub.s32 4294967266, %v1275
  %v1281 = vadd.s32 %v1280, 127
  %v1282 = vshll.u32 %v1281, 23
  %v1283 = vor.u32 4788187, %v1282
  %v1284 = vand.u32 2147483647, %v1283
  %v1286 = vcvt.s32.f32 %v1279
  %v1287 = vmul.f32 %v1286, %v1284
  %v1288 = vxor.u32 %v1287, 2147483648
  %v1289 = vsel %vm1206, %v1288, %v1287
  %v1290 = vsub.s32 4, %v1266
  %v1291 = vsel %vm1206, %v1290, %v1266
  %v1292 = vsel %vm1205, %v158, %v1289
  %v1293 = vsel %vm1205, 0, %v1291
  %v1294 = vcosq.f32.pop %v1292
  %v1295 = vsinq.f32.pop %v1292
  %vm1296 = vweird.f32 %v158
  %v1297 = vadd.s32 %v1293, 3
  %v1298 = vand.u32 %v1297, 3
  %vm1299 = vcmp.lt.s32.totalorder %v1298, 2
  %vm1300 = vcmp.eq.s32.totalorder %v1298, 0
  %v1301 = vxor.u32 %v1295, 2147483648
  %v1302 = vsel %vm1300, %v1294, %v1301
  %vm1303 = vcmp.eq.s32.totalorder %v1298, 2
  %v1304 = vxor.u32 %v1294, 2147483648
  %v1305 = vsel %vm1303, %v1304, %v1295
  %v1306 = vsel %vm1299, %v1302, %v1305
  %v1307 = vsel %vm1296, nan, %v1306
  %v1308 = vand.u32 2147483647, %v159
  %vm1309 = vcmp.le.f32.partialorder %v1308, 0.7853982
  %vm1310 = vcmp.lt.s32.totalorder %v159, 0
  %v1311 = vand.u32 %v159, 2139095040
  %v1312 = vshrl.u32 %v1311, 23
  %v1313 = vsub.s32 %v1312, 127
  %v1314 = vand.u32 2147483647, %v159
  %v1315 = vand.u32 %v1314, 8388607
  %v1316 = vor.u32 %v1315, 8388608
  %v1317 = vsub.s32 0, %v1316
  %v1318 = vadd.s32 %v1313, 1
  %vm1319 = vcmp.gt.s32.totalorder %v1318, 0
  %v1320 = vsel %vm1319, %v1318, 0
  %v1321 = vshrl.u32 %v1320, 5
  %v1322 = vand.u32 %v1320, 31
  %v1323 = vsub.s32 32, %v1322
  %v1324 = vshrl.u32 683565275, %v1323
  %v1325 = vshll.u32 683565275, %v1322
  %v1326 = vshrl.u32 2475754826, %v1323
  %v1327 = vor.u32 %v1325, %v1326
  %v1328 = vshll.u32 2475754826, %v1322
  %v1329 = vshrl.u32 2131351028, %v1323
  %v1330 = vor.u32 %v1328, %v1329
  %v1331 = vshll.u32 2131351028, %v1322
  %v1332 = vshrl.u32 2102212464, %v1323
  %v1333 = vor.u32 %v1331, %v1332
  %v1334 = vshll.u32 2102212464, %v1322
  %v1335 = vshrl.u32 920167782, %v1323
  %v1336 = vor.u32 %v1334, %v1335
  %v1337 = vshll.u32 920167782, %v1322
  %v1338 = vshrl.u32 1326507024, %v1323
  %v1339 = vor.u32 %v1337, %v1338
  %vm1340 = vcmp.lt.s32.totalorder %v1321, 1
  %vm1341 = vcmp.lt.s32.totalorder %v1321, 2
  %vm1342 = vcmp.lt.s32.totalorder %v1321, 3
  %vm1343 = vcmp.lt.s32.totalorder %v1321, 4
  %v1344 = vsel %vm1340, %v1324, %v1327
  %v1345 = vsel %vm1343, %v1333, 2102212464
  %v1346 = vsel %vm1342, %v1330, %v1345
  %v1347 = vsel %vm1341, %v1344, %v1346
  %v1348 = vsel %vm1340, %v1327, %v1330
  %v1349 = vsel %vm1343, %v1336, 920167782
  %v1350 = vsel %vm1342, %v1333, %v1349
  %v1351 = vsel %vm1341, %v1348, %v1350
  %v1352 = vsel %vm1340, %v1330, %v1333
  %v1353 = vsel %vm1343, %v1339, 1326507024
  %v1354 = vsel %vm1342, %v1336, %v1353
  %v1355 = vsel %vm1341, %v1352, %v1354
  %v1356 = vshll.u32 %v1316, 8
  %v1357 = vmul.u32.u64.compose %v1356, %v1355
  %v1358 = vextract.low.u32 %v1357
  %v1359 = vextract.high.u32 %v1357
  %v1360 = vmul.u32.u64.compose %v1356, %v1351
  %v1361 = vextract.low.u32 %v1360
  %v1362 = vextract.high.u32 %v1360
  %v1363 = vmul.u32 %v1356, %v1347
  %v1364 = vadd.s32 %v1359, %v1361
  %vm1365 = vc.u32 %v1359, %v1361
  %v1366 = vadd.s32 %v1362, 1
  %v1367 = vsel %vm1365, %v1366, %v1362
  %v1368 = vadd.s32 %v1363, %v1367
  %v1369 = vadd.s32 %v1368, 536870912
  %v1370 = vshrl.u32 %v1369, 30
  %v1371 = vshll.u32 %v1370, 30
  %v1372 = vsub.s32 %v1368, %v1371
  %vm1373 = vcmp.lt.s32.totalorder %v1372, 0
  %v1374 = vsub.s32 0, %v1372
  %v1375 = vsel %vm1373, %v1374, %v1372
  %v1376 = vclz %v1375
  %v1377 = vsub.s32 %v1376, 2
  %vm1378 = vcmp.gt.s32.totalorder 0, %v1377
  %v1379 = vsel %vm1378, 0, %v1377
  %v1380 = vsub.s32 32, %v1379
  %v1381 = vshll.u32 %v1372, %v1379
  %v1382 = vshrl.u32 %v1364, %v1380
  %v1383 = vor.u32 %v1381, %v1382
  %v1384 = vsub.s32 4294967266, %v1379
  %v1385 = vadd.s32 %v1384, 127
  %v1386 = vshll.u32 %v1385, 23
  %v1387 = vor.u32 4788187, %v1386
  %v1388 = vand.u32 2147483647, %v1387
  %v1390 = vcvt.s32.f32 %v1383
  %v1391 = vmul.f32 %v1390, %v1388
  %v1392 = vxor.u32 %v1391, 2147483648
  %v1393 = vsel %vm1310, %v1392, %v1391
  %v1394 = vsub.s32 4, %v1370
  %v1395 = vsel %vm1310, %v1394, %v1370
  %v1396 = vsel %vm1309, %v159, %v1393
  %v1397 = vsel %vm1309, 0, %v1395
  %v1398 = vcosq.f32.pop %v1396
  %v1399 = vsinq.f32.pop %v1396
  %vm1400 = vweird.f32 %v159
  %v1401 = vadd.s32 %v1397, 3
  %v1402 = vand.u32 %v1401, 3
  %vm1403 = vcmp.lt.s32.totalorder %v1402, 2
  %vm1404 = vcmp.eq.s32.totalorder %v1402, 0
  %v1405 = vxor.u32 %v1399, 2147483648
  %v1406 = vsel %vm1404, %v1398, %v1405
  %vm1407 = vcmp.eq.s32.totalorder %v1402, 2
  %v1408 = vxor.u32 %v1398, 2147483648
  %v1409 = vsel %vm1407, %v1408, %v1399
  %v1410 = vsel %vm1403, %v1406, %v1409
  %v1411 = vsel %vm1400, nan, %v1410
  %v1412 = vand.u32 2147483647, %v160
  %vm1413 = vcmp.le.f32.partialorder %v1412, 0.7853982
  %vm1414 = vcmp.lt.s32.totalorder %v160, 0
  %v1415 = vand.u32 %v160, 2139095040
  %v1416 = vshrl.u32 %v1415, 23
  %v1417 = vsub.s32 %v1416, 127
  %v1418 = vand.u32 2147483647, %v160
  %v1419 = vand.u32 %v1418, 8388607
  %v1420 = vor.u32 %v1419, 8388608
  %v1421 = vsub.s32 0, %v1420
  %v1422 = vadd.s32 %v1417, 1
  %vm1423 = vcmp.gt.s32.totalorder %v1422, 0
  %v1424 = vsel %vm1423, %v1422, 0
  %v1425 = vshrl.u32 %v1424, 5
  %v1426 = vand.u32 %v1424, 31
  %v1427 = vsub.s32 32, %v1426
  %v1428 = vshrl.u32 683565275, %v1427
  %v1429 = vshll.u32 683565275, %v1426
  %v1430 = vshrl.u32 2475754826, %v1427
  %v1431 = vor.u32 %v1429, %v1430
  %v1432 = vshll.u32 2475754826, %v1426
  %v1433 = vshrl.u32 2131351028, %v1427
  %v1434 = vor.u32 %v1432, %v1433
  %v1435 = vshll.u32 2131351028, %v1426
  %v1436 = vshrl.u32 2102212464, %v1427
  %v1437 = vor.u32 %v1435, %v1436
  %v1438 = vshll.u32 2102212464, %v1426
  %v1439 = vshrl.u32 920167782, %v1427
  %v1440 = vor.u32 %v1438, %v1439
  %v1441 = vshll.u32 920167782, %v1426
  %v1442 = vshrl.u32 1326507024, %v1427
  %v1443 = vor.u32 %v1441, %v1442
  %vm1444 = vcmp.lt.s32.totalorder %v1425, 1
  %vm1445 = vcmp.lt.s32.totalorder %v1425, 2
  %vm1446 = vcmp.lt.s32.totalorder %v1425, 3
  %vm1447 = vcmp.lt.s32.totalorder %v1425, 4
  %v1448 = vsel %vm1444, %v1428, %v1431
  %v1449 = vsel %vm1447, %v1437, 2102212464
  %v1450 = vsel %vm1446, %v1434, %v1449
  %v1451 = vsel %vm1445, %v1448, %v1450
  %v1452 = vsel %vm1444, %v1431, %v1434
  %v1453 = vsel %vm1447, %v1440, 920167782
  %v1454 = vsel %vm1446, %v1437, %v1453
  %v1455 = vsel %vm1445, %v1452, %v1454
  %v1456 = vsel %vm1444, %v1434, %v1437
  %v1457 = vsel %vm1447, %v1443, 1326507024
  %v1458 = vsel %vm1446, %v1440, %v1457
  %v1459 = vsel %vm1445, %v1456, %v1458
  %v1460 = vshll.u32 %v1420, 8
  %v1461 = vmul.u32.u64.compose %v1460, %v1459
  %v1462 = vextract.low.u32 %v1461
  %v1463 = vextract.high.u32 %v1461
  %v1464 = vmul.u32.u64.compose %v1460, %v1455
  %v1465 = vextract.low.u32 %v1464
  %v1466 = vextract.high.u32 %v1464
  %v1467 = vmul.u32 %v1460, %v1451
  %v1468 = vadd.s32 %v1463, %v1465
  %vm1469 = vc.u32 %v1463, %v1465
  %v1470 = vadd.s32 %v1466, 1
  %v1471 = vsel %vm1469, %v1470, %v1466
  %v1472 = vadd.s32 %v1467, %v1471
  %v1473 = vadd.s32 %v1472, 536870912
  %v1474 = vshrl.u32 %v1473, 30
  %v1475 = vshll.u32 %v1474, 30
  %v1476 = vsub.s32 %v1472, %v1475
  %vm1477 = vcmp.lt.s32.totalorder %v1476, 0
  %v1478 = vsub.s32 0, %v1476
  %v1479 = vsel %vm1477, %v1478, %v1476
  %v1480 = vclz %v1479
  %v1481 = vsub.s32 %v1480, 2
  %vm1482 = vcmp.gt.s32.totalorder 0, %v1481
  %v1483 = vsel %vm1482, 0, %v1481
  %v1484 = vsub.s32 32, %v1483
  %v1485 = vshll.u32 %v1476, %v1483
  %v1486 = vshrl.u32 %v1468, %v1484
  %v1487 = vor.u32 %v1485, %v1486
  %v1488 = vsub.s32 4294967266, %v1483
  %v1489 = vadd.s32 %v1488, 127
  %v1490 = vshll.u32 %v1489, 23
  %v1491 = vor.u32 4788187, %v1490
  %v1492 = vand.u32 2147483647, %v1491
  %v1494 = vcvt.s32.f32 %v1487
  %v1495 = vmul.f32 %v1494, %v1492
  %v1496 = vxor.u32 %v1495, 2147483648
  %v1497 = vsel %vm1414, %v1496, %v1495
  %v1498 = vsub.s32 4, %v1474
  %v1499 = vsel %vm1414, %v1498, %v1474
  %v1500 = vsel %vm1413, %v160, %v1497
  %v1501 = vsel %vm1413, 0, %v1499
  %v1502 = vcosq.f32.pop %v1500
  %v1503 = vsinq.f32.pop %v1500
  %vm1504 = vweird.f32 %v160
  %v1505 = vadd.s32 %v1501, 3
  %v1506 = vand.u32 %v1505, 3
  %vm1507 = vcmp.lt.s32.totalorder %v1506, 2
  %vm1508 = vcmp.eq.s32.totalorder %v1506, 0
  %v1509 = vxor.u32 %v1503, 2147483648
  %v1510 = vsel %vm1508, %v1502, %v1509
  %vm1511 = vcmp.eq.s32.totalorder %v1506, 2
  %v1512 = vxor.u32 %v1502, 2147483648
  %v1513 = vsel %vm1511, %v1512, %v1503
  %v1514 = vsel %vm1507, %v1510, %v1513
  %v1515 = vsel %vm1504, nan, %v1514
  %v1516 = vand.u32 2147483647, %v161
  %vm1517 = vcmp.le.f32.partialorder %v1516, 0.7853982
  %vm1518 = vcmp.lt.s32.totalorder %v161, 0
  %v1519 = vand.u32 %v161, 2139095040
  %v1520 = vshrl.u32 %v1519, 23
  %v1521 = vsub.s32 %v1520, 127
  %v1522 = vand.u32 2147483647, %v161
  %v1523 = vand.u32 %v1522, 8388607
  %v1524 = vor.u32 %v1523, 8388608
  %v1525 = vsub.s32 0, %v1524
  %v1526 = vadd.s32 %v1521, 1
  %vm1527 = vcmp.gt.s32.totalorder %v1526, 0
  %v1528 = vsel %vm1527, %v1526, 0
  %v1529 = vshrl.u32 %v1528, 5
  %v1530 = vand.u32 %v1528, 31
  %v1531 = vsub.s32 32, %v1530
  %v1532 = vshrl.u32 683565275, %v1531
  %v1533 = vshll.u32 683565275, %v1530
  %v1534 = vshrl.u32 2475754826, %v1531
  %v1535 = vor.u32 %v1533, %v1534
  %v1536 = vshll.u32 2475754826, %v1530
  %v1537 = vshrl.u32 2131351028, %v1531
  %v1538 = vor.u32 %v1536, %v1537
  %v1539 = vshll.u32 2131351028, %v1530
  %v1540 = vshrl.u32 2102212464, %v1531
  %v1541 = vor.u32 %v1539, %v1540
  %v1542 = vshll.u32 2102212464, %v1530
  %v1543 = vshrl.u32 920167782, %v1531
  %v1544 = vor.u32 %v1542, %v1543
  %v1545 = vshll.u32 920167782, %v1530
  %v1546 = vshrl.u32 1326507024, %v1531
  %v1547 = vor.u32 %v1545, %v1546
  %vm1548 = vcmp.lt.s32.totalorder %v1529, 1
  %vm1549 = vcmp.lt.s32.totalorder %v1529, 2
  %vm1550 = vcmp.lt.s32.totalorder %v1529, 3
  %vm1551 = vcmp.lt.s32.totalorder %v1529, 4
  %v1552 = vsel %vm1548, %v1532, %v1535
  %v1553 = vsel %vm1551, %v1541, 2102212464
  %v1554 = vsel %vm1550, %v1538, %v1553
  %v1555 = vsel %vm1549, %v1552, %v1554
  %v1556 = vsel %vm1548, %v1535, %v1538
  %v1557 = vsel %vm1551, %v1544, 920167782
  %v1558 = vsel %vm1550, %v1541, %v1557
  %v1559 = vsel %vm1549, %v1556, %v1558
  %v1560 = vsel %vm1548, %v1538, %v1541
  %v1561 = vsel %vm1551, %v1547, 1326507024
  %v1562 = vsel %vm1550, %v1544, %v1561
  %v1563 = vsel %vm1549, %v1560, %v1562
  %v1564 = vshll.u32 %v1524, 8
  %v1565 = vmul.u32.u64.compose %v1564, %v1563
  %v1566 = vextract.low.u32 %v1565
  %v1567 = vextract.high.u32 %v1565
  %v1568 = vmul.u32.u64.compose %v1564, %v1559
  %v1569 = vextract.low.u32 %v1568
  %v1570 = vextract.high.u32 %v1568
  %v1571 = vmul.u32 %v1564, %v1555
  %v1572 = vadd.s32 %v1567, %v1569
  %vm1573 = vc.u32 %v1567, %v1569
  %v1574 = vadd.s32 %v1570, 1
  %v1575 = vsel %vm1573, %v1574, %v1570
  %v1576 = vadd.s32 %v1571, %v1575
  %v1577 = vadd.s32 %v1576, 536870912
  %v1578 = vshrl.u32 %v1577, 30
  %v1579 = vshll.u32 %v1578, 30
  %v1580 = vsub.s32 %v1576, %v1579
  %vm1581 = vcmp.lt.s32.totalorder %v1580, 0
  %v1582 = vsub.s32 0, %v1580
  %v1583 = vsel %vm1581, %v1582, %v1580
  %v1584 = vclz %v1583
  %v1585 = vsub.s32 %v1584, 2
  %vm1586 = vcmp.gt.s32.totalorder 0, %v1585
  %v1587 = vsel %vm1586, 0, %v1585
  %v1588 = vsub.s32 32, %v1587
  %v1589 = vshll.u32 %v1580, %v1587
  %v1590 = vshrl.u32 %v1572, %v1588
  %v1591 = vor.u32 %v1589, %v1590
  %v1592 = vsub.s32 4294967266, %v1587
  %v1593 = vadd.s32 %v1592, 127
  %v1594 = vshll.u32 %v1593, 23
  %v1595 = vor.u32 4788187, %v1594
  %v1596 = vand.u32 2147483647, %v1595
  %v1598 = vcvt.s32.f32 %v1591
  %v1599 = vmul.f32 %v1598, %v1596
  %v1600 = vxor.u32 %v1599, 2147483648
  %v1601 = vsel %vm1518, %v1600, %v1599
  %v1602 = vsub.s32 4, %v1578
  %v1603 = vsel %vm1518, %v1602, %v1578
  %v1604 = vsel %vm1517, %v161, %v1601
  %v1605 = vsel %vm1517, 0, %v1603
  %v1606 = vcosq.f32.pop %v1604
  %v1607 = vsinq.f32.pop %v1604
  %vm1608 = vweird.f32 %v161
  %v1609 = vadd.s32 %v1605, 3
  %v1610 = vand.u32 %v1609, 3
  %vm1611 = vcmp.lt.s32.totalorder %v1610, 2
  %vm1612 = vcmp.eq.s32.totalorder %v1610, 0
  %v1613 = vxor.u32 %v1607, 2147483648
  %v1614 = vsel %vm1612, %v1606, %v1613
  %vm1615 = vcmp.eq.s32.totalorder %v1610, 2
  %v1616 = vxor.u32 %v1606, 2147483648
  %v1617 = vsel %vm1615, %v1616, %v1607
  %v1618 = vsel %vm1611, %v1614, %v1617
  %v1619 = vsel %vm1608, nan, %v1618
  %v1620 = vand.u32 2147483647, %v162
  %vm1621 = vcmp.le.f32.partialorder %v1620, 0.7853982
  %vm1622 = vcmp.lt.s32.totalorder %v162, 0
  %v1623 = vand.u32 %v162, 2139095040
  %v1624 = vshrl.u32 %v1623, 23
  %v1625 = vsub.s32 %v1624, 127
  %v1626 = vand.u32 2147483647, %v162
  %v1627 = vand.u32 %v1626, 8388607
  %v1628 = vor.u32 %v1627, 8388608
  %v1629 = vsub.s32 0, %v1628
  %v1630 = vadd.s32 %v1625, 1
  %vm1631 = vcmp.gt.s32.totalorder %v1630, 0
  %v1632 = vsel %vm1631, %v1630, 0
  %v1633 = vshrl.u32 %v1632, 5
  %v1634 = vand.u32 %v1632, 31
  %v1635 = vsub.s32 32, %v1634
  %v1636 = vshrl.u32 683565275, %v1635
  %v1637 = vshll.u32 683565275, %v1634
  %v1638 = vshrl.u32 2475754826, %v1635
  %v1639 = vor.u32 %v1637, %v1638
  %v1640 = vshll.u32 2475754826, %v1634
  %v1641 = vshrl.u32 2131351028, %v1635
  %v1642 = vor.u32 %v1640, %v1641
  %v1643 = vshll.u32 2131351028, %v1634
  %v1644 = vshrl.u32 2102212464, %v1635
  %v1645 = vor.u32 %v1643, %v1644
  %v1646 = vshll.u32 2102212464, %v1634
  %v1647 = vshrl.u32 920167782, %v1635
  %v1648 = vor.u32 %v1646, %v1647
  %v1649 = vshll.u32 920167782, %v1634
  %v1650 = vshrl.u32 1326507024, %v1635
  %v1651 = vor.u32 %v1649, %v1650
  %vm1652 = vcmp.lt.s32.totalorder %v1633, 1
  %vm1653 = vcmp.lt.s32.totalorder %v1633, 2
  %vm1654 = vcmp.lt.s32.totalorder %v1633, 3
  %vm1655 = vcmp.lt.s32.totalorder %v1633, 4
  %v1656 = vsel %vm1652, %v1636, %v1639
  %v1657 = vsel %vm1655, %v1645, 2102212464
  %v1658 = vsel %vm1654, %v1642, %v1657
  %v1659 = vsel %vm1653, %v1656, %v1658
  %v1660 = vsel %vm1652, %v1639, %v1642
  %v1661 = vsel %vm1655, %v1648, 920167782
  %v1662 = vsel %vm1654, %v1645, %v1661
  %v1663 = vsel %vm1653, %v1660, %v1662
  %v1664 = vsel %vm1652, %v1642, %v1645
  %v1665 = vsel %vm1655, %v1651, 1326507024
  %v1666 = vsel %vm1654, %v1648, %v1665
  %v1667 = vsel %vm1653, %v1664, %v1666
  %v1668 = vshll.u32 %v1628, 8
  %v1669 = vmul.u32.u64.compose %v1668, %v1667
  %v1670 = vextract.low.u32 %v1669
  %v1671 = vextract.high.u32 %v1669
  %v1672 = vmul.u32.u64.compose %v1668, %v1663
  %v1673 = vextract.low.u32 %v1672
  %v1674 = vextract.high.u32 %v1672
  %v1675 = vmul.u32 %v1668, %v1659
  %v1676 = vadd.s32 %v1671, %v1673
  %vm1677 = vc.u32 %v1671, %v1673
  %v1678 = vadd.s32 %v1674, 1
  %v1679 = vsel %vm1677, %v1678, %v1674
  %v1680 = vadd.s32 %v1675, %v1679
  %v1681 = vadd.s32 %v1680, 536870912
  %v1682 = vshrl.u32 %v1681, 30
  %v1683 = vshll.u32 %v1682, 30
  %v1684 = vsub.s32 %v1680, %v1683
  %vm1685 = vcmp.lt.s32.totalorder %v1684, 0
  %v1686 = vsub.s32 0, %v1684
  %v1687 = vsel %vm1685, %v1686, %v1684
  %v1688 = vclz %v1687
  %v1689 = vsub.s32 %v1688, 2
  %vm1690 = vcmp.gt.s32.totalorder 0, %v1689
  %v1691 = vsel %vm1690, 0, %v1689
  %v1692 = vsub.s32 32, %v1691
  %v1693 = vshll.u32 %v1684, %v1691
  %v1694 = vshrl.u32 %v1676, %v1692
  %v1695 = vor.u32 %v1693, %v1694
  %v1696 = vsub.s32 4294967266, %v1691
  %v1697 = vadd.s32 %v1696, 127
  %v1698 = vshll.u32 %v1697, 23
  %v1699 = vor.u32 4788187, %v1698
  %v1700 = vand.u32 2147483647, %v1699
  %v1702 = vcvt.s32.f32 %v1695
  %v1703 = vmul.f32 %v1702, %v1700
  %v1704 = vxor.u32 %v1703, 2147483648
  %v1705 = vsel %vm1622, %v1704, %v1703
  %v1706 = vsub.s32 4, %v1682
  %v1707 = vsel %vm1622, %v1706, %v1682
  %v1708 = vsel %vm1621, %v162, %v1705
  %v1709 = vsel %vm1621, 0, %v1707
  %v1710 = vcosq.f32.pop %v1708
  %v1711 = vsinq.f32.pop %v1708
  %vm1712 = vweird.f32 %v162
  %v1713 = vadd.s32 %v1709, 3
  %v1714 = vand.u32 %v1713, 3
  %vm1715 = vcmp.lt.s32.totalorder %v1714, 2
  %vm1716 = vcmp.eq.s32.totalorder %v1714, 0
  %v1717 = vxor.u32 %v1711, 2147483648
  %v1718 = vsel %vm1716, %v1710, %v1717
  %vm1719 = vcmp.eq.s32.totalorder %v1714, 2
  %v1720 = vxor.u32 %v1710, 2147483648
  %v1721 = vsel %vm1719, %v1720, %v1711
  %v1722 = vsel %vm1715, %v1718, %v1721
  %v1723 = vsel %vm1712, nan, %v1722
  %v1724 = vand.u32 2147483647, %v163
  %vm1725 = vcmp.le.f32.partialorder %v1724, 0.7853982
  %vm1726 = vcmp.lt.s32.totalorder %v163, 0
  %v1727 = vand.u32 %v163, 2139095040
  %v1728 = vshrl.u32 %v1727, 23
  %v1729 = vsub.s32 %v1728, 127
  %v1730 = vand.u32 2147483647, %v163
  %v1731 = vand.u32 %v1730, 8388607
  %v1732 = vor.u32 %v1731, 8388608
  %v1733 = vsub.s32 0, %v1732
  %v1734 = vadd.s32 %v1729, 1
  %vm1735 = vcmp.gt.s32.totalorder %v1734, 0
  %v1736 = vsel %vm1735, %v1734, 0
  %v1737 = vshrl.u32 %v1736, 5
  %v1738 = vand.u32 %v1736, 31
  %v1739 = vsub.s32 32, %v1738
  %v1740 = vshrl.u32 683565275, %v1739
  %v1741 = vshll.u32 683565275, %v1738
  %v1742 = vshrl.u32 2475754826, %v1739
  %v1743 = vor.u32 %v1741, %v1742
  %v1744 = vshll.u32 2475754826, %v1738
  %v1745 = vshrl.u32 2131351028, %v1739
  %v1746 = vor.u32 %v1744, %v1745
  %v1747 = vshll.u32 2131351028, %v1738
  %v1748 = vshrl.u32 2102212464, %v1739
  %v1749 = vor.u32 %v1747, %v1748
  %v1750 = vshll.u32 2102212464, %v1738
  %v1751 = vshrl.u32 920167782, %v1739
  %v1752 = vor.u32 %v1750, %v1751
  %v1753 = vshll.u32 920167782, %v1738
  %v1754 = vshrl.u32 1326507024, %v1739
  %v1755 = vor.u32 %v1753, %v1754
  %vm1756 = vcmp.lt.s32.totalorder %v1737, 1
  %vm1757 = vcmp.lt.s32.totalorder %v1737, 2
  %vm1758 = vcmp.lt.s32.totalorder %v1737, 3
  %vm1759 = vcmp.lt.s32.totalorder %v1737, 4
  %v1760 = vsel %vm1756, %v1740, %v1743
  %v1761 = vsel %vm1759, %v1749, 2102212464
  %v1762 = vsel %vm1758, %v1746, %v1761
  %v1763 = vsel %vm1757, %v1760, %v1762
  %v1764 = vsel %vm1756, %v1743, %v1746
  %v1765 = vsel %vm1759, %v1752, 920167782
  %v1766 = vsel %vm1758, %v1749, %v1765
  %v1767 = vsel %vm1757, %v1764, %v1766
  %v1768 = vsel %vm1756, %v1746, %v1749
  %v1769 = vsel %vm1759, %v1755, 1326507024
  %v1770 = vsel %vm1758, %v1752, %v1769
  %v1771 = vsel %vm1757, %v1768, %v1770
  %v1772 = vshll.u32 %v1732, 8
  %v1773 = vmul.u32.u64.compose %v1772, %v1771
  %v1774 = vextract.low.u32 %v1773
  %v1775 = vextract.high.u32 %v1773
  %v1776 = vmul.u32.u64.compose %v1772, %v1767
  %v1777 = vextract.low.u32 %v1776
  %v1778 = vextract.high.u32 %v1776
  %v1779 = vmul.u32 %v1772, %v1763
  %v1780 = vadd.s32 %v1775, %v1777
  %vm1781 = vc.u32 %v1775, %v1777
  %v1782 = vadd.s32 %v1778, 1
  %v1783 = vsel %vm1781, %v1782, %v1778
  %v1784 = vadd.s32 %v1779, %v1783
  %v1785 = vadd.s32 %v1784, 536870912
  %v1786 = vshrl.u32 %v1785, 30
  %v1787 = vshll.u32 %v1786, 30
  %v1788 = vsub.s32 %v1784, %v1787
  %vm1789 = vcmp.lt.s32.totalorder %v1788, 0
  %v1790 = vsub.s32 0, %v1788
  %v1791 = vsel %vm1789, %v1790, %v1788
  %v1792 = vclz %v1791
  %v1793 = vsub.s32 %v1792, 2
  %vm1794 = vcmp.gt.s32.totalorder 0, %v1793
  %v1795 = vsel %vm1794, 0, %v1793
  %v1796 = vsub.s32 32, %v1795
  %v1797 = vshll.u32 %v1788, %v1795
  %v1798 = vshrl.u32 %v1780, %v1796
  %v1799 = vor.u32 %v1797, %v1798
  %v1800 = vsub.s32 4294967266, %v1795
  %v1801 = vadd.s32 %v1800, 127
  %v1802 = vshll.u32 %v1801, 23
  %v1803 = vor.u32 4788187, %v1802
  %v1804 = vand.u32 2147483647, %v1803
  %v1806 = vcvt.s32.f32 %v1799
  %v1807 = vmul.f32 %v1806, %v1804
  %v1808 = vxor.u32 %v1807, 2147483648
  %v1809 = vsel %vm1726, %v1808, %v1807
  %v1810 = vsub.s32 4, %v1786
  %v1811 = vsel %vm1726, %v1810, %v1786
  %v1812 = vsel %vm1725, %v163, %v1809
  %v1813 = vsel %vm1725, 0, %v1811
  %v1814 = vcosq.f32.pop %v1812
  %v1815 = vsinq.f32.pop %v1812
  %vm1816 = vweird.f32 %v163
  %v1817 = vadd.s32 %v1813, 3
  %v1818 = vand.u32 %v1817, 3
  %vm1819 = vcmp.lt.s32.totalorder %v1818, 2
  %vm1820 = vcmp.eq.s32.totalorder %v1818, 0
  %v1821 = vxor.u32 %v1815, 2147483648
  %v1822 = vsel %vm1820, %v1814, %v1821
  %vm1823 = vcmp.eq.s32.totalorder %v1818, 2
  %v1824 = vxor.u32 %v1814, 2147483648
  %v1825 = vsel %vm1823, %v1824, %v1815
  %v1826 = vsel %vm1819, %v1822, %v1825
  %v1827 = vsel %vm1816, nan, %v1826
  %1828 = vst [vmem:[%s1] sm:$0xff] %v267
  %1829 = vst [vmem:[%s1 + $0x8] sm:$0xff] %v371
  %1830 = vst [vmem:[%s1 + $0x10] sm:$0xff] %v475
  %1831 = vst [vmem:[%s1 + $0x18] sm:$0xff] %v579
  %1832 = vst [vmem:[%s1 + $0x20] sm:$0xff] %v683
  %1833 = vst [vmem:[%s1 + $0x28] sm:$0xff] %v787
  %1834 = vst [vmem:[%s1 + $0x30] sm:$0xff] %v891
  %1835 = vst [vmem:[%s1 + $0x38] sm:$0xff] %v995
  %1836 = vst [vmem:[%s1 + $0x40] sm:$0xff] %v1099
  %1837 = vst [vmem:[%s1 + $0x48] sm:$0xff] %v1203
  %1838 = vst [vmem:[%s1 + $0x50] sm:$0xff] %v1307
  %1839 = vst [vmem:[%s1 + $0x58] sm:$0xff] %v1411
  %1840 = vst [vmem:[%s1 + $0x60] sm:$0xff] %v1515
  %1841 = vst [vmem:[%s1 + $0x68] sm:$0xff] %v1619
  %1842 = vst [vmem:[%s1 + $0x70] sm:$0xff] %v1723
  %1843 = vst [vmem:[%s1 + $0x78] sm:$0xff] %v1827
  %v1844 = vand.u32 2147483647, %v148
  %vm1845 = vcmp.le.f32.partialorder %v1844, 0.7853982
  %vm1846 = vcmp.lt.s32.totalorder %v148, 0
  %v1847 = vand.u32 %v148, 2139095040
  %v1848 = vshrl.u32 %v1847, 23
  %v1849 = vsub.s32 %v1848, 127
  %v1850 = vand.u32 2147483647, %v148
  %v1851 = vand.u32 %v1850, 8388607
  %v1852 = vor.u32 %v1851, 8388608
  %v1853 = vsub.s32 0, %v1852
  %v1854 = vadd.s32 %v1849, 1
  %vm1855 = vcmp.gt.s32.totalorder %v1854, 0
  %v1856 = vsel %vm1855, %v1854, 0
  %v1857 = vshrl.u32 %v1856, 5
  %v1858 = vand.u32 %v1856, 31
  %v1859 = vsub.s32 32, %v1858
  %v1860 = vshrl.u32 683565275, %v1859
  %v1861 = vshll.u32 683565275, %v1858
  %v1862 = vshrl.u32 2475754826, %v1859
  %v1863 = vor.u32 %v1861, %v1862
  %v1864 = vshll.u32 2475754826, %v1858
  %v1865 = vshrl.u32 2131351028, %v1859
  %v1866 = vor.u32 %v1864, %v1865
  %v1867 = vshll.u32 2131351028, %v1858
  %v1868 = vshrl.u32 2102212464, %v1859
  %v1869 = vor.u32 %v1867, %v1868
  %v1870 = vshll.u32 2102212464, %v1858
  %v1871 = vshrl.u32 920167782, %v1859
  %v1872 = vor.u32 %v1870, %v1871
  %v1873 = vshll.u32 920167782, %v1858
  %v1874 = vshrl.u32 1326507024, %v1859
  %v1875 = vor.u32 %v1873, %v1874
  %vm1876 = vcmp.lt.s32.totalorder %v1857, 1
  %vm1877 = vcmp.lt.s32.totalorder %v1857, 2
  %vm1878 = vcmp.lt.s32.totalorder %v1857, 3
  %vm1879 = vcmp.lt.s32.totalorder %v1857, 4
  %v1880 = vsel %vm1876, %v1860, %v1863
  %v1881 = vsel %vm1879, %v1869, 2102212464
  %v1882 = vsel %vm1878, %v1866, %v1881
  %v1883 = vsel %vm1877, %v1880, %v1882
  %v1884 = vsel %vm1876, %v1863, %v1866
  %v1885 = vsel %vm1879, %v1872, 920167782
  %v1886 = vsel %vm1878, %v1869, %v1885
  %v1887 = vsel %vm1877, %v1884, %v1886
  %v1888 = vsel %vm1876, %v1866, %v1869
  %v1889 = vsel %vm1879, %v1875, 1326507024
  %v1890 = vsel %vm1878, %v1872, %v1889
  %v1891 = vsel %vm1877, %v1888, %v1890
  %v1892 = vshll.u32 %v1852, 8
  %v1893 = vmul.u32.u64.compose %v1892, %v1891
  %v1894 = vextract.low.u32 %v1893
  %v1895 = vextract.high.u32 %v1893
  %v1896 = vmul.u32.u64.compose %v1892, %v1887
  %v1897 = vextract.low.u32 %v1896
  %v1898 = vextract.high.u32 %v1896
  %v1899 = vmul.u32 %v1892, %v1883
  %v1900 = vadd.s32 %v1895, %v1897
  %vm1901 = vc.u32 %v1895, %v1897
  %v1902 = vadd.s32 %v1898, 1
  %v1903 = vsel %vm1901, %v1902, %v1898
  %v1904 = vadd.s32 %v1899, %v1903
  %v1905 = vadd.s32 %v1904, 536870912
  %v1906 = vshrl.u32 %v1905, 30
  %v1907 = vshll.u32 %v1906, 30
  %v1908 = vsub.s32 %v1904, %v1907
  %vm1909 = vcmp.lt.s32.totalorder %v1908, 0
  %v1910 = vsub.s32 0, %v1908
  %v1911 = vsel %vm1909, %v1910, %v1908
  %v1912 = vclz %v1911
  %v1913 = vsub.s32 %v1912, 2
  %vm1914 = vcmp.gt.s32.totalorder 0, %v1913
  %v1915 = vsel %vm1914, 0, %v1913
  %v1916 = vsub.s32 32, %v1915
  %v1917 = vshll.u32 %v1908, %v1915
  %v1918 = vshrl.u32 %v1900, %v1916
  %v1919 = vor.u32 %v1917, %v1918
  %v1920 = vsub.s32 4294967266, %v1915
  %v1921 = vadd.s32 %v1920, 127
  %v1922 = vshll.u32 %v1921, 23
  %v1923 = vor.u32 4788187, %v1922
  %v1924 = vand.u32 2147483647, %v1923
  %v1926 = vcvt.s32.f32 %v1919
  %v1927 = vmul.f32 %v1926, %v1924
  %v1928 = vxor.u32 %v1927, 2147483648
  %v1929 = vsel %vm1846, %v1928, %v1927
  %v1930 = vsub.s32 4, %v1906
  %v1931 = vsel %vm1846, %v1930, %v1906
  %v1932 = vsel %vm1845, %v148, %v1929
  %v1933 = vsel %vm1845, 0, %v1931
  %v1934 = vcosq.f32.pop %v1932
  %v1935 = vsinq.f32.pop %v1932
  %vm1936 = vweird.f32 %v148
  %v1937 = vand.u32 %v1933, 3
  %vm1938 = vcmp.lt.s32.totalorder %v1937, 2
  %vm1939 = vcmp.eq.s32.totalorder %v1937, 0
  %v1940 = vxor.u32 %v1935, 2147483648
  %v1941 = vsel %vm1939, %v1934, %v1940
  %vm1942 = vcmp.eq.s32.totalorder %v1937, 2
  %v1943 = vxor.u32 %v1934, 2147483648
  %v1944 = vsel %vm1942, %v1943, %v1935
  %v1945 = vsel %vm1938, %v1941, %v1944
  %v1946 = vsel %vm1936, nan, %v1945
  %v1947 = vand.u32 2147483647, %v149
  %vm1948 = vcmp.le.f32.partialorder %v1947, 0.7853982
  %vm1949 = vcmp.lt.s32.totalorder %v149, 0
  %v1950 = vand.u32 %v149, 2139095040
  %v1951 = vshrl.u32 %v1950, 23
  %v1952 = vsub.s32 %v1951, 127
  %v1953 = vand.u32 2147483647, %v149
  %v1954 = vand.u32 %v1953, 8388607
  %v1955 = vor.u32 %v1954, 8388608
  %v1956 = vsub.s32 0, %v1955
  %v1957 = vadd.s32 %v1952, 1
  %vm1958 = vcmp.gt.s32.totalorder %v1957, 0
  %v1959 = vsel %vm1958, %v1957, 0
  %v1960 = vshrl.u32 %v1959, 5
  %v1961 = vand.u32 %v1959, 31
  %v1962 = vsub.s32 32, %v1961
  %v1963 = vshrl.u32 683565275, %v1962
  %v1964 = vshll.u32 683565275, %v1961
  %v1965 = vshrl.u32 2475754826, %v1962
  %v1966 = vor.u32 %v1964, %v1965
  %v1967 = vshll.u32 2475754826, %v1961
  %v1968 = vshrl.u32 2131351028, %v1962
  %v1969 = vor.u32 %v1967, %v1968
  %v1970 = vshll.u32 2131351028, %v1961
  %v1971 = vshrl.u32 2102212464, %v1962
  %v1972 = vor.u32 %v1970, %v1971
  %v1973 = vshll.u32 2102212464, %v1961
  %v1974 = vshrl.u32 920167782, %v1962
  %v1975 = vor.u32 %v1973, %v1974
  %v1976 = vshll.u32 920167782, %v1961
  %v1977 = vshrl.u32 1326507024, %v1962
  %v1978 = vor.u32 %v1976, %v1977
  %vm1979 = vcmp.lt.s32.totalorder %v1960, 1
  %vm1980 = vcmp.lt.s32.totalorder %v1960, 2
  %vm1981 = vcmp.lt.s32.totalorder %v1960, 3
  %vm1982 = vcmp.lt.s32.totalorder %v1960, 4
  %v1983 = vsel %vm1979, %v1963, %v1966
  %v1984 = vsel %vm1982, %v1972, 2102212464
  %v1985 = vsel %vm1981, %v1969, %v1984
  %v1986 = vsel %vm1980, %v1983, %v1985
  %v1987 = vsel %vm1979, %v1966, %v1969
  %v1988 = vsel %vm1982, %v1975, 920167782
  %v1989 = vsel %vm1981, %v1972, %v1988
  %v1990 = vsel %vm1980, %v1987, %v1989
  %v1991 = vsel %vm1979, %v1969, %v1972
  %v1992 = vsel %vm1982, %v1978, 1326507024
  %v1993 = vsel %vm1981, %v1975, %v1992
  %v1994 = vsel %vm1980, %v1991, %v1993
  %v1995 = vshll.u32 %v1955, 8
  %v1996 = vmul.u32.u64.compose %v1995, %v1994
  %v1997 = vextract.low.u32 %v1996
  %v1998 = vextract.high.u32 %v1996
  %v1999 = vmul.u32.u64.compose %v1995, %v1990
  %v2000 = vextract.low.u32 %v1999
  %v2001 = vextract.high.u32 %v1999
  %v2002 = vmul.u32 %v1995, %v1986
  %v2003 = vadd.s32 %v1998, %v2000
  %vm2004 = vc.u32 %v1998, %v2000
  %v2005 = vadd.s32 %v2001, 1
  %v2006 = vsel %vm2004, %v2005, %v2001
  %v2007 = vadd.s32 %v2002, %v2006
  %v2008 = vadd.s32 %v2007, 536870912
  %v2009 = vshrl.u32 %v2008, 30
  %v2010 = vshll.u32 %v2009, 30
  %v2011 = vsub.s32 %v2007, %v2010
  %vm2012 = vcmp.lt.s32.totalorder %v2011, 0
  %v2013 = vsub.s32 0, %v2011
  %v2014 = vsel %vm2012, %v2013, %v2011
  %v2015 = vclz %v2014
  %v2016 = vsub.s32 %v2015, 2
  %vm2017 = vcmp.gt.s32.totalorder 0, %v2016
  %v2018 = vsel %vm2017, 0, %v2016
  %v2019 = vsub.s32 32, %v2018
  %v2020 = vshll.u32 %v2011, %v2018
  %v2021 = vshrl.u32 %v2003, %v2019
  %v2022 = vor.u32 %v2020, %v2021
  %v2023 = vsub.s32 4294967266, %v2018
  %v2024 = vadd.s32 %v2023, 127
  %v2025 = vshll.u32 %v2024, 23
  %v2026 = vor.u32 4788187, %v2025
  %v2027 = vand.u32 2147483647, %v2026
  %v2029 = vcvt.s32.f32 %v2022
  %v2030 = vmul.f32 %v2029, %v2027
  %v2031 = vxor.u32 %v2030, 2147483648
  %v2032 = vsel %vm1949, %v2031, %v2030
  %v2033 = vsub.s32 4, %v2009
  %v2034 = vsel %vm1949, %v2033, %v2009
  %v2035 = vsel %vm1948, %v149, %v2032
  %v2036 = vsel %vm1948, 0, %v2034
  %v2037 = vcosq.f32.pop %v2035
  %v2038 = vsinq.f32.pop %v2035
  %vm2039 = vweird.f32 %v149
  %v2040 = vand.u32 %v2036, 3
  %vm2041 = vcmp.lt.s32.totalorder %v2040, 2
  %vm2042 = vcmp.eq.s32.totalorder %v2040, 0
  %v2043 = vxor.u32 %v2038, 2147483648
  %v2044 = vsel %vm2042, %v2037, %v2043
  %vm2045 = vcmp.eq.s32.totalorder %v2040, 2
  %v2046 = vxor.u32 %v2037, 2147483648
  %v2047 = vsel %vm2045, %v2046, %v2038
  %v2048 = vsel %vm2041, %v2044, %v2047
  %v2049 = vsel %vm2039, nan, %v2048
  %v2050 = vand.u32 2147483647, %v150
  %vm2051 = vcmp.le.f32.partialorder %v2050, 0.7853982
  %vm2052 = vcmp.lt.s32.totalorder %v150, 0
  %v2053 = vand.u32 %v150, 2139095040
  %v2054 = vshrl.u32 %v2053, 23
  %v2055 = vsub.s32 %v2054, 127
  %v2056 = vand.u32 2147483647, %v150
  %v2057 = vand.u32 %v2056, 8388607
  %v2058 = vor.u32 %v2057, 8388608
  %v2059 = vsub.s32 0, %v2058
  %v2060 = vadd.s32 %v2055, 1
  %vm2061 = vcmp.gt.s32.totalorder %v2060, 0
  %v2062 = vsel %vm2061, %v2060, 0
  %v2063 = vshrl.u32 %v2062, 5
  %v2064 = vand.u32 %v2062, 31
  %v2065 = vsub.s32 32, %v2064
  %v2066 = vshrl.u32 683565275, %v2065
  %v2067 = vshll.u32 683565275, %v2064
  %v2068 = vshrl.u32 2475754826, %v2065
  %v2069 = vor.u32 %v2067, %v2068
  %v2070 = vshll.u32 2475754826, %v2064
  %v2071 = vshrl.u32 2131351028, %v2065
  %v2072 = vor.u32 %v2070, %v2071
  %v2073 = vshll.u32 2131351028, %v2064
  %v2074 = vshrl.u32 2102212464, %v2065
  %v2075 = vor.u32 %v2073, %v2074
  %v2076 = vshll.u32 2102212464, %v2064
  %v2077 = vshrl.u32 920167782, %v2065
  %v2078 = vor.u32 %v2076, %v2077
  %v2079 = vshll.u32 920167782, %v2064
  %v2080 = vshrl.u32 1326507024, %v2065
  %v2081 = vor.u32 %v2079, %v2080
  %vm2082 = vcmp.lt.s32.totalorder %v2063, 1
  %vm2083 = vcmp.lt.s32.totalorder %v2063, 2
  %vm2084 = vcmp.lt.s32.totalorder %v2063, 3
  %vm2085 = vcmp.lt.s32.totalorder %v2063, 4
  %v2086 = vsel %vm2082, %v2066, %v2069
  %v2087 = vsel %vm2085, %v2075, 2102212464
  %v2088 = vsel %vm2084, %v2072, %v2087
  %v2089 = vsel %vm2083, %v2086, %v2088
  %v2090 = vsel %vm2082, %v2069, %v2072
  %v2091 = vsel %vm2085, %v2078, 920167782
  %v2092 = vsel %vm2084, %v2075, %v2091
  %v2093 = vsel %vm2083, %v2090, %v2092
  %v2094 = vsel %vm2082, %v2072, %v2075
  %v2095 = vsel %vm2085, %v2081, 1326507024
  %v2096 = vsel %vm2084, %v2078, %v2095
  %v2097 = vsel %vm2083, %v2094, %v2096
  %v2098 = vshll.u32 %v2058, 8
  %v2099 = vmul.u32.u64.compose %v2098, %v2097
  %v2100 = vextract.low.u32 %v2099
  %v2101 = vextract.high.u32 %v2099
  %v2102 = vmul.u32.u64.compose %v2098, %v2093
  %v2103 = vextract.low.u32 %v2102
  %v2104 = vextract.high.u32 %v2102
  %v2105 = vmul.u32 %v2098, %v2089
  %v2106 = vadd.s32 %v2101, %v2103
  %vm2107 = vc.u32 %v2101, %v2103
  %v2108 = vadd.s32 %v2104, 1
  %v2109 = vsel %vm2107, %v2108, %v2104
  %v2110 = vadd.s32 %v2105, %v2109
  %v2111 = vadd.s32 %v2110, 536870912
  %v2112 = vshrl.u32 %v2111, 30
  %v2113 = vshll.u32 %v2112, 30
  %v2114 = vsub.s32 %v2110, %v2113
  %vm2115 = vcmp.lt.s32.totalorder %v2114, 0
  %v2116 = vsub.s32 0, %v2114
  %v2117 = vsel %vm2115, %v2116, %v2114
  %v2118 = vclz %v2117
  %v2119 = vsub.s32 %v2118, 2
  %vm2120 = vcmp.gt.s32.totalorder 0, %v2119
  %v2121 = vsel %vm2120, 0, %v2119
  %v2122 = vsub.s32 32, %v2121
  %v2123 = vshll.u32 %v2114, %v2121
  %v2124 = vshrl.u32 %v2106, %v2122
  %v2125 = vor.u32 %v2123, %v2124
  %v2126 = vsub.s32 4294967266, %v2121
  %v2127 = vadd.s32 %v2126, 127
  %v2128 = vshll.u32 %v2127, 23
  %v2129 = vor.u32 4788187, %v2128
  %v2130 = vand.u32 2147483647, %v2129
  %v2132 = vcvt.s32.f32 %v2125
  %v2133 = vmul.f32 %v2132, %v2130
  %v2134 = vxor.u32 %v2133, 2147483648
  %v2135 = vsel %vm2052, %v2134, %v2133
  %v2136 = vsub.s32 4, %v2112
  %v2137 = vsel %vm2052, %v2136, %v2112
  %v2138 = vsel %vm2051, %v150, %v2135
  %v2139 = vsel %vm2051, 0, %v2137
  %v2140 = vcosq.f32.pop %v2138
  %v2141 = vsinq.f32.pop %v2138
  %vm2142 = vweird.f32 %v150
  %v2143 = vand.u32 %v2139, 3
  %vm2144 = vcmp.lt.s32.totalorder %v2143, 2
  %vm2145 = vcmp.eq.s32.totalorder %v2143, 0
  %v2146 = vxor.u32 %v2141, 2147483648
  %v2147 = vsel %vm2145, %v2140, %v2146
  %vm2148 = vcmp.eq.s32.totalorder %v2143, 2
  %v2149 = vxor.u32 %v2140, 2147483648
  %v2150 = vsel %vm2148, %v2149, %v2141
  %v2151 = vsel %vm2144, %v2147, %v2150
  %v2152 = vsel %vm2142, nan, %v2151
  %v2153 = vand.u32 2147483647, %v151
  %vm2154 = vcmp.le.f32.partialorder %v2153, 0.7853982
  %vm2155 = vcmp.lt.s32.totalorder %v151, 0
  %v2156 = vand.u32 %v151, 2139095040
  %v2157 = vshrl.u32 %v2156, 23
  %v2158 = vsub.s32 %v2157, 127
  %v2159 = vand.u32 2147483647, %v151
  %v2160 = vand.u32 %v2159, 8388607
  %v2161 = vor.u32 %v2160, 8388608
  %v2162 = vsub.s32 0, %v2161
  %v2163 = vadd.s32 %v2158, 1
  %vm2164 = vcmp.gt.s32.totalorder %v2163, 0
  %v2165 = vsel %vm2164, %v2163, 0
  %v2166 = vshrl.u32 %v2165, 5
  %v2167 = vand.u32 %v2165, 31
  %v2168 = vsub.s32 32, %v2167
  %v2169 = vshrl.u32 683565275, %v2168
  %v2170 = vshll.u32 683565275, %v2167
  %v2171 = vshrl.u32 2475754826, %v2168
  %v2172 = vor.u32 %v2170, %v2171
  %v2173 = vshll.u32 2475754826, %v2167
  %v2174 = vshrl.u32 2131351028, %v2168
  %v2175 = vor.u32 %v2173, %v2174
  %v2176 = vshll.u32 2131351028, %v2167
  %v2177 = vshrl.u32 2102212464, %v2168
  %v2178 = vor.u32 %v2176, %v2177
  %v2179 = vshll.u32 2102212464, %v2167
  %v2180 = vshrl.u32 920167782, %v2168
  %v2181 = vor.u32 %v2179, %v2180
  %v2182 = vshll.u32 920167782, %v2167
  %v2183 = vshrl.u32 1326507024, %v2168
  %v2184 = vor.u32 %v2182, %v2183
  %vm2185 = vcmp.lt.s32.totalorder %v2166, 1
  %vm2186 = vcmp.lt.s32.totalorder %v2166, 2
  %vm2187 = vcmp.lt.s32.totalorder %v2166, 3
  %vm2188 = vcmp.lt.s32.totalorder %v2166, 4
  %v2189 = vsel %vm2185, %v2169, %v2172
  %v2190 = vsel %vm2188, %v2178, 2102212464
  %v2191 = vsel %vm2187, %v2175, %v2190
  %v2192 = vsel %vm2186, %v2189, %v2191
  %v2193 = vsel %vm2185, %v2172, %v2175
  %v2194 = vsel %vm2188, %v2181, 920167782
  %v2195 = vsel %vm2187, %v2178, %v2194
  %v2196 = vsel %vm2186, %v2193, %v2195
  %v2197 = vsel %vm2185, %v2175, %v2178
  %v2198 = vsel %vm2188, %v2184, 1326507024
  %v2199 = vsel %vm2187, %v2181, %v2198
  %v2200 = vsel %vm2186, %v2197, %v2199
  %v2201 = vshll.u32 %v2161, 8
  %v2202 = vmul.u32.u64.compose %v2201, %v2200
  %v2203 = vextract.low.u32 %v2202
  %v2204 = vextract.high.u32 %v2202
  %v2205 = vmul.u32.u64.compose %v2201, %v2196
  %v2206 = vextract.low.u32 %v2205
  %v2207 = vextract.high.u32 %v2205
  %v2208 = vmul.u32 %v2201, %v2192
  %v2209 = vadd.s32 %v2204, %v2206
  %vm2210 = vc.u32 %v2204, %v2206
  %v2211 = vadd.s32 %v2207, 1
  %v2212 = vsel %vm2210, %v2211, %v2207
  %v2213 = vadd.s32 %v2208, %v2212
  %v2214 = vadd.s32 %v2213, 536870912
  %v2215 = vshrl.u32 %v2214, 30
  %v2216 = vshll.u32 %v2215, 30
  %v2217 = vsub.s32 %v2213, %v2216
  %vm2218 = vcmp.lt.s32.totalorder %v2217, 0
  %v2219 = vsub.s32 0, %v2217
  %v2220 = vsel %vm2218, %v2219, %v2217
  %v2221 = vclz %v2220
  %v2222 = vsub.s32 %v2221, 2
  %vm2223 = vcmp.gt.s32.totalorder 0, %v2222
  %v2224 = vsel %vm2223, 0, %v2222
  %v2225 = vsub.s32 32, %v2224
  %v2226 = vshll.u32 %v2217, %v2224
  %v2227 = vshrl.u32 %v2209, %v2225
  %v2228 = vor.u32 %v2226, %v2227
  %v2229 = vsub.s32 4294967266, %v2224
  %v2230 = vadd.s32 %v2229, 127
  %v2231 = vshll.u32 %v2230, 23
  %v2232 = vor.u32 4788187, %v2231
  %v2233 = vand.u32 2147483647, %v2232
  %v2235 = vcvt.s32.f32 %v2228
  %v2236 = vmul.f32 %v2235, %v2233
  %v2237 = vxor.u32 %v2236, 2147483648
  %v2238 = vsel %vm2155, %v2237, %v2236
  %v2239 = vsub.s32 4, %v2215
  %v2240 = vsel %vm2155, %v2239, %v2215
  %v2241 = vsel %vm2154, %v151, %v2238
  %v2242 = vsel %vm2154, 0, %v2240
  %v2243 = vcosq.f32.pop %v2241
  %v2244 = vsinq.f32.pop %v2241
  %vm2245 = vweird.f32 %v151
  %v2246 = vand.u32 %v2242, 3
  %vm2247 = vcmp.lt.s32.totalorder %v2246, 2
  %vm2248 = vcmp.eq.s32.totalorder %v2246, 0
  %v2249 = vxor.u32 %v2244, 2147483648
  %v2250 = vsel %vm2248, %v2243, %v2249
  %vm2251 = vcmp.eq.s32.totalorder %v2246, 2
  %v2252 = vxor.u32 %v2243, 2147483648
  %v2253 = vsel %vm2251, %v2252, %v2244
  %v2254 = vsel %vm2247, %v2250, %v2253
  %v2255 = vsel %vm2245, nan, %v2254
  %v2256 = vand.u32 2147483647, %v152
  %vm2257 = vcmp.le.f32.partialorder %v2256, 0.7853982
  %vm2258 = vcmp.lt.s32.totalorder %v152, 0
  %v2259 = vand.u32 %v152, 2139095040
  %v2260 = vshrl.u32 %v2259, 23
  %v2261 = vsub.s32 %v2260, 127
  %v2262 = vand.u32 2147483647, %v152
  %v2263 = vand.u32 %v2262, 8388607
  %v2264 = vor.u32 %v2263, 8388608
  %v2265 = vsub.s32 0, %v2264
  %v2266 = vadd.s32 %v2261, 1
  %vm2267 = vcmp.gt.s32.totalorder %v2266, 0
  %v2268 = vsel %vm2267, %v2266, 0
  %v2269 = vshrl.u32 %v2268, 5
  %v2270 = vand.u32 %v2268, 31
  %v2271 = vsub.s32 32, %v2270
  %v2272 = vshrl.u32 683565275, %v2271
  %v2273 = vshll.u32 683565275, %v2270
  %v2274 = vshrl.u32 2475754826, %v2271
  %v2275 = vor.u32 %v2273, %v2274
  %v2276 = vshll.u32 2475754826, %v2270
  %v2277 = vshrl.u32 2131351028, %v2271
  %v2278 = vor.u32 %v2276, %v2277
  %v2279 = vshll.u32 2131351028, %v2270
  %v2280 = vshrl.u32 2102212464, %v2271
  %v2281 = vor.u32 %v2279, %v2280
  %v2282 = vshll.u32 2102212464, %v2270
  %v2283 = vshrl.u32 920167782, %v2271
  %v2284 = vor.u32 %v2282, %v2283
  %v2285 = vshll.u32 920167782, %v2270
  %v2286 = vshrl.u32 1326507024, %v2271
  %v2287 = vor.u32 %v2285, %v2286
  %vm2288 = vcmp.lt.s32.totalorder %v2269, 1
  %vm2289 = vcmp.lt.s32.totalorder %v2269, 2
  %vm2290 = vcmp.lt.s32.totalorder %v2269, 3
  %vm2291 = vcmp.lt.s32.totalorder %v2269, 4
  %v2292 = vsel %vm2288, %v2272, %v2275
  %v2293 = vsel %vm2291, %v2281, 2102212464
  %v2294 = vsel %vm2290, %v2278, %v2293
  %v2295 = vsel %vm2289, %v2292, %v2294
  %v2296 = vsel %vm2288, %v2275, %v2278
  %v2297 = vsel %vm2291, %v2284, 920167782
  %v2298 = vsel %vm2290, %v2281, %v2297
  %v2299 = vsel %vm2289, %v2296, %v2298
  %v2300 = vsel %vm2288, %v2278, %v2281
  %v2301 = vsel %vm2291, %v2287, 1326507024
  %v2302 = vsel %vm2290, %v2284, %v2301
  %v2303 = vsel %vm2289, %v2300, %v2302
  %v2304 = vshll.u32 %v2264, 8
  %v2305 = vmul.u32.u64.compose %v2304, %v2303
  %v2306 = vextract.low.u32 %v2305
  %v2307 = vextract.high.u32 %v2305
  %v2308 = vmul.u32.u64.compose %v2304, %v2299
  %v2309 = vextract.low.u32 %v2308
  %v2310 = vextract.high.u32 %v2308
  %v2311 = vmul.u32 %v2304, %v2295
  %v2312 = vadd.s32 %v2307, %v2309
  %vm2313 = vc.u32 %v2307, %v2309
  %v2314 = vadd.s32 %v2310, 1
  %v2315 = vsel %vm2313, %v2314, %v2310
  %v2316 = vadd.s32 %v2311, %v2315
  %v2317 = vadd.s32 %v2316, 536870912
  %v2318 = vshrl.u32 %v2317, 30
  %v2319 = vshll.u32 %v2318, 30
  %v2320 = vsub.s32 %v2316, %v2319
  %vm2321 = vcmp.lt.s32.totalorder %v2320, 0
  %v2322 = vsub.s32 0, %v2320
  %v2323 = vsel %vm2321, %v2322, %v2320
  %v2324 = vclz %v2323
  %v2325 = vsub.s32 %v2324, 2
  %vm2326 = vcmp.gt.s32.totalorder 0, %v2325
  %v2327 = vsel %vm2326, 0, %v2325
  %v2328 = vsub.s32 32, %v2327
  %v2329 = vshll.u32 %v2320, %v2327
  %v2330 = vshrl.u32 %v2312, %v2328
  %v2331 = vor.u32 %v2329, %v2330
  %v2332 = vsub.s32 4294967266, %v2327
  %v2333 = vadd.s32 %v2332, 127
  %v2334 = vshll.u32 %v2333, 23
  %v2335 = vor.u32 4788187, %v2334
  %v2336 = vand.u32 2147483647, %v2335
  %v2338 = vcvt.s32.f32 %v2331
  %v2339 = vmul.f32 %v2338, %v2336
  %v2340 = vxor.u32 %v2339, 2147483648
  %v2341 = vsel %vm2258, %v2340, %v2339
  %v2342 = vsub.s32 4, %v2318
  %v2343 = vsel %vm2258, %v2342, %v2318
  %v2344 = vsel %vm2257, %v152, %v2341
  %v2345 = vsel %vm2257, 0, %v2343
  %v2346 = vcosq.f32.pop %v2344
  %v2347 = vsinq.f32.pop %v2344
  %vm2348 = vweird.f32 %v152
  %v2349 = vand.u32 %v2345, 3
  %vm2350 = vcmp.lt.s32.totalorder %v2349, 2
  %vm2351 = vcmp.eq.s32.totalorder %v2349, 0
  %v2352 = vxor.u32 %v2347, 2147483648
  %v2353 = vsel %vm2351, %v2346, %v2352
  %vm2354 = vcmp.eq.s32.totalorder %v2349, 2
  %v2355 = vxor.u32 %v2346, 2147483648
  %v2356 = vsel %vm2354, %v2355, %v2347
  %v2357 = vsel %vm2350, %v2353, %v2356
  %v2358 = vsel %vm2348, nan, %v2357
  %v2359 = vand.u32 2147483647, %v153
  %vm2360 = vcmp.le.f32.partialorder %v2359, 0.7853982
  %vm2361 = vcmp.lt.s32.totalorder %v153, 0
  %v2362 = vand.u32 %v153, 2139095040
  %v2363 = vshrl.u32 %v2362, 23
  %v2364 = vsub.s32 %v2363, 127
  %v2365 = vand.u32 2147483647, %v153
  %v2366 = vand.u32 %v2365, 8388607
  %v2367 = vor.u32 %v2366, 8388608
  %v2368 = vsub.s32 0, %v2367
  %v2369 = vadd.s32 %v2364, 1
  %vm2370 = vcmp.gt.s32.totalorder %v2369, 0
  %v2371 = vsel %vm2370, %v2369, 0
  %v2372 = vshrl.u32 %v2371, 5
  %v2373 = vand.u32 %v2371, 31
  %v2374 = vsub.s32 32, %v2373
  %v2375 = vshrl.u32 683565275, %v2374
  %v2376 = vshll.u32 683565275, %v2373
  %v2377 = vshrl.u32 2475754826, %v2374
  %v2378 = vor.u32 %v2376, %v2377
  %v2379 = vshll.u32 2475754826, %v2373
  %v2380 = vshrl.u32 2131351028, %v2374
  %v2381 = vor.u32 %v2379, %v2380
  %v2382 = vshll.u32 2131351028, %v2373
  %v2383 = vshrl.u32 2102212464, %v2374
  %v2384 = vor.u32 %v2382, %v2383
  %v2385 = vshll.u32 2102212464, %v2373
  %v2386 = vshrl.u32 920167782, %v2374
  %v2387 = vor.u32 %v2385, %v2386
  %v2388 = vshll.u32 920167782, %v2373
  %v2389 = vshrl.u32 1326507024, %v2374
  %v2390 = vor.u32 %v2388, %v2389
  %vm2391 = vcmp.lt.s32.totalorder %v2372, 1
  %vm2392 = vcmp.lt.s32.totalorder %v2372, 2
  %vm2393 = vcmp.lt.s32.totalorder %v2372, 3
  %vm2394 = vcmp.lt.s32.totalorder %v2372, 4
  %v2395 = vsel %vm2391, %v2375, %v2378
  %v2396 = vsel %vm2394, %v2384, 2102212464
  %v2397 = vsel %vm2393, %v2381, %v2396
  %v2398 = vsel %vm2392, %v2395, %v2397
  %v2399 = vsel %vm2391, %v2378, %v2381
  %v2400 = vsel %vm2394, %v2387, 920167782
  %v2401 = vsel %vm2393, %v2384, %v2400
  %v2402 = vsel %vm2392, %v2399, %v2401
  %v2403 = vsel %vm2391, %v2381, %v2384
  %v2404 = vsel %vm2394, %v2390, 1326507024
  %v2405 = vsel %vm2393, %v2387, %v2404
  %v2406 = vsel %vm2392, %v2403, %v2405
  %v2407 = vshll.u32 %v2367, 8
  %v2408 = vmul.u32.u64.compose %v2407, %v2406
  %v2409 = vextract.low.u32 %v2408
  %v2410 = vextract.high.u32 %v2408
  %v2411 = vmul.u32.u64.compose %v2407, %v2402
  %v2412 = vextract.low.u32 %v2411
  %v2413 = vextract.high.u32 %v2411
  %v2414 = vmul.u32 %v2407, %v2398
  %v2415 = vadd.s32 %v2410, %v2412
  %vm2416 = vc.u32 %v2410, %v2412
  %v2417 = vadd.s32 %v2413, 1
  %v2418 = vsel %vm2416, %v2417, %v2413
  %v2419 = vadd.s32 %v2414, %v2418
  %v2420 = vadd.s32 %v2419, 536870912
  %v2421 = vshrl.u32 %v2420, 30
  %v2422 = vshll.u32 %v2421, 30
  %v2423 = vsub.s32 %v2419, %v2422
  %vm2424 = vcmp.lt.s32.totalorder %v2423, 0
  %v2425 = vsub.s32 0, %v2423
  %v2426 = vsel %vm2424, %v2425, %v2423
  %v2427 = vclz %v2426
  %v2428 = vsub.s32 %v2427, 2
  %vm2429 = vcmp.gt.s32.totalorder 0, %v2428
  %v2430 = vsel %vm2429, 0, %v2428
  %v2431 = vsub.s32 32, %v2430
  %v2432 = vshll.u32 %v2423, %v2430
  %v2433 = vshrl.u32 %v2415, %v2431
  %v2434 = vor.u32 %v2432, %v2433
  %v2435 = vsub.s32 4294967266, %v2430
  %v2436 = vadd.s32 %v2435, 127
  %v2437 = vshll.u32 %v2436, 23
  %v2438 = vor.u32 4788187, %v2437
  %v2439 = vand.u32 2147483647, %v2438
  %v2441 = vcvt.s32.f32 %v2434
  %v2442 = vmul.f32 %v2441, %v2439
  %v2443 = vxor.u32 %v2442, 2147483648
  %v2444 = vsel %vm2361, %v2443, %v2442
  %v2445 = vsub.s32 4, %v2421
  %v2446 = vsel %vm2361, %v2445, %v2421
  %v2447 = vsel %vm2360, %v153, %v2444
  %v2448 = vsel %vm2360, 0, %v2446
  %v2449 = vcosq.f32.pop %v2447
  %v2450 = vsinq.f32.pop %v2447
  %vm2451 = vweird.f32 %v153
  %v2452 = vand.u32 %v2448, 3
  %vm2453 = vcmp.lt.s32.totalorder %v2452, 2
  %vm2454 = vcmp.eq.s32.totalorder %v2452, 0
  %v2455 = vxor.u32 %v2450, 2147483648
  %v2456 = vsel %vm2454, %v2449, %v2455
  %vm2457 = vcmp.eq.s32.totalorder %v2452, 2
  %v2458 = vxor.u32 %v2449, 2147483648
  %v2459 = vsel %vm2457, %v2458, %v2450
  %v2460 = vsel %vm2453, %v2456, %v2459
  %v2461 = vsel %vm2451, nan, %v2460
  %v2462 = vand.u32 2147483647, %v154
  %vm2463 = vcmp.le.f32.partialorder %v2462, 0.7853982
  %vm2464 = vcmp.lt.s32.totalorder %v154, 0
  %v2465 = vand.u32 %v154, 2139095040
  %v2466 = vshrl.u32 %v2465, 23
  %v2467 = vsub.s32 %v2466, 127
  %v2468 = vand.u32 2147483647, %v154
  %v2469 = vand.u32 %v2468, 8388607
  %v2470 = vor.u32 %v2469, 8388608
  %v2471 = vsub.s32 0, %v2470
  %v2472 = vadd.s32 %v2467, 1
  %vm2473 = vcmp.gt.s32.totalorder %v2472, 0
  %v2474 = vsel %vm2473, %v2472, 0
  %v2475 = vshrl.u32 %v2474, 5
  %v2476 = vand.u32 %v2474, 31
  %v2477 = vsub.s32 32, %v2476
  %v2478 = vshrl.u32 683565275, %v2477
  %v2479 = vshll.u32 683565275, %v2476
  %v2480 = vshrl.u32 2475754826, %v2477
  %v2481 = vor.u32 %v2479, %v2480
  %v2482 = vshll.u32 2475754826, %v2476
  %v2483 = vshrl.u32 2131351028, %v2477
  %v2484 = vor.u32 %v2482, %v2483
  %v2485 = vshll.u32 2131351028, %v2476
  %v2486 = vshrl.u32 2102212464, %v2477
  %v2487 = vor.u32 %v2485, %v2486
  %v2488 = vshll.u32 2102212464, %v2476
  %v2489 = vshrl.u32 920167782, %v2477
  %v2490 = vor.u32 %v2488, %v2489
  %v2491 = vshll.u32 920167782, %v2476
  %v2492 = vshrl.u32 1326507024, %v2477
  %v2493 = vor.u32 %v2491, %v2492
  %vm2494 = vcmp.lt.s32.totalorder %v2475, 1
  %vm2495 = vcmp.lt.s32.totalorder %v2475, 2
  %vm2496 = vcmp.lt.s32.totalorder %v2475, 3
  %vm2497 = vcmp.lt.s32.totalorder %v2475, 4
  %v2498 = vsel %vm2494, %v2478, %v2481
  %v2499 = vsel %vm2497, %v2487, 2102212464
  %v2500 = vsel %vm2496, %v2484, %v2499
  %v2501 = vsel %vm2495, %v2498, %v2500
  %v2502 = vsel %vm2494, %v2481, %v2484
  %v2503 = vsel %vm2497, %v2490, 920167782
  %v2504 = vsel %vm2496, %v2487, %v2503
  %v2505 = vsel %vm2495, %v2502, %v2504
  %v2506 = vsel %vm2494, %v2484, %v2487
  %v2507 = vsel %vm2497, %v2493, 1326507024
  %v2508 = vsel %vm2496, %v2490, %v2507
  %v2509 = vsel %vm2495, %v2506, %v2508
  %v2510 = vshll.u32 %v2470, 8
  %v2511 = vmul.u32.u64.compose %v2510, %v2509
  %v2512 = vextract.low.u32 %v2511
  %v2513 = vextract.high.u32 %v2511
  %v2514 = vmul.u32.u64.compose %v2510, %v2505
  %v2515 = vextract.low.u32 %v2514
  %v2516 = vextract.high.u32 %v2514
  %v2517 = vmul.u32 %v2510, %v2501
  %v2518 = vadd.s32 %v2513, %v2515
  %vm2519 = vc.u32 %v2513, %v2515
  %v2520 = vadd.s32 %v2516, 1
  %v2521 = vsel %vm2519, %v2520, %v2516
  %v2522 = vadd.s32 %v2517, %v2521
  %v2523 = vadd.s32 %v2522, 536870912
  %v2524 = vshrl.u32 %v2523, 30
  %v2525 = vshll.u32 %v2524, 30
  %v2526 = vsub.s32 %v2522, %v2525
  %vm2527 = vcmp.lt.s32.totalorder %v2526, 0
  %v2528 = vsub.s32 0, %v2526
  %v2529 = vsel %vm2527, %v2528, %v2526
  %v2530 = vclz %v2529
  %v2531 = vsub.s32 %v2530, 2
  %vm2532 = vcmp.gt.s32.totalorder 0, %v2531
  %v2533 = vsel %vm2532, 0, %v2531
  %v2534 = vsub.s32 32, %v2533
  %v2535 = vshll.u32 %v2526, %v2533
  %v2536 = vshrl.u32 %v2518, %v2534
  %v2537 = vor.u32 %v2535, %v2536
  %v2538 = vsub.s32 4294967266, %v2533
  %v2539 = vadd.s32 %v2538, 127
  %v2540 = vshll.u32 %v2539, 23
  %v2541 = vor.u32 4788187, %v2540
  %v2542 = vand.u32 2147483647, %v2541
  %v2544 = vcvt.s32.f32 %v2537
  %v2545 = vmul.f32 %v2544, %v2542
  %v2546 = vxor.u32 %v2545, 2147483648
  %v2547 = vsel %vm2464, %v2546, %v2545
  %v2548 = vsub.s32 4, %v2524
  %v2549 = vsel %vm2464, %v2548, %v2524
  %v2550 = vsel %vm2463, %v154, %v2547
  %v2551 = vsel %vm2463, 0, %v2549
  %v2552 = vcosq.f32.pop %v2550
  %v2553 = vsinq.f32.pop %v2550
  %vm2554 = vweird.f32 %v154
  %v2555 = vand.u32 %v2551, 3
  %vm2556 = vcmp.lt.s32.totalorder %v2555, 2
  %vm2557 = vcmp.eq.s32.totalorder %v2555, 0
  %v2558 = vxor.u32 %v2553, 2147483648
  %v2559 = vsel %vm2557, %v2552, %v2558
  %vm2560 = vcmp.eq.s32.totalorder %v2555, 2
  %v2561 = vxor.u32 %v2552, 2147483648
  %v2562 = vsel %vm2560, %v2561, %v2553
  %v2563 = vsel %vm2556, %v2559, %v2562
  %v2564 = vsel %vm2554, nan, %v2563
  %v2565 = vand.u32 2147483647, %v155
  %vm2566 = vcmp.le.f32.partialorder %v2565, 0.7853982
  %vm2567 = vcmp.lt.s32.totalorder %v155, 0
  %v2568 = vand.u32 %v155, 2139095040
  %v2569 = vshrl.u32 %v2568, 23
  %v2570 = vsub.s32 %v2569, 127
  %v2571 = vand.u32 2147483647, %v155
  %v2572 = vand.u32 %v2571, 8388607
  %v2573 = vor.u32 %v2572, 8388608
  %v2574 = vsub.s32 0, %v2573
  %v2575 = vadd.s32 %v2570, 1
  %vm2576 = vcmp.gt.s32.totalorder %v2575, 0
  %v2577 = vsel %vm2576, %v2575, 0
  %v2578 = vshrl.u32 %v2577, 5
  %v2579 = vand.u32 %v2577, 31
  %v2580 = vsub.s32 32, %v2579
  %v2581 = vshrl.u32 683565275, %v2580
  %v2582 = vshll.u32 683565275, %v2579
  %v2583 = vshrl.u32 2475754826, %v2580
  %v2584 = vor.u32 %v2582, %v2583
  %v2585 = vshll.u32 2475754826, %v2579
  %v2586 = vshrl.u32 2131351028, %v2580
  %v2587 = vor.u32 %v2585, %v2586
  %v2588 = vshll.u32 2131351028, %v2579
  %v2589 = vshrl.u32 2102212464, %v2580
  %v2590 = vor.u32 %v2588, %v2589
  %v2591 = vshll.u32 2102212464, %v2579
  %v2592 = vshrl.u32 920167782, %v2580
  %v2593 = vor.u32 %v2591, %v2592
  %v2594 = vshll.u32 920167782, %v2579
  %v2595 = vshrl.u32 1326507024, %v2580
  %v2596 = vor.u32 %v2594, %v2595
  %vm2597 = vcmp.lt.s32.totalorder %v2578, 1
  %vm2598 = vcmp.lt.s32.totalorder %v2578, 2
  %vm2599 = vcmp.lt.s32.totalorder %v2578, 3
  %vm2600 = vcmp.lt.s32.totalorder %v2578, 4
  %v2601 = vsel %vm2597, %v2581, %v2584
  %v2602 = vsel %vm2600, %v2590, 2102212464
  %v2603 = vsel %vm2599, %v2587, %v2602
  %v2604 = vsel %vm2598, %v2601, %v2603
  %v2605 = vsel %vm2597, %v2584, %v2587
  %v2606 = vsel %vm2600, %v2593, 920167782
  %v2607 = vsel %vm2599, %v2590, %v2606
  %v2608 = vsel %vm2598, %v2605, %v2607
  %v2609 = vsel %vm2597, %v2587, %v2590
  %v2610 = vsel %vm2600, %v2596, 1326507024
  %v2611 = vsel %vm2599, %v2593, %v2610
  %v2612 = vsel %vm2598, %v2609, %v2611
  %v2613 = vshll.u32 %v2573, 8
  %v2614 = vmul.u32.u64.compose %v2613, %v2612
  %v2615 = vextract.low.u32 %v2614
  %v2616 = vextract.high.u32 %v2614
  %v2617 = vmul.u32.u64.compose %v2613, %v2608
  %v2618 = vextract.low.u32 %v2617
  %v2619 = vextract.high.u32 %v2617
  %v2620 = vmul.u32 %v2613, %v2604
  %v2621 = vadd.s32 %v2616, %v2618
  %vm2622 = vc.u32 %v2616, %v2618
  %v2623 = vadd.s32 %v2619, 1
  %v2624 = vsel %vm2622, %v2623, %v2619
  %v2625 = vadd.s32 %v2620, %v2624
  %v2626 = vadd.s32 %v2625, 536870912
  %v2627 = vshrl.u32 %v2626, 30
  %v2628 = vshll.u32 %v2627, 30
  %v2629 = vsub.s32 %v2625, %v2628
  %vm2630 = vcmp.lt.s32.totalorder %v2629, 0
  %v2631 = vsub.s32 0, %v2629
  %v2632 = vsel %vm2630, %v2631, %v2629
  %v2633 = vclz %v2632
  %v2634 = vsub.s32 %v2633, 2
  %vm2635 = vcmp.gt.s32.totalorder 0, %v2634
  %v2636 = vsel %vm2635, 0, %v2634
  %v2637 = vsub.s32 32, %v2636
  %v2638 = vshll.u32 %v2629, %v2636
  %v2639 = vshrl.u32 %v2621, %v2637
  %v2640 = vor.u32 %v2638, %v2639
  %v2641 = vsub.s32 4294967266, %v2636
  %v2642 = vadd.s32 %v2641, 127
  %v2643 = vshll.u32 %v2642, 23
  %v2644 = vor.u32 4788187, %v2643
  %v2645 = vand.u32 2147483647, %v2644
  %v2647 = vcvt.s32.f32 %v2640
  %v2648 = vmul.f32 %v2647, %v2645
  %v2649 = vxor.u32 %v2648, 2147483648
  %v2650 = vsel %vm2567, %v2649, %v2648
  %v2651 = vsub.s32 4, %v2627
  %v2652 = vsel %vm2567, %v2651, %v2627
  %v2653 = vsel %vm2566, %v155, %v2650
  %v2654 = vsel %vm2566, 0, %v2652
  %v2655 = vcosq.f32.pop %v2653
  %v2656 = vsinq.f32.pop %v2653
  %vm2657 = vweird.f32 %v155
  %v2658 = vand.u32 %v2654, 3
  %vm2659 = vcmp.lt.s32.totalorder %v2658, 2
  %vm2660 = vcmp.eq.s32.totalorder %v2658, 0
  %v2661 = vxor.u32 %v2656, 2147483648
  %v2662 = vsel %vm2660, %v2655, %v2661
  %vm2663 = vcmp.eq.s32.totalorder %v2658, 2
  %v2664 = vxor.u32 %v2655, 2147483648
  %v2665 = vsel %vm2663, %v2664, %v2656
  %v2666 = vsel %vm2659, %v2662, %v2665
  %v2667 = vsel %vm2657, nan, %v2666
  %v2668 = vand.u32 2147483647, %v156
  %vm2669 = vcmp.le.f32.partialorder %v2668, 0.7853982
  %vm2670 = vcmp.lt.s32.totalorder %v156, 0
  %v2671 = vand.u32 %v156, 2139095040
  %v2672 = vshrl.u32 %v2671, 23
  %v2673 = vsub.s32 %v2672, 127
  %v2674 = vand.u32 2147483647, %v156
  %v2675 = vand.u32 %v2674, 8388607
  %v2676 = vor.u32 %v2675, 8388608
  %v2677 = vsub.s32 0, %v2676
  %v2678 = vadd.s32 %v2673, 1
  %vm2679 = vcmp.gt.s32.totalorder %v2678, 0
  %v2680 = vsel %vm2679, %v2678, 0
  %v2681 = vshrl.u32 %v2680, 5
  %v2682 = vand.u32 %v2680, 31
  %v2683 = vsub.s32 32, %v2682
  %v2684 = vshrl.u32 683565275, %v2683
  %v2685 = vshll.u32 683565275, %v2682
  %v2686 = vshrl.u32 2475754826, %v2683
  %v2687 = vor.u32 %v2685, %v2686
  %v2688 = vshll.u32 2475754826, %v2682
  %v2689 = vshrl.u32 2131351028, %v2683
  %v2690 = vor.u32 %v2688, %v2689
  %v2691 = vshll.u32 2131351028, %v2682
  %v2692 = vshrl.u32 2102212464, %v2683
  %v2693 = vor.u32 %v2691, %v2692
  %v2694 = vshll.u32 2102212464, %v2682
  %v2695 = vshrl.u32 920167782, %v2683
  %v2696 = vor.u32 %v2694, %v2695
  %v2697 = vshll.u32 920167782, %v2682
  %v2698 = vshrl.u32 1326507024, %v2683
  %v2699 = vor.u32 %v2697, %v2698
  %vm2700 = vcmp.lt.s32.totalorder %v2681, 1
  %vm2701 = vcmp.lt.s32.totalorder %v2681, 2
  %vm2702 = vcmp.lt.s32.totalorder %v2681, 3
  %vm2703 = vcmp.lt.s32.totalorder %v2681, 4
  %v2704 = vsel %vm2700, %v2684, %v2687
  %v2705 = vsel %vm2703, %v2693, 2102212464
  %v2706 = vsel %vm2702, %v2690, %v2705
  %v2707 = vsel %vm2701, %v2704, %v2706
  %v2708 = vsel %vm2700, %v2687, %v2690
  %v2709 = vsel %vm2703, %v2696, 920167782
  %v2710 = vsel %vm2702, %v2693, %v2709
  %v2711 = vsel %vm2701, %v2708, %v2710
  %v2712 = vsel %vm2700, %v2690, %v2693
  %v2713 = vsel %vm2703, %v2699, 1326507024
  %v2714 = vsel %vm2702, %v2696, %v2713
  %v2715 = vsel %vm2701, %v2712, %v2714
  %v2716 = vshll.u32 %v2676, 8
  %v2717 = vmul.u32.u64.compose %v2716, %v2715
  %v2718 = vextract.low.u32 %v2717
  %v2719 = vextract.high.u32 %v2717
  %v2720 = vmul.u32.u64.compose %v2716, %v2711
  %v2721 = vextract.low.u32 %v2720
  %v2722 = vextract.high.u32 %v2720
  %v2723 = vmul.u32 %v2716, %v2707
  %v2724 = vadd.s32 %v2719, %v2721
  %vm2725 = vc.u32 %v2719, %v2721
  %v2726 = vadd.s32 %v2722, 1
  %v2727 = vsel %vm2725, %v2726, %v2722
  %v2728 = vadd.s32 %v2723, %v2727
  %v2729 = vadd.s32 %v2728, 536870912
  %v2730 = vshrl.u32 %v2729, 30
  %v2731 = vshll.u32 %v2730, 30
  %v2732 = vsub.s32 %v2728, %v2731
  %vm2733 = vcmp.lt.s32.totalorder %v2732, 0
  %v2734 = vsub.s32 0, %v2732
  %v2735 = vsel %vm2733, %v2734, %v2732
  %v2736 = vclz %v2735
  %v2737 = vsub.s32 %v2736, 2
  %vm2738 = vcmp.gt.s32.totalorder 0, %v2737
  %v2739 = vsel %vm2738, 0, %v2737
  %v2740 = vsub.s32 32, %v2739
  %v2741 = vshll.u32 %v2732, %v2739
  %v2742 = vshrl.u32 %v2724, %v2740
  %v2743 = vor.u32 %v2741, %v2742
  %v2744 = vsub.s32 4294967266, %v2739
  %v2745 = vadd.s32 %v2744, 127
  %v2746 = vshll.u32 %v2745, 23
  %v2747 = vor.u32 4788187, %v2746
  %v2748 = vand.u32 2147483647, %v2747
  %v2750 = vcvt.s32.f32 %v2743
  %v2751 = vmul.f32 %v2750, %v2748
  %v2752 = vxor.u32 %v2751, 2147483648
  %v2753 = vsel %vm2670, %v2752, %v2751
  %v2754 = vsub.s32 4, %v2730
  %v2755 = vsel %vm2670, %v2754, %v2730
  %v2756 = vsel %vm2669, %v156, %v2753
  %v2757 = vsel %vm2669, 0, %v2755
  %v2758 = vcosq.f32.pop %v2756
  %v2759 = vsinq.f32.pop %v2756
  %vm2760 = vweird.f32 %v156
  %v2761 = vand.u32 %v2757, 3
  %vm2762 = vcmp.lt.s32.totalorder %v2761, 2
  %vm2763 = vcmp.eq.s32.totalorder %v2761, 0
  %v2764 = vxor.u32 %v2759, 2147483648
  %v2765 = vsel %vm2763, %v2758, %v2764
  %vm2766 = vcmp.eq.s32.totalorder %v2761, 2
  %v2767 = vxor.u32 %v2758, 2147483648
  %v2768 = vsel %vm2766, %v2767, %v2759
  %v2769 = vsel %vm2762, %v2765, %v2768
  %v2770 = vsel %vm2760, nan, %v2769
  %v2771 = vand.u32 2147483647, %v157
  %vm2772 = vcmp.le.f32.partialorder %v2771, 0.7853982
  %vm2773 = vcmp.lt.s32.totalorder %v157, 0
  %v2774 = vand.u32 %v157, 2139095040
  %v2775 = vshrl.u32 %v2774, 23
  %v2776 = vsub.s32 %v2775, 127
  %v2777 = vand.u32 2147483647, %v157
  %v2778 = vand.u32 %v2777, 8388607
  %v2779 = vor.u32 %v2778, 8388608
  %v2780 = vsub.s32 0, %v2779
  %v2781 = vadd.s32 %v2776, 1
  %vm2782 = vcmp.gt.s32.totalorder %v2781, 0
  %v2783 = vsel %vm2782, %v2781, 0
  %v2784 = vshrl.u32 %v2783, 5
  %v2785 = vand.u32 %v2783, 31
  %v2786 = vsub.s32 32, %v2785
  %v2787 = vshrl.u32 683565275, %v2786
  %v2788 = vshll.u32 683565275, %v2785
  %v2789 = vshrl.u32 2475754826, %v2786
  %v2790 = vor.u32 %v2788, %v2789
  %v2791 = vshll.u32 2475754826, %v2785
  %v2792 = vshrl.u32 2131351028, %v2786
  %v2793 = vor.u32 %v2791, %v2792
  %v2794 = vshll.u32 2131351028, %v2785
  %v2795 = vshrl.u32 2102212464, %v2786
  %v2796 = vor.u32 %v2794, %v2795
  %v2797 = vshll.u32 2102212464, %v2785
  %v2798 = vshrl.u32 920167782, %v2786
  %v2799 = vor.u32 %v2797, %v2798
  %v2800 = vshll.u32 920167782, %v2785
  %v2801 = vshrl.u32 1326507024, %v2786
  %v2802 = vor.u32 %v2800, %v2801
  %vm2803 = vcmp.lt.s32.totalorder %v2784, 1
  %vm2804 = vcmp.lt.s32.totalorder %v2784, 2
  %vm2805 = vcmp.lt.s32.totalorder %v2784, 3
  %vm2806 = vcmp.lt.s32.totalorder %v2784, 4
  %v2807 = vsel %vm2803, %v2787, %v2790
  %v2808 = vsel %vm2806, %v2796, 2102212464
  %v2809 = vsel %vm2805, %v2793, %v2808
  %v2810 = vsel %vm2804, %v2807, %v2809
  %v2811 = vsel %vm2803, %v2790, %v2793
  %v2812 = vsel %vm2806, %v2799, 920167782
  %v2813 = vsel %vm2805, %v2796, %v2812
  %v2814 = vsel %vm2804, %v2811, %v2813
  %v2815 = vsel %vm2803, %v2793, %v2796
  %v2816 = vsel %vm2806, %v2802, 1326507024
  %v2817 = vsel %vm2805, %v2799, %v2816
  %v2818 = vsel %vm2804, %v2815, %v2817
  %v2819 = vshll.u32 %v2779, 8
  %v2820 = vmul.u32.u64.compose %v2819, %v2818
  %v2821 = vextract.low.u32 %v2820
  %v2822 = vextract.high.u32 %v2820
  %v2823 = vmul.u32.u64.compose %v2819, %v2814
  %v2824 = vextract.low.u32 %v2823
  %v2825 = vextract.high.u32 %v2823
  %v2826 = vmul.u32 %v2819, %v2810
  %v2827 = vadd.s32 %v2822, %v2824
  %vm2828 = vc.u32 %v2822, %v2824
  %v2829 = vadd.s32 %v2825, 1
  %v2830 = vsel %vm2828, %v2829, %v2825
  %v2831 = vadd.s32 %v2826, %v2830
  %v2832 = vadd.s32 %v2831, 536870912
  %v2833 = vshrl.u32 %v2832, 30
  %v2834 = vshll.u32 %v2833, 30
  %v2835 = vsub.s32 %v2831, %v2834
  %vm2836 = vcmp.lt.s32.totalorder %v2835, 0
  %v2837 = vsub.s32 0, %v2835
  %v2838 = vsel %vm2836, %v2837, %v2835
  %v2839 = vclz %v2838
  %v2840 = vsub.s32 %v2839, 2
  %vm2841 = vcmp.gt.s32.totalorder 0, %v2840
  %v2842 = vsel %vm2841, 0, %v2840
  %v2843 = vsub.s32 32, %v2842
  %v2844 = vshll.u32 %v2835, %v2842
  %v2845 = vshrl.u32 %v2827, %v2843
  %v2846 = vor.u32 %v2844, %v2845
  %v2847 = vsub.s32 4294967266, %v2842
  %v2848 = vadd.s32 %v2847, 127
  %v2849 = vshll.u32 %v2848, 23
  %v2850 = vor.u32 4788187, %v2849
  %v2851 = vand.u32 2147483647, %v2850
  %v2853 = vcvt.s32.f32 %v2846
  %v2854 = vmul.f32 %v2853, %v2851
  %v2855 = vxor.u32 %v2854, 2147483648
  %v2856 = vsel %vm2773, %v2855, %v2854
  %v2857 = vsub.s32 4, %v2833
  %v2858 = vsel %vm2773, %v2857, %v2833
  %v2859 = vsel %vm2772, %v157, %v2856
  %v2860 = vsel %vm2772, 0, %v2858
  %v2861 = vcosq.f32.pop %v2859
  %v2862 = vsinq.f32.pop %v2859
  %vm2863 = vweird.f32 %v157
  %v2864 = vand.u32 %v2860, 3
  %vm2865 = vcmp.lt.s32.totalorder %v2864, 2
  %vm2866 = vcmp.eq.s32.totalorder %v2864, 0
  %v2867 = vxor.u32 %v2862, 2147483648
  %v2868 = vsel %vm2866, %v2861, %v2867
  %vm2869 = vcmp.eq.s32.totalorder %v2864, 2
  %v2870 = vxor.u32 %v2861, 2147483648
  %v2871 = vsel %vm2869, %v2870, %v2862
  %v2872 = vsel %vm2865, %v2868, %v2871
  %v2873 = vsel %vm2863, nan, %v2872
  %v2874 = vand.u32 2147483647, %v158
  %vm2875 = vcmp.le.f32.partialorder %v2874, 0.7853982
  %vm2876 = vcmp.lt.s32.totalorder %v158, 0
  %v2877 = vand.u32 %v158, 2139095040
  %v2878 = vshrl.u32 %v2877, 23
  %v2879 = vsub.s32 %v2878, 127
  %v2880 = vand.u32 2147483647, %v158
  %v2881 = vand.u32 %v2880, 8388607
  %v2882 = vor.u32 %v2881, 8388608
  %v2883 = vsub.s32 0, %v2882
  %v2884 = vadd.s32 %v2879, 1
  %vm2885 = vcmp.gt.s32.totalorder %v2884, 0
  %v2886 = vsel %vm2885, %v2884, 0
  %v2887 = vshrl.u32 %v2886, 5
  %v2888 = vand.u32 %v2886, 31
  %v2889 = vsub.s32 32, %v2888
  %v2890 = vshrl.u32 683565275, %v2889
  %v2891 = vshll.u32 683565275, %v2888
  %v2892 = vshrl.u32 2475754826, %v2889
  %v2893 = vor.u32 %v2891, %v2892
  %v2894 = vshll.u32 2475754826, %v2888
  %v2895 = vshrl.u32 2131351028, %v2889
  %v2896 = vor.u32 %v2894, %v2895
  %v2897 = vshll.u32 2131351028, %v2888
  %v2898 = vshrl.u32 2102212464, %v2889
  %v2899 = vor.u32 %v2897, %v2898
  %v2900 = vshll.u32 2102212464, %v2888
  %v2901 = vshrl.u32 920167782, %v2889
  %v2902 = vor.u32 %v2900, %v2901
  %v2903 = vshll.u32 920167782, %v2888
  %v2904 = vshrl.u32 1326507024, %v2889
  %v2905 = vor.u32 %v2903, %v2904
  %vm2906 = vcmp.lt.s32.totalorder %v2887, 1
  %vm2907 = vcmp.lt.s32.totalorder %v2887, 2
  %vm2908 = vcmp.lt.s32.totalorder %v2887, 3
  %vm2909 = vcmp.lt.s32.totalorder %v2887, 4
  %v2910 = vsel %vm2906, %v2890, %v2893
  %v2911 = vsel %vm2909, %v2899, 2102212464
  %v2912 = vsel %vm2908, %v2896, %v2911
  %v2913 = vsel %vm2907, %v2910, %v2912
  %v2914 = vsel %vm2906, %v2893, %v2896
  %v2915 = vsel %vm2909, %v2902, 920167782
  %v2916 = vsel %vm2908, %v2899, %v2915
  %v2917 = vsel %vm2907, %v2914, %v2916
  %v2918 = vsel %vm2906, %v2896, %v2899
  %v2919 = vsel %vm2909, %v2905, 1326507024
  %v2920 = vsel %vm2908, %v2902, %v2919
  %v2921 = vsel %vm2907, %v2918, %v2920
  %v2922 = vshll.u32 %v2882, 8
  %v2923 = vmul.u32.u64.compose %v2922, %v2921
  %v2924 = vextract.low.u32 %v2923
  %v2925 = vextract.high.u32 %v2923
  %v2926 = vmul.u32.u64.compose %v2922, %v2917
  %v2927 = vextract.low.u32 %v2926
  %v2928 = vextract.high.u32 %v2926
  %v2929 = vmul.u32 %v2922, %v2913
  %v2930 = vadd.s32 %v2925, %v2927
  %vm2931 = vc.u32 %v2925, %v2927
  %v2932 = vadd.s32 %v2928, 1
  %v2933 = vsel %vm2931, %v2932, %v2928
  %v2934 = vadd.s32 %v2929, %v2933
  %v2935 = vadd.s32 %v2934, 536870912
  %v2936 = vshrl.u32 %v2935, 30
  %v2937 = vshll.u32 %v2936, 30
  %v2938 = vsub.s32 %v2934, %v2937
  %vm2939 = vcmp.lt.s32.totalorder %v2938, 0
  %v2940 = vsub.s32 0, %v2938
  %v2941 = vsel %vm2939, %v2940, %v2938
  %v2942 = vclz %v2941
  %v2943 = vsub.s32 %v2942, 2
  %vm2944 = vcmp.gt.s32.totalorder 0, %v2943
  %v2945 = vsel %vm2944, 0, %v2943
  %v2946 = vsub.s32 32, %v2945
  %v2947 = vshll.u32 %v2938, %v2945
  %v2948 = vshrl.u32 %v2930, %v2946
  %v2949 = vor.u32 %v2947, %v2948
  %v2950 = vsub.s32 4294967266, %v2945
  %v2951 = vadd.s32 %v2950, 127
  %v2952 = vshll.u32 %v2951, 23
  %v2953 = vor.u32 4788187, %v2952
  %v2954 = vand.u32 2147483647, %v2953
  %v2956 = vcvt.s32.f32 %v2949
  %v2957 = vmul.f32 %v2956, %v2954
  %v2958 = vxor.u32 %v2957, 2147483648
  %v2959 = vsel %vm2876, %v2958, %v2957
  %v2960 = vsub.s32 4, %v2936
  %v2961 = vsel %vm2876, %v2960, %v2936
  %v2962 = vsel %vm2875, %v158, %v2959
  %v2963 = vsel %vm2875, 0, %v2961
  %v2964 = vcosq.f32.pop %v2962
  %v2965 = vsinq.f32.pop %v2962
  %vm2966 = vweird.f32 %v158
  %v2967 = vand.u32 %v2963, 3
  %vm2968 = vcmp.lt.s32.totalorder %v2967, 2
  %vm2969 = vcmp.eq.s32.totalorder %v2967, 0
  %v2970 = vxor.u32 %v2965, 2147483648
  %v2971 = vsel %vm2969, %v2964, %v2970
  %vm2972 = vcmp.eq.s32.totalorder %v2967, 2
  %v2973 = vxor.u32 %v2964, 2147483648
  %v2974 = vsel %vm2972, %v2973, %v2965
  %v2975 = vsel %vm2968, %v2971, %v2974
  %v2976 = vsel %vm2966, nan, %v2975
  %v2977 = vand.u32 2147483647, %v159
  %vm2978 = vcmp.le.f32.partialorder %v2977, 0.7853982
  %vm2979 = vcmp.lt.s32.totalorder %v159, 0
  %v2980 = vand.u32 %v159, 2139095040
  %v2981 = vshrl.u32 %v2980, 23
  %v2982 = vsub.s32 %v2981, 127
  %v2983 = vand.u32 2147483647, %v159
  %v2984 = vand.u32 %v2983, 8388607
  %v2985 = vor.u32 %v2984, 8388608
  %v2986 = vsub.s32 0, %v2985
  %v2987 = vadd.s32 %v2982, 1
  %vm2988 = vcmp.gt.s32.totalorder %v2987, 0
  %v2989 = vsel %vm2988, %v2987, 0
  %v2990 = vshrl.u32 %v2989, 5
  %v2991 = vand.u32 %v2989, 31
  %v2992 = vsub.s32 32, %v2991
  %v2993 = vshrl.u32 683565275, %v2992
  %v2994 = vshll.u32 683565275, %v2991
  %v2995 = vshrl.u32 2475754826, %v2992
  %v2996 = vor.u32 %v2994, %v2995
  %v2997 = vshll.u32 2475754826, %v2991
  %v2998 = vshrl.u32 2131351028, %v2992
  %v2999 = vor.u32 %v2997, %v2998
  %v3000 = vshll.u32 2131351028, %v2991
  %v3001 = vshrl.u32 2102212464, %v2992
  %v3002 = vor.u32 %v3000, %v3001
  %v3003 = vshll.u32 2102212464, %v2991
  %v3004 = vshrl.u32 920167782, %v2992
  %v3005 = vor.u32 %v3003, %v3004
  %v3006 = vshll.u32 920167782, %v2991
  %v3007 = vshrl.u32 1326507024, %v2992
  %v3008 = vor.u32 %v3006, %v3007
  %vm3009 = vcmp.lt.s32.totalorder %v2990, 1
  %vm3010 = vcmp.lt.s32.totalorder %v2990, 2
  %vm3011 = vcmp.lt.s32.totalorder %v2990, 3
  %vm3012 = vcmp.lt.s32.totalorder %v2990, 4
  %v3013 = vsel %vm3009, %v2993, %v2996
  %v3014 = vsel %vm3012, %v3002, 2102212464
  %v3015 = vsel %vm3011, %v2999, %v3014
  %v3016 = vsel %vm3010, %v3013, %v3015
  %v3017 = vsel %vm3009, %v2996, %v2999
  %v3018 = vsel %vm3012, %v3005, 920167782
  %v3019 = vsel %vm3011, %v3002, %v3018
  %v3020 = vsel %vm3010, %v3017, %v3019
  %v3021 = vsel %vm3009, %v2999, %v3002
  %v3022 = vsel %vm3012, %v3008, 1326507024
  %v3023 = vsel %vm3011, %v3005, %v3022
  %v3024 = vsel %vm3010, %v3021, %v3023
  %v3025 = vshll.u32 %v2985, 8
  %v3026 = vmul.u32.u64.compose %v3025, %v3024
  %v3027 = vextract.low.u32 %v3026
  %v3028 = vextract.high.u32 %v3026
  %v3029 = vmul.u32.u64.compose %v3025, %v3020
  %v3030 = vextract.low.u32 %v3029
  %v3031 = vextract.high.u32 %v3029
  %v3032 = vmul.u32 %v3025, %v3016
  %v3033 = vadd.s32 %v3028, %v3030
  %vm3034 = vc.u32 %v3028, %v3030
  %v3035 = vadd.s32 %v3031, 1
  %v3036 = vsel %vm3034, %v3035, %v3031
  %v3037 = vadd.s32 %v3032, %v3036
  %v3038 = vadd.s32 %v3037, 536870912
  %v3039 = vshrl.u32 %v3038, 30
  %v3040 = vshll.u32 %v3039, 30
  %v3041 = vsub.s32 %v3037, %v3040
  %vm3042 = vcmp.lt.s32.totalorder %v3041, 0
  %v3043 = vsub.s32 0, %v3041
  %v3044 = vsel %vm3042, %v3043, %v3041
  %v3045 = vclz %v3044
  %v3046 = vsub.s32 %v3045, 2
  %vm3047 = vcmp.gt.s32.totalorder 0, %v3046
  %v3048 = vsel %vm3047, 0, %v3046
  %v3049 = vsub.s32 32, %v3048
  %v3050 = vshll.u32 %v3041, %v3048
  %v3051 = vshrl.u32 %v3033, %v3049
  %v3052 = vor.u32 %v3050, %v3051
  %v3053 = vsub.s32 4294967266, %v3048
  %v3054 = vadd.s32 %v3053, 127
  %v3055 = vshll.u32 %v3054, 23
  %v3056 = vor.u32 4788187, %v3055
  %v3057 = vand.u32 2147483647, %v3056
  %v3059 = vcvt.s32.f32 %v3052
  %v3060 = vmul.f32 %v3059, %v3057
  %v3061 = vxor.u32 %v3060, 2147483648
  %v3062 = vsel %vm2979, %v3061, %v3060
  %v3063 = vsub.s32 4, %v3039
  %v3064 = vsel %vm2979, %v3063, %v3039
  %v3065 = vsel %vm2978, %v159, %v3062
  %v3066 = vsel %vm2978, 0, %v3064
  %v3067 = vcosq.f32.pop %v3065
  %v3068 = vsinq.f32.pop %v3065
  %vm3069 = vweird.f32 %v159
  %v3070 = vand.u32 %v3066, 3
  %vm3071 = vcmp.lt.s32.totalorder %v3070, 2
  %vm3072 = vcmp.eq.s32.totalorder %v3070, 0
  %v3073 = vxor.u32 %v3068, 2147483648
  %v3074 = vsel %vm3072, %v3067, %v3073
  %vm3075 = vcmp.eq.s32.totalorder %v3070, 2
  %v3076 = vxor.u32 %v3067, 2147483648
  %v3077 = vsel %vm3075, %v3076, %v3068
  %v3078 = vsel %vm3071, %v3074, %v3077
  %v3079 = vsel %vm3069, nan, %v3078
  %v3080 = vand.u32 2147483647, %v160
  %vm3081 = vcmp.le.f32.partialorder %v3080, 0.7853982
  %vm3082 = vcmp.lt.s32.totalorder %v160, 0
  %v3083 = vand.u32 %v160, 2139095040
  %v3084 = vshrl.u32 %v3083, 23
  %v3085 = vsub.s32 %v3084, 127
  %v3086 = vand.u32 2147483647, %v160
  %v3087 = vand.u32 %v3086, 8388607
  %v3088 = vor.u32 %v3087, 8388608
  %v3089 = vsub.s32 0, %v3088
  %v3090 = vadd.s32 %v3085, 1
  %vm3091 = vcmp.gt.s32.totalorder %v3090, 0
  %v3092 = vsel %vm3091, %v3090, 0
  %v3093 = vshrl.u32 %v3092, 5
  %v3094 = vand.u32 %v3092, 31
  %v3095 = vsub.s32 32, %v3094
  %v3096 = vshrl.u32 683565275, %v3095
  %v3097 = vshll.u32 683565275, %v3094
  %v3098 = vshrl.u32 2475754826, %v3095
  %v3099 = vor.u32 %v3097, %v3098
  %v3100 = vshll.u32 2475754826, %v3094
  %v3101 = vshrl.u32 2131351028, %v3095
  %v3102 = vor.u32 %v3100, %v3101
  %v3103 = vshll.u32 2131351028, %v3094
  %v3104 = vshrl.u32 2102212464, %v3095
  %v3105 = vor.u32 %v3103, %v3104
  %v3106 = vshll.u32 2102212464, %v3094
  %v3107 = vshrl.u32 920167782, %v3095
  %v3108 = vor.u32 %v3106, %v3107
  %v3109 = vshll.u32 920167782, %v3094
  %v3110 = vshrl.u32 1326507024, %v3095
  %v3111 = vor.u32 %v3109, %v3110
  %vm3112 = vcmp.lt.s32.totalorder %v3093, 1
  %vm3113 = vcmp.lt.s32.totalorder %v3093, 2
  %vm3114 = vcmp.lt.s32.totalorder %v3093, 3
  %vm3115 = vcmp.lt.s32.totalorder %v3093, 4
  %v3116 = vsel %vm3112, %v3096, %v3099
  %v3117 = vsel %vm3115, %v3105, 2102212464
  %v3118 = vsel %vm3114, %v3102, %v3117
  %v3119 = vsel %vm3113, %v3116, %v3118
  %v3120 = vsel %vm3112, %v3099, %v3102
  %v3121 = vsel %vm3115, %v3108, 920167782
  %v3122 = vsel %vm3114, %v3105, %v3121
  %v3123 = vsel %vm3113, %v3120, %v3122
  %v3124 = vsel %vm3112, %v3102, %v3105
  %v3125 = vsel %vm3115, %v3111, 1326507024
  %v3126 = vsel %vm3114, %v3108, %v3125
  %v3127 = vsel %vm3113, %v3124, %v3126
  %v3128 = vshll.u32 %v3088, 8
  %v3129 = vmul.u32.u64.compose %v3128, %v3127
  %v3130 = vextract.low.u32 %v3129
  %v3131 = vextract.high.u32 %v3129
  %v3132 = vmul.u32.u64.compose %v3128, %v3123
  %v3133 = vextract.low.u32 %v3132
  %v3134 = vextract.high.u32 %v3132
  %v3135 = vmul.u32 %v3128, %v3119
  %v3136 = vadd.s32 %v3131, %v3133
  %vm3137 = vc.u32 %v3131, %v3133
  %v3138 = vadd.s32 %v3134, 1
  %v3139 = vsel %vm3137, %v3138, %v3134
  %v3140 = vadd.s32 %v3135, %v3139
  %v3141 = vadd.s32 %v3140, 536870912
  %v3142 = vshrl.u32 %v3141, 30
  %v3143 = vshll.u32 %v3142, 30
  %v3144 = vsub.s32 %v3140, %v3143
  %vm3145 = vcmp.lt.s32.totalorder %v3144, 0
  %v3146 = vsub.s32 0, %v3144
  %v3147 = vsel %vm3145, %v3146, %v3144
  %v3148 = vclz %v3147
  %v3149 = vsub.s32 %v3148, 2
  %vm3150 = vcmp.gt.s32.totalorder 0, %v3149
  %v3151 = vsel %vm3150, 0, %v3149
  %v3152 = vsub.s32 32, %v3151
  %v3153 = vshll.u32 %v3144, %v3151
  %v3154 = vshrl.u32 %v3136, %v3152
  %v3155 = vor.u32 %v3153, %v3154
  %v3156 = vsub.s32 4294967266, %v3151
  %v3157 = vadd.s32 %v3156, 127
  %v3158 = vshll.u32 %v3157, 23
  %v3159 = vor.u32 4788187, %v3158
  %v3160 = vand.u32 2147483647, %v3159
  %v3162 = vcvt.s32.f32 %v3155
  %v3163 = vmul.f32 %v3162, %v3160
  %v3164 = vxor.u32 %v3163, 2147483648
  %v3165 = vsel %vm3082, %v3164, %v3163
  %v3166 = vsub.s32 4, %v3142
  %v3167 = vsel %vm3082, %v3166, %v3142
  %v3168 = vsel %vm3081, %v160, %v3165
  %v3169 = vsel %vm3081, 0, %v3167
  %v3170 = vcosq.f32.pop %v3168
  %v3171 = vsinq.f32.pop %v3168
  %vm3172 = vweird.f32 %v160
  %v3173 = vand.u32 %v3169, 3
  %vm3174 = vcmp.lt.s32.totalorder %v3173, 2
  %vm3175 = vcmp.eq.s32.totalorder %v3173, 0
  %v3176 = vxor.u32 %v3171, 2147483648
  %v3177 = vsel %vm3175, %v3170, %v3176
  %vm3178 = vcmp.eq.s32.totalorder %v3173, 2
  %v3179 = vxor.u32 %v3170, 2147483648
  %v3180 = vsel %vm3178, %v3179, %v3171
  %v3181 = vsel %vm3174, %v3177, %v3180
  %v3182 = vsel %vm3172, nan, %v3181
  %v3183 = vand.u32 2147483647, %v161
  %vm3184 = vcmp.le.f32.partialorder %v3183, 0.7853982
  %vm3185 = vcmp.lt.s32.totalorder %v161, 0
  %v3186 = vand.u32 %v161, 2139095040
  %v3187 = vshrl.u32 %v3186, 23
  %v3188 = vsub.s32 %v3187, 127
  %v3189 = vand.u32 2147483647, %v161
  %v3190 = vand.u32 %v3189, 8388607
  %v3191 = vor.u32 %v3190, 8388608
  %v3192 = vsub.s32 0, %v3191
  %v3193 = vadd.s32 %v3188, 1
  %vm3194 = vcmp.gt.s32.totalorder %v3193, 0
  %v3195 = vsel %vm3194, %v3193, 0
  %v3196 = vshrl.u32 %v3195, 5
  %v3197 = vand.u32 %v3195, 31
  %v3198 = vsub.s32 32, %v3197
  %v3199 = vshrl.u32 683565275, %v3198
  %v3200 = vshll.u32 683565275, %v3197
  %v3201 = vshrl.u32 2475754826, %v3198
  %v3202 = vor.u32 %v3200, %v3201
  %v3203 = vshll.u32 2475754826, %v3197
  %v3204 = vshrl.u32 2131351028, %v3198
  %v3205 = vor.u32 %v3203, %v3204
  %v3206 = vshll.u32 2131351028, %v3197
  %v3207 = vshrl.u32 2102212464, %v3198
  %v3208 = vor.u32 %v3206, %v3207
  %v3209 = vshll.u32 2102212464, %v3197
  %v3210 = vshrl.u32 920167782, %v3198
  %v3211 = vor.u32 %v3209, %v3210
  %v3212 = vshll.u32 920167782, %v3197
  %v3213 = vshrl.u32 1326507024, %v3198
  %v3214 = vor.u32 %v3212, %v3213
  %vm3215 = vcmp.lt.s32.totalorder %v3196, 1
  %vm3216 = vcmp.lt.s32.totalorder %v3196, 2
  %vm3217 = vcmp.lt.s32.totalorder %v3196, 3
  %vm3218 = vcmp.lt.s32.totalorder %v3196, 4
  %v3219 = vsel %vm3215, %v3199, %v3202
  %v3220 = vsel %vm3218, %v3208, 2102212464
  %v3221 = vsel %vm3217, %v3205, %v3220
  %v3222 = vsel %vm3216, %v3219, %v3221
  %v3223 = vsel %vm3215, %v3202, %v3205
  %v3224 = vsel %vm3218, %v3211, 920167782
  %v3225 = vsel %vm3217, %v3208, %v3224
  %v3226 = vsel %vm3216, %v3223, %v3225
  %v3227 = vsel %vm3215, %v3205, %v3208
  %v3228 = vsel %vm3218, %v3214, 1326507024
  %v3229 = vsel %vm3217, %v3211, %v3228
  %v3230 = vsel %vm3216, %v3227, %v3229
  %v3231 = vshll.u32 %v3191, 8
  %v3232 = vmul.u32.u64.compose %v3231, %v3230
  %v3233 = vextract.low.u32 %v3232
  %v3234 = vextract.high.u32 %v3232
  %v3235 = vmul.u32.u64.compose %v3231, %v3226
  %v3236 = vextract.low.u32 %v3235
  %v3237 = vextract.high.u32 %v3235
  %v3238 = vmul.u32 %v3231, %v3222
  %v3239 = vadd.s32 %v3234, %v3236
  %vm3240 = vc.u32 %v3234, %v3236
  %v3241 = vadd.s32 %v3237, 1
  %v3242 = vsel %vm3240, %v3241, %v3237
  %v3243 = vadd.s32 %v3238, %v3242
  %v3244 = vadd.s32 %v3243, 536870912
  %v3245 = vshrl.u32 %v3244, 30
  %v3246 = vshll.u32 %v3245, 30
  %v3247 = vsub.s32 %v3243, %v3246
  %vm3248 = vcmp.lt.s32.totalorder %v3247, 0
  %v3249 = vsub.s32 0, %v3247
  %v3250 = vsel %vm3248, %v3249, %v3247
  %v3251 = vclz %v3250
  %v3252 = vsub.s32 %v3251, 2
  %vm3253 = vcmp.gt.s32.totalorder 0, %v3252
  %v3254 = vsel %vm3253, 0, %v3252
  %v3255 = vsub.s32 32, %v3254
  %v3256 = vshll.u32 %v3247, %v3254
  %v3257 = vshrl.u32 %v3239, %v3255
  %v3258 = vor.u32 %v3256, %v3257
  %v3259 = vsub.s32 4294967266, %v3254
  %v3260 = vadd.s32 %v3259, 127
  %v3261 = vshll.u32 %v3260, 23
  %v3262 = vor.u32 4788187, %v3261
  %v3263 = vand.u32 2147483647, %v3262
  %v3265 = vcvt.s32.f32 %v3258
  %v3266 = vmul.f32 %v3265, %v3263
  %v3267 = vxor.u32 %v3266, 2147483648
  %v3268 = vsel %vm3185, %v3267, %v3266
  %v3269 = vsub.s32 4, %v3245
  %v3270 = vsel %vm3185, %v3269, %v3245
  %v3271 = vsel %vm3184, %v161, %v3268
  %v3272 = vsel %vm3184, 0, %v3270
  %v3273 = vcosq.f32.pop %v3271
  %v3274 = vsinq.f32.pop %v3271
  %vm3275 = vweird.f32 %v161
  %v3276 = vand.u32 %v3272, 3
  %vm3277 = vcmp.lt.s32.totalorder %v3276, 2
  %vm3278 = vcmp.eq.s32.totalorder %v3276, 0
  %v3279 = vxor.u32 %v3274, 2147483648
  %v3280 = vsel %vm3278, %v3273, %v3279
  %vm3281 = vcmp.eq.s32.totalorder %v3276, 2
  %v3282 = vxor.u32 %v3273, 2147483648
  %v3283 = vsel %vm3281, %v3282, %v3274
  %v3284 = vsel %vm3277, %v3280, %v3283
  %v3285 = vsel %vm3275, nan, %v3284
  %v3286 = vand.u32 2147483647, %v162
  %vm3287 = vcmp.le.f32.partialorder %v3286, 0.7853982
  %vm3288 = vcmp.lt.s32.totalorder %v162, 0
  %v3289 = vand.u32 %v162, 2139095040
  %v3290 = vshrl.u32 %v3289, 23
  %v3291 = vsub.s32 %v3290, 127
  %v3292 = vand.u32 2147483647, %v162
  %v3293 = vand.u32 %v3292, 8388607
  %v3294 = vor.u32 %v3293, 8388608
  %v3295 = vsub.s32 0, %v3294
  %v3296 = vadd.s32 %v3291, 1
  %vm3297 = vcmp.gt.s32.totalorder %v3296, 0
  %v3298 = vsel %vm3297, %v3296, 0
  %v3299 = vshrl.u32 %v3298, 5
  %v3300 = vand.u32 %v3298, 31
  %v3301 = vsub.s32 32, %v3300
  %v3302 = vshrl.u32 683565275, %v3301
  %v3303 = vshll.u32 683565275, %v3300
  %v3304 = vshrl.u32 2475754826, %v3301
  %v3305 = vor.u32 %v3303, %v3304
  %v3306 = vshll.u32 2475754826, %v3300
  %v3307 = vshrl.u32 2131351028, %v3301
  %v3308 = vor.u32 %v3306, %v3307
  %v3309 = vshll.u32 2131351028, %v3300
  %v3310 = vshrl.u32 2102212464, %v3301
  %v3311 = vor.u32 %v3309, %v3310
  %v3312 = vshll.u32 2102212464, %v3300
  %v3313 = vshrl.u32 920167782, %v3301
  %v3314 = vor.u32 %v3312, %v3313
  %v3315 = vshll.u32 920167782, %v3300
  %v3316 = vshrl.u32 1326507024, %v3301
  %v3317 = vor.u32 %v3315, %v3316
  %vm3318 = vcmp.lt.s32.totalorder %v3299, 1
  %vm3319 = vcmp.lt.s32.totalorder %v3299, 2
  %vm3320 = vcmp.lt.s32.totalorder %v3299, 3
  %vm3321 = vcmp.lt.s32.totalorder %v3299, 4
  %v3322 = vsel %vm3318, %v3302, %v3305
  %v3323 = vsel %vm3321, %v3311, 2102212464
  %v3324 = vsel %vm3320, %v3308, %v3323
  %v3325 = vsel %vm3319, %v3322, %v3324
  %v3326 = vsel %vm3318, %v3305, %v3308
  %v3327 = vsel %vm3321, %v3314, 920167782
  %v3328 = vsel %vm3320, %v3311, %v3327
  %v3329 = vsel %vm3319, %v3326, %v3328
  %v3330 = vsel %vm3318, %v3308, %v3311
  %v3331 = vsel %vm3321, %v3317, 1326507024
  %v3332 = vsel %vm3320, %v3314, %v3331
  %v3333 = vsel %vm3319, %v3330, %v3332
  %v3334 = vshll.u32 %v3294, 8
  %v3335 = vmul.u32.u64.compose %v3334, %v3333
  %v3336 = vextract.low.u32 %v3335
  %v3337 = vextract.high.u32 %v3335
  %v3338 = vmul.u32.u64.compose %v3334, %v3329
  %v3339 = vextract.low.u32 %v3338
  %v3340 = vextract.high.u32 %v3338
  %v3341 = vmul.u32 %v3334, %v3325
  %v3342 = vadd.s32 %v3337, %v3339
  %vm3343 = vc.u32 %v3337, %v3339
  %v3344 = vadd.s32 %v3340, 1
  %v3345 = vsel %vm3343, %v3344, %v3340
  %v3346 = vadd.s32 %v3341, %v3345
  %v3347 = vadd.s32 %v3346, 536870912
  %v3348 = vshrl.u32 %v3347, 30
  %v3349 = vshll.u32 %v3348, 30
  %v3350 = vsub.s32 %v3346, %v3349
  %vm3351 = vcmp.lt.s32.totalorder %v3350, 0
  %v3352 = vsub.s32 0, %v3350
  %v3353 = vsel %vm3351, %v3352, %v3350
  %v3354 = vclz %v3353
  %v3355 = vsub.s32 %v3354, 2
  %vm3356 = vcmp.gt.s32.totalorder 0, %v3355
  %v3357 = vsel %vm3356, 0, %v3355
  %v3358 = vsub.s32 32, %v3357
  %v3359 = vshll.u32 %v3350, %v3357
  %v3360 = vshrl.u32 %v3342, %v3358
  %v3361 = vor.u32 %v3359, %v3360
  %v3362 = vsub.s32 4294967266, %v3357
  %v3363 = vadd.s32 %v3362, 127
  %v3364 = vshll.u32 %v3363, 23
  %v3365 = vor.u32 4788187, %v3364
  %v3366 = vand.u32 2147483647, %v3365
  %v3368 = vcvt.s32.f32 %v3361
  %v3369 = vmul.f32 %v3368, %v3366
  %v3370 = vxor.u32 %v3369, 2147483648
  %v3371 = vsel %vm3288, %v3370, %v3369
  %v3372 = vsub.s32 4, %v3348
  %v3373 = vsel %vm3288, %v3372, %v3348
  %v3374 = vsel %vm3287, %v162, %v3371
  %v3375 = vsel %vm3287, 0, %v3373
  %v3376 = vcosq.f32.pop %v3374
  %v3377 = vsinq.f32.pop %v3374
  %vm3378 = vweird.f32 %v162
  %v3379 = vand.u32 %v3375, 3
  %vm3380 = vcmp.lt.s32.totalorder %v3379, 2
  %vm3381 = vcmp.eq.s32.totalorder %v3379, 0
  %v3382 = vxor.u32 %v3377, 2147483648
  %v3383 = vsel %vm3381, %v3376, %v3382
  %vm3384 = vcmp.eq.s32.totalorder %v3379, 2
  %v3385 = vxor.u32 %v3376, 2147483648
  %v3386 = vsel %vm3384, %v3385, %v3377
  %v3387 = vsel %vm3380, %v3383, %v3386
  %v3388 = vsel %vm3378, nan, %v3387
  %v3389 = vand.u32 2147483647, %v163
  %vm3390 = vcmp.le.f32.partialorder %v3389, 0.7853982
  %vm3391 = vcmp.lt.s32.totalorder %v163, 0
  %v3392 = vand.u32 %v163, 2139095040
  %v3393 = vshrl.u32 %v3392, 23
  %v3394 = vsub.s32 %v3393, 127
  %v3395 = vand.u32 2147483647, %v163
  %v3396 = vand.u32 %v3395, 8388607
  %v3397 = vor.u32 %v3396, 8388608
  %v3398 = vsub.s32 0, %v3397
  %v3399 = vadd.s32 %v3394, 1
  %vm3400 = vcmp.gt.s32.totalorder %v3399, 0
  %v3401 = vsel %vm3400, %v3399, 0
  %v3402 = vshrl.u32 %v3401, 5
  %v3403 = vand.u32 %v3401, 31
  %v3404 = vsub.s32 32, %v3403
  %v3405 = vshrl.u32 683565275, %v3404
  %v3406 = vshll.u32 683565275, %v3403
  %v3407 = vshrl.u32 2475754826, %v3404
  %v3408 = vor.u32 %v3406, %v3407
  %v3409 = vshll.u32 2475754826, %v3403
  %v3410 = vshrl.u32 2131351028, %v3404
  %v3411 = vor.u32 %v3409, %v3410
  %v3412 = vshll.u32 2131351028, %v3403
  %v3413 = vshrl.u32 2102212464, %v3404
  %v3414 = vor.u32 %v3412, %v3413
  %v3415 = vshll.u32 2102212464, %v3403
  %v3416 = vshrl.u32 920167782, %v3404
  %v3417 = vor.u32 %v3415, %v3416
  %v3418 = vshll.u32 920167782, %v3403
  %v3419 = vshrl.u32 1326507024, %v3404
  %v3420 = vor.u32 %v3418, %v3419
  %vm3421 = vcmp.lt.s32.totalorder %v3402, 1
  %vm3422 = vcmp.lt.s32.totalorder %v3402, 2
  %vm3423 = vcmp.lt.s32.totalorder %v3402, 3
  %vm3424 = vcmp.lt.s32.totalorder %v3402, 4
  %v3425 = vsel %vm3421, %v3405, %v3408
  %v3426 = vsel %vm3424, %v3414, 2102212464
  %v3427 = vsel %vm3423, %v3411, %v3426
  %v3428 = vsel %vm3422, %v3425, %v3427
  %v3429 = vsel %vm3421, %v3408, %v3411
  %v3430 = vsel %vm3424, %v3417, 920167782
  %v3431 = vsel %vm3423, %v3414, %v3430
  %v3432 = vsel %vm3422, %v3429, %v3431
  %v3433 = vsel %vm3421, %v3411, %v3414
  %v3434 = vsel %vm3424, %v3420, 1326507024
  %v3435 = vsel %vm3423, %v3417, %v3434
  %v3436 = vsel %vm3422, %v3433, %v3435
  %v3437 = vshll.u32 %v3397, 8
  %v3438 = vmul.u32.u64.compose %v3437, %v3436
  %v3439 = vextract.low.u32 %v3438
  %v3440 = vextract.high.u32 %v3438
  %v3441 = vmul.u32.u64.compose %v3437, %v3432
  %v3442 = vextract.low.u32 %v3441
  %v3443 = vextract.high.u32 %v3441
  %v3444 = vmul.u32 %v3437, %v3428
  %v3445 = vadd.s32 %v3440, %v3442
  %vm3446 = vc.u32 %v3440, %v3442
  %v3447 = vadd.s32 %v3443, 1
  %v3448 = vsel %vm3446, %v3447, %v3443
  %v3449 = vadd.s32 %v3444, %v3448
  %v3450 = vadd.s32 %v3449, 536870912
  %v3451 = vshrl.u32 %v3450, 30
  %v3452 = vshll.u32 %v3451, 30
  %v3453 = vsub.s32 %v3449, %v3452
  %vm3454 = vcmp.lt.s32.totalorder %v3453, 0
  %v3455 = vsub.s32 0, %v3453
  %v3456 = vsel %vm3454, %v3455, %v3453
  %v3457 = vclz %v3456
  %v3458 = vsub.s32 %v3457, 2
  %vm3459 = vcmp.gt.s32.totalorder 0, %v3458
  %v3460 = vsel %vm3459, 0, %v3458
  %v3461 = vsub.s32 32, %v3460
  %v3462 = vshll.u32 %v3453, %v3460
  %v3463 = vshrl.u32 %v3445, %v3461
  %v3464 = vor.u32 %v3462, %v3463
  %v3465 = vsub.s32 4294967266, %v3460
  %v3466 = vadd.s32 %v3465, 127
  %v3467 = vshll.u32 %v3466, 23
  %v3468 = vor.u32 4788187, %v3467
  %v3469 = vand.u32 2147483647, %v3468
  %v3471 = vcvt.s32.f32 %v3464
  %v3472 = vmul.f32 %v3471, %v3469
  %v3473 = vxor.u32 %v3472, 2147483648
  %v3474 = vsel %vm3391, %v3473, %v3472
  %v3475 = vsub.s32 4, %v3451
  %v3476 = vsel %vm3391, %v3475, %v3451
  %v3477 = vsel %vm3390, %v163, %v3474
  %v3478 = vsel %vm3390, 0, %v3476
  %v3479 = vcosq.f32.pop %v3477
  %v3480 = vsinq.f32.pop %v3477
  %vm3481 = vweird.f32 %v163
  %v3482 = vand.u32 %v3478, 3
  %vm3483 = vcmp.lt.s32.totalorder %v3482, 2
  %vm3484 = vcmp.eq.s32.totalorder %v3482, 0
  %v3485 = vxor.u32 %v3480, 2147483648
  %v3486 = vsel %vm3484, %v3479, %v3485
  %vm3487 = vcmp.eq.s32.totalorder %v3482, 2
  %v3488 = vxor.u32 %v3479, 2147483648
  %v3489 = vsel %vm3487, %v3488, %v3480
  %v3490 = vsel %vm3483, %v3486, %v3489
  %v3491 = vsel %vm3481, nan, %v3490
  %3492 = vst [vmem:[%s1 + $0x80] sm:$0xff] %v1946
  %3493 = vst [vmem:[%s1 + $0x88] sm:$0xff] %v2049
  %3494 = vst [vmem:[%s1 + $0x90] sm:$0xff] %v2152
  %3495 = vst [vmem:[%s1 + $0x98] sm:$0xff] %v2255
  %3496 = vst [vmem:[%s1 + $0xa0] sm:$0xff] %v2358
  %3497 = vst [vmem:[%s1 + $0xa8] sm:$0xff] %v2461
  %3498 = vst [vmem:[%s1 + $0xb0] sm:$0xff] %v2564
  %3499 = vst [vmem:[%s1 + $0xb8] sm:$0xff] %v2667
  %3500 = vst [vmem:[%s1 + $0xc0] sm:$0xff] %v2770
  %3501 = vst [vmem:[%s1 + $0xc8] sm:$0xff] %v2873
  %3502 = vst [vmem:[%s1 + $0xd0] sm:$0xff] %v2976
  %3503 = vst [vmem:[%s1 + $0xd8] sm:$0xff] %v3079
  %3504 = vst [vmem:[%s1 + $0xe0] sm:$0xff] %v3182
  %3505 = vst [vmem:[%s1 + $0xe8] sm:$0xff] %v3285
  %3506 = vst [vmem:[%s1 + $0xf0] sm:$0xff] %v3388
  %3507 = vst [vmem:[%s1 + $0xf8] sm:$0xff] %v3491
  // Predicated region
  $region6: #{position_embedding_random.1} parent=0 // pred_check
    _
  $region7: #{position_embedding_random.1} parent=0 // pred_check_branch
    %3509 = sbr.rel (0) target = $region9
  $region8: #{position_embedding_random.1} parent=0 // pred_region
    _
  $region9: #{position_embedding_random.1} parent=0 // pred_fallthru
    _
  // Predicated region
  $region10: #{position_embedding_random.1} parent=0 // pred_check
    _
  $region11: #{position_embedding_random.1} parent=0 // pred_check_branch
    %3511 = sbr.rel (0) target = $region13
  $region12: #{position_embedding_random.1} parent=0 // pred_region
    _
  $region13: #{position_embedding_random.1} parent=0 // pred_fallthru
    _

</llo_original>
